<compile_context>
chip_gen: v7x
topology: tpu7x:2x2x1
jax: 0.10.0
libtpu: 0.0.40
codegen_flags: <defaults>
</compile_context>

<pallas_src>
import functools

import jax
import jax.numpy as jnp
from jax.experimental import pallas as pl
from jax.experimental.pallas import tpu as pltpu

D_MODEL = 256
N_HEADS = 4
HEAD_DIM = D_MODEL // N_HEADS
D_FF = 4 * D_MODEL
N_LAYERS = 4
LN_EPS = 1e-5
C_PAD = 128          # lane-padded classifier output width (sliced in the wrapper)


def _layer_norm(x, w, b):
    mu = jnp.mean(x, axis=-1, keepdims=True)
    var = jnp.mean((x - mu) ** 2, axis=-1, keepdims=True)
    return (x - mu) * jax.lax.rsqrt(var + LN_EPS) * w + b


def _fused_kernel(B, T,
                  maskb_ref, x0_ref,
                  ln_ref, wqkv_ref, bqkv_ref, wo_ref, bo_ref,
                  w1_ref, b1_ref, w2_ref, b2_ref,
                  lnf_ref, wc_ref, bc_ref,
                  out_ref, x_scr):
    """One grid step = one pre-norm transformer layer (plus classifier on the last)."""
    l = pl.program_id(0)

    @pl.when(l == 0)
    def _():
        x_scr[...] = x0_ref[...]                       # load embeddings once

    ln = ln_ref[0]                                     # [4, D] f32
    ln1w, ln1b, ln2w, ln2b = ln[0:1], ln[1:2], ln[2:3], ln[3:4]

    x = x_scr[...]                                     # [B*T, D] f32 (resident)
    bias = maskb_ref[...]                              # [B, T] f32 additive (0 / -1e30)

    # ---- multi-head self-attention (pre-norm) ----
    h = _layer_norm(x, ln1w, ln1b).astype(jnp.bfloat16)
    qkv = jnp.dot(h, wqkv_ref[0],                      # [B*T, 3D], fused QKV, f32 acc
                  preferred_element_type=jnp.float32) + bqkv_ref[0]
    scale = 1.0 / jnp.sqrt(jnp.float32(HEAD_DIM))
    q = (qkv[:, 0:D_MODEL] * scale).astype(jnp.bfloat16)
    k = qkv[:, D_MODEL:2 * D_MODEL].astype(jnp.bfloat16)
    v = qkv[:, 2 * D_MODEL:3 * D_MODEL].astype(jnp.bfloat16)
    wo = wo_ref[0]                                     # [D, D] bf16

    attn_rows = []
    for b in range(B):                                 # B, N_HEADS small & static
        r0 = b * T
        qb, kb, vb = q[r0:r0 + T], k[r0:r0 + T], v[r0:r0 + T]
        bias_b = bias[b:b + 1, :]                      # [1, T] f32
        acc = jnp.zeros((T, D_MODEL), jnp.float32)
        for hd in range(N_HEADS):
            c0 = hd * HEAD_DIM
            qh = qb[:, c0:c0 + HEAD_DIM]
            kh = kb[:, c0:c0 + HEAD_DIM]
            vh = vb[:, c0:c0 + HEAD_DIM]
            s = jax.lax.dot_general(qh, kh, (((1,), (1,)), ((), ())),
                                    preferred_element_type=jnp.float32)
            s = s + bias_b                             # key-padding mask (f32 only)
            s = s - jnp.max(s, axis=-1, keepdims=True)
            p = jnp.exp(s)
            p = p * pl.reciprocal(jnp.sum(p, axis=-1, keepdims=True), approx=True)
            ctx = jnp.dot(p.astype(jnp.bfloat16), vh,
                          preferred_element_type=jnp.float32)          # [T, 64]
            # accumulate through the matching Wo slice -> stays lane-dense [T, 256]
            acc = acc + jnp.dot(ctx.astype(jnp.bfloat16), wo[c0:c0 + HEAD_DIM, :],
                                preferred_element_type=jnp.float32)
        attn_rows.append(acc)
    attn = jnp.concatenate(attn_rows, axis=0) + bo_ref[0]               # [B*T, D]
    x = x + attn                                       # residual (dropout=id in eval)

    # ---- feed-forward (pre-norm) ----
    h2 = _layer_norm(x, ln2w, ln2b).astype(jnp.bfloat16)
    f = jnp.dot(h2, w1_ref[0], preferred_element_type=jnp.float32) + b1_ref[0]
    f = jax.nn.gelu(f)
    f = jnp.dot(f.astype(jnp.bfloat16), w2_ref[0],
                preferred_element_type=jnp.float32) + b2_ref[0]
    x = x + f
    x_scr[...] = x

    # ---- final LN + CLS pooling + Linear(256, nb_classes), last layer only ----
    @pl.when(l == N_LAYERS - 1)
    def _():
        cls = jnp.concatenate([x[b * T:b * T + 1, :] for b in range(B)], axis=0)
        lnf = lnf_ref[...]                             # [2, D] f32 (w, b)
        hc = _layer_norm(cls, lnf[0:1], lnf[1:2]).astype(jnp.bfloat16)
        out_ref[...] = (jnp.dot(hc, wc_ref[...],
                                preferred_element_type=jnp.float32) + bc_ref[...])


def init_params(key, vocab_size, max_len, nb_classes):
    n_keys = 6 + N_LAYERS * 5
    keys = iter(jax.random.split(key, n_keys))

    def nrm(shape, scale=0.02):
        return (scale * jax.random.normal(next(keys), shape)).astype(jnp.float32)

    # per-layer weights, stacked along a leading layer axis
    ln = jnp.stack([jnp.concatenate([jnp.ones((1, D_MODEL), jnp.float32),   # ln1 w
                                     jnp.zeros((1, D_MODEL), jnp.float32),  # ln1 b
                                     jnp.ones((1, D_MODEL), jnp.float32),   # ln2 w
                                     jnp.zeros((1, D_MODEL), jnp.float32)], # ln2 b
                                    axis=0)
                    for _ in range(N_LAYERS)], axis=0)                      # [L,4,D]
    wqkv = jnp.stack([nrm((D_MODEL, 3 * D_MODEL)) for _ in range(N_LAYERS)])
    wo = jnp.stack([nrm((D_MODEL, D_MODEL)) for _ in range(N_LAYERS)])
    w1 = jnp.stack([nrm((D_MODEL, D_FF)) for _ in range(N_LAYERS)])
    w2 = jnp.stack([nrm((D_FF, D_MODEL)) for _ in range(N_LAYERS)])

    wc = jnp.zeros((D_MODEL, C_PAD), jnp.float32)
    wc = wc.at[:, :nb_classes].set(nrm((D_MODEL, nb_classes)))

    params = {
        'nb_classes': nb_classes,
        'tok_emb': nrm((vocab_size, D_MODEL)),
        'cls_emb': nrm((1, 1, D_MODEL)),
        'pos_emb': nrm((max_len + 1, D_MODEL)),
        'ln': ln,                                                  # f32
        'wqkv': wqkv.astype(jnp.bfloat16),
        'bqkv': jnp.zeros((N_LAYERS, 1, 3 * D_MODEL), jnp.float32),
        'wo': wo.astype(jnp.bfloat16),
        'bo': jnp.zeros((N_LAYERS, 1, D_MODEL), jnp.float32),
        'w1': w1.astype(jnp.bfloat16),
        'b1': jnp.zeros((N_LAYERS, 1, D_FF), jnp.float32),
        'w2': w2.astype(jnp.bfloat16),
        'b2': jnp.zeros((N_LAYERS, 1, D_MODEL), jnp.float32),
        'lnf': jnp.concatenate([jnp.ones((1, D_MODEL), jnp.float32),
                                jnp.zeros((1, D_MODEL), jnp.float32)], axis=0),
        'wc': wc.astype(jnp.bfloat16),
        'bc': jnp.zeros((1, C_PAD), jnp.float32),
    }
    return params


def review_classifier_forward(params, input_ids, attention_mask, labels=None):
    B, S = input_ids.shape
    nb_classes = params['nb_classes']
    T = S + 1                                  # CLS + tokens
    T_pad = max(8, ((T + 7) // 8) * 8)         # 8-aligned sublanes

    # torch: attention_mask = cat([ones(B,1), attention_mask], dim=1)
    mask = jnp.concatenate(
        [jnp.ones((B, 1), jnp.float32), attention_mask.astype(jnp.float32)], axis=1)
    mask = jnp.pad(mask, ((0, 0), (0, T_pad - T)))        # padded keys -> masked out
    mask_bias = jnp.where(mask > 0, 0.0, -1e30).astype(jnp.float32)   # [B, T_pad]

    # Embedding gather + CLS prepend + positional embedding (plain-JAX glue).
    tok = params['tok_emb'][input_ids]                                 # [B, S, D]
    cls = jnp.broadcast_to(params['cls_emb'], (B, 1, D_MODEL))
    x = jnp.concatenate([cls, tok], axis=1) + params['pos_emb'][:T][None]
    x = jnp.pad(x, ((0, 0), (0, T_pad - T), (0, 0))).astype(jnp.float32)
    x = x.reshape(B * T_pad, D_MODEL)                                  # [B*T_pad, D]

    def per_layer(shape):
        blk = (1,) + tuple(shape[1:])
        return pl.BlockSpec(blk, lambda l: (l,) + (0,) * (len(shape) - 1))

    def shared(shape):
        return pl.BlockSpec(tuple(shape), lambda l: (0,) * len(shape))

    kernel = functools.partial(_fused_kernel, B, T_pad)

    logits_pad = pl.pallas_call(
        kernel,
        out_shape=jax.ShapeDtypeStruct((B, C_PAD), jnp.float32),
        grid=(N_LAYERS,),
        in_specs=[
            shared(mask_bias.shape),
            shared(x.shape),
            per_layer(params['ln'].shape),
            per_layer(params['wqkv'].shape),
            per_layer(params['bqkv'].shape),
            per_layer(params['wo'].shape),
            per_layer(params['bo'].shape),
            per_layer(params['w1'].shape),
            per_layer(params['b1'].shape),
            per_layer(params['w2'].shape),
            per_layer(params['b2'].shape),
            shared(params['lnf'].shape),
            shared(params['wc'].shape),
            shared(params['bc'].shape),
        ],
        out_specs=pl.BlockSpec((B, C_PAD), lambda l: (0, 0)),
        scratch_shapes=[pltpu.VMEM((B * T_pad, D_MODEL), jnp.float32)],
        compiler_params=pltpu.CompilerParams(
            dimension_semantics=("arbitrary",),
            vmem_limit_bytes=32 * 1024 * 1024),     # safe on v5e's 16 MiB default too
    )(mask_bias, x, params['ln'], params['wqkv'], params['bqkv'],
      params['wo'], params['bo'], params['w1'], params['b1'],
      params['w2'], params['b2'], params['lnf'], params['wc'], params['bc'])

    logits = logits_pad[:, :nb_classes]

    if labels is not None:
        logp = jax.nn.log_softmax(logits, axis=-1)
        loss = -jnp.mean(jnp.take_along_axis(logp, labels[:, None], axis=-1))
        return loss, logits
    return logits


if __name__ == "__main__":
    key = jax.random.PRNGKey(0)
    k_param, k_ids, k_lab = jax.random.split(key, 3)

    vocab_size, max_len, nb_classes = 32, 16, 2
    B, S = 2, 8

    params = init_params(k_param, vocab_size, max_len, nb_classes)
    input_ids = jax.random.randint(k_ids, (B, S), 0, vocab_size)
    # second example padded after position 5
    attention_mask = (jnp.arange(S)[None, :] < jnp.array([[S], [5]])).astype(jnp.float32)
    labels = jax.random.randint(k_lab, (B,), 0, nb_classes)

    logits = review_classifier_forward(params, input_ids, attention_mask)
    jax.block_until_ready(logits)
    loss, logits2 = review_classifier_forward(params, input_ids, attention_mask, labels)
    jax.block_until_ready((loss, logits2))
    assert logits.shape == (B, nb_classes)
    assert jnp.all(jnp.isfinite(logits)) and jnp.isfinite(loss)
    print("KERNEL_OK")
</pallas_src>

<mosaic_0001>
module attributes {stable_mosaic.version = 11 : i64} {
  func.func @_fused_kernel(%arg0: i32, %arg1: memref<2x16xf32, #tpu.memory_space<vmem>>, %arg2: memref<32x256xf32, #tpu.memory_space<vmem>>, %arg3: memref<1x4x256xf32, #tpu.memory_space<vmem>>, %arg4: memref<1x256x768xbf16, #tpu.memory_space<vmem>>, %arg5: memref<1x1x768xf32, #tpu.memory_space<vmem>>, %arg6: memref<1x256x256xbf16, #tpu.memory_space<vmem>>, %arg7: memref<1x1x256xf32, #tpu.memory_space<vmem>>, %arg8: memref<1x256x1024xbf16, #tpu.memory_space<vmem>>, %arg9: memref<1x1x1024xf32, #tpu.memory_space<vmem>>, %arg10: memref<1x1024x256xbf16, #tpu.memory_space<vmem>>, %arg11: memref<1x1x256xf32, #tpu.memory_space<vmem>>, %arg12: memref<2x256xf32, #tpu.memory_space<vmem>>, %arg13: memref<256x128xbf16, #tpu.memory_space<vmem>>, %arg14: memref<1x128xf32, #tpu.memory_space<vmem>>, %arg15: memref<2x128xf32, #tpu.memory_space<vmem>>, %arg16: memref<32x256xf32, #tpu.memory_space<vmem>>) attributes {dimension_semantics = [#tpu.dimension_semantics<arbitrary>], iteration_bounds = array<i64: 4>, scalar_prefetch = 0 : i64, scratch_operands = 1 : i64, tpu.core_type = #tpu.core_type<tc>, window_params = [{pipeline_mode = #tpu.pipeline_mode<synchronous>, transform_indices = @transform_0, window_bounds = array<i64: 2, 16>}, {pipeline_mode = #tpu.pipeline_mode<synchronous>, transform_indices = @transform_1, window_bounds = array<i64: 32, 256>}, {transform_indices = @transform_2, window_bounds = array<i64: 1, 4, 256>}, {transform_indices = @transform_3, window_bounds = array<i64: 1, 256, 768>}, {transform_indices = @transform_4, window_bounds = array<i64: 1, 1, 768>}, {transform_indices = @transform_5, window_bounds = array<i64: 1, 256, 256>}, {transform_indices = @transform_6, window_bounds = array<i64: 1, 1, 256>}, {transform_indices = @transform_7, window_bounds = array<i64: 1, 256, 1024>}, {transform_indices = @transform_8, window_bounds = array<i64: 1, 1, 1024>}, {transform_indices = @transform_9, window_bounds = array<i64: 1, 1024, 256>}, {transform_indices = @transform_10, window_bounds = array<i64: 1, 1, 256>}, {pipeline_mode = #tpu.pipeline_mode<synchronous>, transform_indices = @transform_11, window_bounds = array<i64: 2, 256>}, {pipeline_mode = #tpu.pipeline_mode<synchronous>, transform_indices = @transform_12, window_bounds = array<i64: 256, 128>}, {pipeline_mode = #tpu.pipeline_mode<synchronous>, transform_indices = @transform_13, window_bounds = array<i64: 1, 128>}, {pipeline_mode = #tpu.pipeline_mode<synchronous>, transform_indices = @transform_14, window_bounds = array<i64: 2, 128>}]} {
    %c0_i32 = arith.constant 0 : i32
    %0 = arith.cmpi eq, %arg0, %c0_i32 : i32
    %1 = arith.extui %0 : i1 to i32
    %c0_i32_0 = arith.constant 0 : i32
    %2 = arith.cmpi ne, %1, %c0_i32_0 : i32
    scf.if %2 {
      %c0_94 = arith.constant 0 : index
      %c0_95 = arith.constant 0 : index
      %301 = vector.load %arg2[%c0_94, %c0_95] : memref<32x256xf32, #tpu.memory_space<vmem>>, vector<32x256xf32>
      %c0_96 = arith.constant 0 : index
      %c0_97 = arith.constant 0 : index
      %302 = vector.load %arg16[%c0_96, %c0_97] : memref<32x256xf32, #tpu.memory_space<vmem>>, vector<32x256xf32>
      tpu.vector_store %arg16[%c0_96, %c0_97], %301 {strides = array<i32>} : memref<32x256xf32, #tpu.memory_space<vmem>>, vector<32x256xf32>,
    } else {
    }
    %c0 = arith.constant 0 : index
    %c0_1 = arith.constant 0 : index
    %c0_2 = arith.constant 0 : index
    %3 = vector.load %arg3[%c0, %c0_1, %c0_2] : memref<1x4x256xf32, #tpu.memory_space<vmem>>, vector<1x4x256xf32>
    %4 = vector.shape_cast %3 : vector<1x4x256xf32> to vector<4x256xf32>
    %5 = vector.extract_strided_slice %4 {offsets = [0, 0], sizes = [1, 256], strides = [1, 1]} : vector<4x256xf32> to vector<1x256xf32>
    %6 = vector.extract_strided_slice %4 {offsets = [1, 0], sizes = [1, 256], strides = [1, 1]} : vector<4x256xf32> to vector<1x256xf32>
    %7 = vector.extract_strided_slice %4 {offsets = [2, 0], sizes = [1, 256], strides = [1, 1]} : vector<4x256xf32> to vector<1x256xf32>
    %8 = vector.extract_strided_slice %4 {offsets = [3, 0], sizes = [1, 256], strides = [1, 1]} : vector<4x256xf32> to vector<1x256xf32>
    %c0_3 = arith.constant 0 : index
    %c0_4 = arith.constant 0 : index
    %9 = vector.load %arg16[%c0_3, %c0_4] : memref<32x256xf32, #tpu.memory_space<vmem>>, vector<32x256xf32>
    %c0_5 = arith.constant 0 : index
    %c0_6 = arith.constant 0 : index
    %10 = vector.load %arg1[%c0_5, %c0_6] : memref<2x16xf32, #tpu.memory_space<vmem>>, vector<2x16xf32>
    %cst = arith.constant dense<0.000000e+00> : vector<32xf32>
    %11 = vector.multi_reduction <add>, %9, %cst [1] : vector<32x256xf32> to vector<32xf32>
    %12 = vector.shape_cast %11 : vector<32xf32> to vector<32x1xf32>
    %cst_7 = arith.constant 2.560000e+02 : f32
    %13 = vector.broadcast %cst_7 : f32 to vector<32x1xf32>
    %14 = arith.divf %12, %13 : vector<32x1xf32>
    %15 = vector.broadcast %14 : vector<32x1xf32> to vector<32x256xf32>
    %16 = arith.subf %9, %15 : vector<32x256xf32>
    %17 = arith.mulf %16, %16 : vector<32x256xf32>
    %cst_8 = arith.constant dense<0.000000e+00> : vector<32xf32>
    %18 = vector.multi_reduction <add>, %17, %cst_8 [1] : vector<32x256xf32> to vector<32xf32>
    %19 = vector.shape_cast %18 : vector<32xf32> to vector<32x1xf32>
    %cst_9 = arith.constant 2.560000e+02 : f32
    %20 = vector.broadcast %cst_9 : f32 to vector<32x1xf32>
    %21 = arith.divf %19, %20 : vector<32x1xf32>
    %22 = vector.broadcast %14 : vector<32x1xf32> to vector<32x256xf32>
    %23 = arith.subf %9, %22 : vector<32x256xf32>
    %cst_10 = arith.constant 9.99999974E-6 : f32
    %24 = vector.broadcast %cst_10 : f32 to vector<32x1xf32>
    %25 = arith.addf %21, %24 : vector<32x1xf32>
    %26 = math.rsqrt %25 : vector<32x1xf32>
    %27 = vector.broadcast %26 : vector<32x1xf32> to vector<32x256xf32>
    %28 = arith.mulf %23, %27 : vector<32x256xf32>
    %29 = vector.broadcast %5 : vector<1x256xf32> to vector<32x256xf32>
    %30 = arith.mulf %28, %29 : vector<32x256xf32>
    %31 = vector.broadcast %6 : vector<1x256xf32> to vector<32x256xf32>
    %32 = arith.addf %30, %31 : vector<32x256xf32>
    %33 = arith.truncf %32 : vector<32x256xf32> to vector<32x256xbf16>
    %c0_11 = arith.constant 0 : index
    %c0_12 = arith.constant 0 : index
    %c0_13 = arith.constant 0 : index
    %34 = vector.load %arg4[%c0_11, %c0_12, %c0_13] : memref<1x256x768xbf16, #tpu.memory_space<vmem>>, vector<1x256x768xbf16>
    %35 = vector.shape_cast %34 : vector<1x256x768xbf16> to vector<256x768xbf16>
    %cst_14 = arith.constant dense<0.000000e+00> : vector<32x768xf32>
    %36 = tpu.matmul %33, %35, %cst_14 {dimension_numbers = #tpu.dot_dimension_numbers<[1], [0], [0], [1], [0, 0, 1, 1], [], []>} : vector<32x256xbf16>, vector<256x768xbf16>, vector<32x768xf32> -> vector<32x768xf32>
    %c0_15 = arith.constant 0 : index
    %c0_16 = arith.constant 0 : index
    %c0_17 = arith.constant 0 : index
    %37 = vector.load %arg5[%c0_15, %c0_16, %c0_17] : memref<1x1x768xf32, #tpu.memory_space<vmem>>, vector<1x1x768xf32>
    %38 = vector.shape_cast %37 : vector<1x1x768xf32> to vector<1x768xf32>
    %39 = vector.broadcast %38 : vector<1x768xf32> to vector<32x768xf32>
    %40 = arith.addf %36, %39 : vector<32x768xf32>
    %cst_18 = arith.constant 6.400000e+01 : f32
    %41 = math.sqrt %cst_18 : f32
    %cst_19 = arith.constant 1.000000e+00 : f32
    %42 = arith.divf %cst_19, %41 : f32
    %43 = vector.extract_strided_slice %40 {offsets = [0, 0], sizes = [32, 256], strides = [1, 1]} : vector<32x768xf32> to vector<32x256xf32>
    %44 = vector.broadcast %42 : f32 to vector<32x256xf32>
    %45 = arith.mulf %43, %44 : vector<32x256xf32>
    %46 = arith.truncf %45 : vector<32x256xf32> to vector<32x256xbf16>
    %47 = vector.extract_strided_slice %40 {offsets = [0, 256], sizes = [32, 256], strides = [1, 1]} : vector<32x768xf32> to vector<32x256xf32>
    %48 = arith.truncf %47 : vector<32x256xf32> to vector<32x256xbf16>
    %49 = vector.extract_strided_slice %40 {offsets = [0, 512], sizes = [32, 256], strides = [1, 1]} : vector<32x768xf32> to vector<32x256xf32>
    %50 = arith.truncf %49 : vector<32x256xf32> to vector<32x256xbf16>
    %c0_20 = arith.constant 0 : index
    %c0_21 = arith.constant 0 : index
    %c0_22 = arith.constant 0 : index
    %51 = vector.load %arg6[%c0_20, %c0_21, %c0_22] : memref<1x256x256xbf16, #tpu.memory_space<vmem>>, vector<1x256x256xbf16>
    %52 = vector.shape_cast %51 : vector<1x256x256xbf16> to vector<256x256xbf16>
    %53 = vector.extract_strided_slice %46 {offsets = [0, 0], sizes = [16, 256], strides = [1, 1]} : vector<32x256xbf16> to vector<16x256xbf16>
    %54 = vector.extract_strided_slice %48 {offsets = [0, 0], sizes = [16, 256], strides = [1, 1]} : vector<32x256xbf16> to vector<16x256xbf16>
    %55 = vector.extract_strided_slice %50 {offsets = [0, 0], sizes = [16, 256], strides = [1, 1]} : vector<32x256xbf16> to vector<16x256xbf16>
    %56 = vector.extract_strided_slice %10 {offsets = [0, 0], sizes = [1, 16], strides = [1, 1]} : vector<2x16xf32> to vector<1x16xf32>
    %cst_23 = arith.constant 0.000000e+00 : f32
    %57 = vector.broadcast %cst_23 : f32 to vector<16x256xf32>
    %58 = vector.extract_strided_slice %53 {offsets = [0, 0], sizes = [16, 64], strides = [1, 1]} : vector<16x256xbf16> to vector<16x64xbf16>
    %59 = vector.extract_strided_slice %54 {offsets = [0, 0], sizes = [16, 64], strides = [1, 1]} : vector<16x256xbf16> to vector<16x64xbf16>
    %60 = vector.extract_strided_slice %55 {offsets = [0, 0], sizes = [16, 64], strides = [1, 1]} : vector<16x256xbf16> to vector<16x64xbf16>
    %cst_24 = arith.constant dense<0.000000e+00> : vector<16x16xf32>
    %61 = tpu.matmul %58, %59, %cst_24 {dimension_numbers = #tpu.dot_dimension_numbers<[1], [1], [0], [0], [0, 0, 1, 0], [], []>} : vector<16x64xbf16>, vector<16x64xbf16>, vector<16x16xf32> -> vector<16x16xf32>
    %62 = vector.broadcast %56 : vector<1x16xf32> to vector<16x16xf32>
    %63 = arith.addf %61, %62 : vector<16x16xf32>
    %cst_25 = arith.constant dense<0xFF800000> : vector<16xf32>
    %64 = vector.multi_reduction <maximumf>, %63, %cst_25 [1] : vector<16x16xf32> to vector<16xf32>
    %65 = vector.shape_cast %64 : vector<16xf32> to vector<16x1xf32>
    %66 = vector.broadcast %65 : vector<16x1xf32> to vector<16x16xf32>
    %67 = arith.subf %63, %66 : vector<16x16xf32>
    %68 = math.exp %67 : vector<16x16xf32>
    %cst_26 = arith.constant dense<0.000000e+00> : vector<16xf32>
    %69 = vector.multi_reduction <add>, %68, %cst_26 [1] : vector<16x16xf32> to vector<16xf32>
    %70 = vector.shape_cast %69 : vector<16xf32> to vector<16x1xf32>
    %71 = tpu.reciprocal %70 {approx = true} : vector<16x1xf32> -> vector<16x1xf32>
    %72 = vector.broadcast %71 : vector<16x1xf32> to vector<16x16xf32>
    %73 = arith.mulf %68, %72 : vector<16x16xf32>
    %74 = arith.truncf %73 : vector<16x16xf32> to vector<16x16xbf16>
    %cst_27 = arith.constant dense<0.000000e+00> : vector<16x64xf32>
    %75 = tpu.matmul %74, %60, %cst_27 {dimension_numbers = #tpu.dot_dimension_numbers<[1], [0], [0], [1], [0, 0, 1, 1], [], []>} : vector<16x16xbf16>, vector<16x64xbf16>, vector<16x64xf32> -> vector<16x64xf32>
    %76 = arith.truncf %75 : vector<16x64xf32> to vector<16x64xbf16>
    %77 = vector.extract_strided_slice %52 {offsets = [0, 0], sizes = [64, 256], strides = [1, 1]} : vector<256x256xbf16> to vector<64x256xbf16>
    %cst_28 = arith.constant dense<0.000000e+00> : vector<16x256xf32>
    %78 = tpu.matmul %76, %77, %cst_28 {dimension_numbers = #tpu.dot_dimension_numbers<[1], [0], [0], [1], [0, 0, 1, 1], [], []>} : vector<16x64xbf16>, vector<64x256xbf16>, vector<16x256xf32> -> vector<16x256xf32>
    %79 = arith.addf %57, %78 : vector<16x256xf32>
    %80 = vector.extract_strided_slice %53 {offsets = [0, 64], sizes = [16, 64], strides = [1, 1]} : vector<16x256xbf16> to vector<16x64xbf16>
    %81 = vector.extract_strided_slice %54 {offsets = [0, 64], sizes = [16, 64], strides = [1, 1]} : vector<16x256xbf16> to vector<16x64xbf16>
    %82 = vector.extract_strided_slice %55 {offsets = [0, 64], sizes = [16, 64], strides = [1, 1]} : vector<16x256xbf16> to vector<16x64xbf16>
    %cst_29 = arith.constant dense<0.000000e+00> : vector<16x16xf32>
    %83 = tpu.matmul %80, %81, %cst_29 {dimension_numbers = #tpu.dot_dimension_numbers<[1], [1], [0], [0], [0, 0, 1, 0], [], []>} : vector<16x64xbf16>, vector<16x64xbf16>, vector<16x16xf32> -> vector<16x16xf32>
    %84 = vector.broadcast %56 : vector<1x16xf32> to vector<16x16xf32>
    %85 = arith.addf %83, %84 : vector<16x16xf32>
    %cst_30 = arith.constant dense<0xFF800000> : vector<16xf32>
    %86 = vector.multi_reduction <maximumf>, %85, %cst_30 [1] : vector<16x16xf32> to vector<16xf32>
    %87 = vector.shape_cast %86 : vector<16xf32> to vector<16x1xf32>
    %88 = vector.broadcast %87 : vector<16x1xf32> to vector<16x16xf32>
    %89 = arith.subf %85, %88 : vector<16x16xf32>
    %90 = math.exp %89 : vector<16x16xf32>
    %cst_31 = arith.constant dense<0.000000e+00> : vector<16xf32>
    %91 = vector.multi_reduction <add>, %90, %cst_31 [1] : vector<16x16xf32> to vector<16xf32>
    %92 = vector.shape_cast %91 : vector<16xf32> to vector<16x1xf32>
    %93 = tpu.reciprocal %92 {approx = true} : vector<16x1xf32> -> vector<16x1xf32>
    %94 = vector.broadcast %93 : vector<16x1xf32> to vector<16x16xf32>
    %95 = arith.mulf %90, %94 : vector<16x16xf32>
    %96 = arith.truncf %95 : vector<16x16xf32> to vector<16x16xbf16>
    %cst_32 = arith.constant dense<0.000000e+00> : vector<16x64xf32>
    %97 = tpu.matmul %96, %82, %cst_32 {dimension_numbers = #tpu.dot_dimension_numbers<[1], [0], [0], [1], [0, 0, 1, 1], [], []>} : vector<16x16xbf16>, vector<16x64xbf16>, vector<16x64xf32> -> vector<16x64xf32>
    %98 = arith.truncf %97 : vector<16x64xf32> to vector<16x64xbf16>
    %99 = vector.extract_strided_slice %52 {offsets = [64, 0], sizes = [64, 256], strides = [1, 1]} : vector<256x256xbf16> to vector<64x256xbf16>
    %cst_33 = arith.constant dense<0.000000e+00> : vector<16x256xf32>
    %100 = tpu.matmul %98, %99, %cst_33 {dimension_numbers = #tpu.dot_dimension_numbers<[1], [0], [0], [1], [0, 0, 1, 1], [], []>} : vector<16x64xbf16>, vector<64x256xbf16>, vector<16x256xf32> -> vector<16x256xf32>
    %101 = arith.addf %79, %100 : vector<16x256xf32>
    %102 = vector.extract_strided_slice %53 {offsets = [0, 128], sizes = [16, 64], strides = [1, 1]} : vector<16x256xbf16> to vector<16x64xbf16>
    %103 = vector.extract_strided_slice %54 {offsets = [0, 128], sizes = [16, 64], strides = [1, 1]} : vector<16x256xbf16> to vector<16x64xbf16>
    %104 = vector.extract_strided_slice %55 {offsets = [0, 128], sizes = [16, 64], strides = [1, 1]} : vector<16x256xbf16> to vector<16x64xbf16>
    %cst_34 = arith.constant dense<0.000000e+00> : vector<16x16xf32>
    %105 = tpu.matmul %102, %103, %cst_34 {dimension_numbers = #tpu.dot_dimension_numbers<[1], [1], [0], [0], [0, 0, 1, 0], [], []>} : vector<16x64xbf16>, vector<16x64xbf16>, vector<16x16xf32> -> vector<16x16xf32>
    %106 = vector.broadcast %56 : vector<1x16xf32> to vector<16x16xf32>
    %107 = arith.addf %105, %106 : vector<16x16xf32>
    %cst_35 = arith.constant dense<0xFF800000> : vector<16xf32>
    %108 = vector.multi_reduction <maximumf>, %107, %cst_35 [1] : vector<16x16xf32> to vector<16xf32>
    %109 = vector.shape_cast %108 : vector<16xf32> to vector<16x1xf32>
    %110 = vector.broadcast %109 : vector<16x1xf32> to vector<16x16xf32>
    %111 = arith.subf %107, %110 : vector<16x16xf32>
    %112 = math.exp %111 : vector<16x16xf32>
    %cst_36 = arith.constant dense<0.000000e+00> : vector<16xf32>
    %113 = vector.multi_reduction <add>, %112, %cst_36 [1] : vector<16x16xf32> to vector<16xf32>
    %114 = vector.shape_cast %113 : vector<16xf32> to vector<16x1xf32>
    %115 = tpu.reciprocal %114 {approx = true} : vector<16x1xf32> -> vector<16x1xf32>
    %116 = vector.broadcast %115 : vector<16x1xf32> to vector<16x16xf32>
    %117 = arith.mulf %112, %116 : vector<16x16xf32>
    %118 = arith.truncf %117 : vector<16x16xf32> to vector<16x16xbf16>
    %cst_37 = arith.constant dense<0.000000e+00> : vector<16x64xf32>
    %119 = tpu.matmul %118, %104, %cst_37 {dimension_numbers = #tpu.dot_dimension_numbers<[1], [0], [0], [1], [0, 0, 1, 1], [], []>} : vector<16x16xbf16>, vector<16x64xbf16>, vector<16x64xf32> -> vector<16x64xf32>
    %120 = arith.truncf %119 : vector<16x64xf32> to vector<16x64xbf16>
    %121 = vector.extract_strided_slice %52 {offsets = [128, 0], sizes = [64, 256], strides = [1, 1]} : vector<256x256xbf16> to vector<64x256xbf16>
    %cst_38 = arith.constant dense<0.000000e+00> : vector<16x256xf32>
    %122 = tpu.matmul %120, %121, %cst_38 {dimension_numbers = #tpu.dot_dimension_numbers<[1], [0], [0], [1], [0, 0, 1, 1], [], []>} : vector<16x64xbf16>, vector<64x256xbf16>, vector<16x256xf32> -> vector<16x256xf32>
    %123 = arith.addf %101, %122 : vector<16x256xf32>
    %124 = vector.extract_strided_slice %53 {offsets = [0, 192], sizes = [16, 64], strides = [1, 1]} : vector<16x256xbf16> to vector<16x64xbf16>
    %125 = vector.extract_strided_slice %54 {offsets = [0, 192], sizes = [16, 64], strides = [1, 1]} : vector<16x256xbf16> to vector<16x64xbf16>
    %126 = vector.extract_strided_slice %55 {offsets = [0, 192], sizes = [16, 64], strides = [1, 1]} : vector<16x256xbf16> to vector<16x64xbf16>
    %cst_39 = arith.constant dense<0.000000e+00> : vector<16x16xf32>
    %127 = tpu.matmul %124, %125, %cst_39 {dimension_numbers = #tpu.dot_dimension_numbers<[1], [1], [0], [0], [0, 0, 1, 0], [], []>} : vector<16x64xbf16>, vector<16x64xbf16>, vector<16x16xf32> -> vector<16x16xf32>
    %128 = vector.broadcast %56 : vector<1x16xf32> to vector<16x16xf32>
    %129 = arith.addf %127, %128 : vector<16x16xf32>
    %cst_40 = arith.constant dense<0xFF800000> : vector<16xf32>
    %130 = vector.multi_reduction <maximumf>, %129, %cst_40 [1] : vector<16x16xf32> to vector<16xf32>
    %131 = vector.shape_cast %130 : vector<16xf32> to vector<16x1xf32>
    %132 = vector.broadcast %131 : vector<16x1xf32> to vector<16x16xf32>
    %133 = arith.subf %129, %132 : vector<16x16xf32>
    %134 = math.exp %133 : vector<16x16xf32>
    %cst_41 = arith.constant dense<0.000000e+00> : vector<16xf32>
    %135 = vector.multi_reduction <add>, %134, %cst_41 [1] : vector<16x16xf32> to vector<16xf32>
    %136 = vector.shape_cast %135 : vector<16xf32> to vector<16x1xf32>
    %137 = tpu.reciprocal %136 {approx = true} : vector<16x1xf32> -> vector<16x1xf32>
    %138 = vector.broadcast %137 : vector<16x1xf32> to vector<16x16xf32>
    %139 = arith.mulf %134, %138 : vector<16x16xf32>
    %140 = arith.truncf %139 : vector<16x16xf32> to vector<16x16xbf16>
    %cst_42 = arith.constant dense<0.000000e+00> : vector<16x64xf32>
    %141 = tpu.matmul %140, %126, %cst_42 {dimension_numbers = #tpu.dot_dimension_numbers<[1], [0], [0], [1], [0, 0, 1, 1], [], []>} : vector<16x16xbf16>, vector<16x64xbf16>, vector<16x64xf32> -> vector<16x64xf32>
    %142 = arith.truncf %141 : vector<16x64xf32> to vector<16x64xbf16>
    %143 = vector.extract_strided_slice %52 {offsets = [192, 0], sizes = [64, 256], strides = [1, 1]} : vector<256x256xbf16> to vector<64x256xbf16>
    %cst_43 = arith.constant dense<0.000000e+00> : vector<16x256xf32>
    %144 = tpu.matmul %142, %143, %cst_43 {dimension_numbers = #tpu.dot_dimension_numbers<[1], [0], [0], [1], [0, 0, 1, 1], [], []>} : vector<16x64xbf16>, vector<64x256xbf16>, vector<16x256xf32> -> vector<16x256xf32>
    %145 = arith.addf %123, %144 : vector<16x256xf32>
    %146 = vector.extract_strided_slice %46 {offsets = [16, 0], sizes = [16, 256], strides = [1, 1]} : vector<32x256xbf16> to vector<16x256xbf16>
    %147 = vector.extract_strided_slice %48 {offsets = [16, 0], sizes = [16, 256], strides = [1, 1]} : vector<32x256xbf16> to vector<16x256xbf16>
    %148 = vector.extract_strided_slice %50 {offsets = [16, 0], sizes = [16, 256], strides = [1, 1]} : vector<32x256xbf16> to vector<16x256xbf16>
    %149 = vector.extract_strided_slice %10 {offsets = [1, 0], sizes = [1, 16], strides = [1, 1]} : vector<2x16xf32> to vector<1x16xf32>
    %cst_44 = arith.constant 0.000000e+00 : f32
    %150 = vector.broadcast %cst_44 : f32 to vector<16x256xf32>
    %151 = vector.extract_strided_slice %146 {offsets = [0, 0], sizes = [16, 64], strides = [1, 1]} : vector<16x256xbf16> to vector<16x64xbf16>
    %152 = vector.extract_strided_slice %147 {offsets = [0, 0], sizes = [16, 64], strides = [1, 1]} : vector<16x256xbf16> to vector<16x64xbf16>
    %153 = vector.extract_strided_slice %148 {offsets = [0, 0], sizes = [16, 64], strides = [1, 1]} : vector<16x256xbf16> to vector<16x64xbf16>
    %cst_45 = arith.constant dense<0.000000e+00> : vector<16x16xf32>
    %154 = tpu.matmul %151, %152, %cst_45 {dimension_numbers = #tpu.dot_dimension_numbers<[1], [1], [0], [0], [0, 0, 1, 0], [], []>} : vector<16x64xbf16>, vector<16x64xbf16>, vector<16x16xf32> -> vector<16x16xf32>
    %155 = vector.broadcast %149 : vector<1x16xf32> to vector<16x16xf32>
    %156 = arith.addf %154, %155 : vector<16x16xf32>
    %cst_46 = arith.constant dense<0xFF800000> : vector<16xf32>
    %157 = vector.multi_reduction <maximumf>, %156, %cst_46 [1] : vector<16x16xf32> to vector<16xf32>
    %158 = vector.shape_cast %157 : vector<16xf32> to vector<16x1xf32>
    %159 = vector.broadcast %158 : vector<16x1xf32> to vector<16x16xf32>
    %160 = arith.subf %156, %159 : vector<16x16xf32>
    %161 = math.exp %160 : vector<16x16xf32>
    %cst_47 = arith.constant dense<0.000000e+00> : vector<16xf32>
    %162 = vector.multi_reduction <add>, %161, %cst_47 [1] : vector<16x16xf32> to vector<16xf32>
    %163 = vector.shape_cast %162 : vector<16xf32> to vector<16x1xf32>
    %164 = tpu.reciprocal %163 {approx = true} : vector<16x1xf32> -> vector<16x1xf32>
    %165 = vector.broadcast %164 : vector<16x1xf32> to vector<16x16xf32>
    %166 = arith.mulf %161, %165 : vector<16x16xf32>
    %167 = arith.truncf %166 : vector<16x16xf32> to vector<16x16xbf16>
    %cst_48 = arith.constant dense<0.000000e+00> : vector<16x64xf32>
    %168 = tpu.matmul %167, %153, %cst_48 {dimension_numbers = #tpu.dot_dimension_numbers<[1], [0], [0], [1], [0, 0, 1, 1], [], []>} : vector<16x16xbf16>, vector<16x64xbf16>, vector<16x64xf32> -> vector<16x64xf32>
    %169 = arith.truncf %168 : vector<16x64xf32> to vector<16x64xbf16>
    %170 = vector.extract_strided_slice %52 {offsets = [0, 0], sizes = [64, 256], strides = [1, 1]} : vector<256x256xbf16> to vector<64x256xbf16>
    %cst_49 = arith.constant dense<0.000000e+00> : vector<16x256xf32>
    %171 = tpu.matmul %169, %170, %cst_49 {dimension_numbers = #tpu.dot_dimension_numbers<[1], [0], [0], [1], [0, 0, 1, 1], [], []>} : vector<16x64xbf16>, vector<64x256xbf16>, vector<16x256xf32> -> vector<16x256xf32>
    %172 = arith.addf %150, %171 : vector<16x256xf32>
    %173 = vector.extract_strided_slice %146 {offsets = [0, 64], sizes = [16, 64], strides = [1, 1]} : vector<16x256xbf16> to vector<16x64xbf16>
    %174 = vector.extract_strided_slice %147 {offsets = [0, 64], sizes = [16, 64], strides = [1, 1]} : vector<16x256xbf16> to vector<16x64xbf16>
    %175 = vector.extract_strided_slice %148 {offsets = [0, 64], sizes = [16, 64], strides = [1, 1]} : vector<16x256xbf16> to vector<16x64xbf16>
    %cst_50 = arith.constant dense<0.000000e+00> : vector<16x16xf32>
    %176 = tpu.matmul %173, %174, %cst_50 {dimension_numbers = #tpu.dot_dimension_numbers<[1], [1], [0], [0], [0, 0, 1, 0], [], []>} : vector<16x64xbf16>, vector<16x64xbf16>, vector<16x16xf32> -> vector<16x16xf32>
    %177 = vector.broadcast %149 : vector<1x16xf32> to vector<16x16xf32>
    %178 = arith.addf %176, %177 : vector<16x16xf32>
    %cst_51 = arith.constant dense<0xFF800000> : vector<16xf32>
    %179 = vector.multi_reduction <maximumf>, %178, %cst_51 [1] : vector<16x16xf32> to vector<16xf32>
    %180 = vector.shape_cast %179 : vector<16xf32> to vector<16x1xf32>
    %181 = vector.broadcast %180 : vector<16x1xf32> to vector<16x16xf32>
    %182 = arith.subf %178, %181 : vector<16x16xf32>
    %183 = math.exp %182 : vector<16x16xf32>
    %cst_52 = arith.constant dense<0.000000e+00> : vector<16xf32>
    %184 = vector.multi_reduction <add>, %183, %cst_52 [1] : vector<16x16xf32> to vector<16xf32>
    %185 = vector.shape_cast %184 : vector<16xf32> to vector<16x1xf32>
    %186 = tpu.reciprocal %185 {approx = true} : vector<16x1xf32> -> vector<16x1xf32>
    %187 = vector.broadcast %186 : vector<16x1xf32> to vector<16x16xf32>
    %188 = arith.mulf %183, %187 : vector<16x16xf32>
    %189 = arith.truncf %188 : vector<16x16xf32> to vector<16x16xbf16>
    %cst_53 = arith.constant dense<0.000000e+00> : vector<16x64xf32>
    %190 = tpu.matmul %189, %175, %cst_53 {dimension_numbers = #tpu.dot_dimension_numbers<[1], [0], [0], [1], [0, 0, 1, 1], [], []>} : vector<16x16xbf16>, vector<16x64xbf16>, vector<16x64xf32> -> vector<16x64xf32>
    %191 = arith.truncf %190 : vector<16x64xf32> to vector<16x64xbf16>
    %192 = vector.extract_strided_slice %52 {offsets = [64, 0], sizes = [64, 256], strides = [1, 1]} : vector<256x256xbf16> to vector<64x256xbf16>
    %cst_54 = arith.constant dense<0.000000e+00> : vector<16x256xf32>
    %193 = tpu.matmul %191, %192, %cst_54 {dimension_numbers = #tpu.dot_dimension_numbers<[1], [0], [0], [1], [0, 0, 1, 1], [], []>} : vector<16x64xbf16>, vector<64x256xbf16>, vector<16x256xf32> -> vector<16x256xf32>
    %194 = arith.addf %172, %193 : vector<16x256xf32>
    %195 = vector.extract_strided_slice %146 {offsets = [0, 128], sizes = [16, 64], strides = [1, 1]} : vector<16x256xbf16> to vector<16x64xbf16>
    %196 = vector.extract_strided_slice %147 {offsets = [0, 128], sizes = [16, 64], strides = [1, 1]} : vector<16x256xbf16> to vector<16x64xbf16>
    %197 = vector.extract_strided_slice %148 {offsets = [0, 128], sizes = [16, 64], strides = [1, 1]} : vector<16x256xbf16> to vector<16x64xbf16>
    %cst_55 = arith.constant dense<0.000000e+00> : vector<16x16xf32>
    %198 = tpu.matmul %195, %196, %cst_55 {dimension_numbers = #tpu.dot_dimension_numbers<[1], [1], [0], [0], [0, 0, 1, 0], [], []>} : vector<16x64xbf16>, vector<16x64xbf16>, vector<16x16xf32> -> vector<16x16xf32>
    %199 = vector.broadcast %149 : vector<1x16xf32> to vector<16x16xf32>
    %200 = arith.addf %198, %199 : vector<16x16xf32>
    %cst_56 = arith.constant dense<0xFF800000> : vector<16xf32>
    %201 = vector.multi_reduction <maximumf>, %200, %cst_56 [1] : vector<16x16xf32> to vector<16xf32>
    %202 = vector.shape_cast %201 : vector<16xf32> to vector<16x1xf32>
    %203 = vector.broadcast %202 : vector<16x1xf32> to vector<16x16xf32>
    %204 = arith.subf %200, %203 : vector<16x16xf32>
    %205 = math.exp %204 : vector<16x16xf32>
    %cst_57 = arith.constant dense<0.000000e+00> : vector<16xf32>
    %206 = vector.multi_reduction <add>, %205, %cst_57 [1] : vector<16x16xf32> to vector<16xf32>
    %207 = vector.shape_cast %206 : vector<16xf32> to vector<16x1xf32>
    %208 = tpu.reciprocal %207 {approx = true} : vector<16x1xf32> -> vector<16x1xf32>
    %209 = vector.broadcast %208 : vector<16x1xf32> to vector<16x16xf32>
    %210 = arith.mulf %205, %209 : vector<16x16xf32>
    %211 = arith.truncf %210 : vector<16x16xf32> to vector<16x16xbf16>
    %cst_58 = arith.constant dense<0.000000e+00> : vector<16x64xf32>
    %212 = tpu.matmul %211, %197, %cst_58 {dimension_numbers = #tpu.dot_dimension_numbers<[1], [0], [0], [1], [0, 0, 1, 1], [], []>} : vector<16x16xbf16>, vector<16x64xbf16>, vector<16x64xf32> -> vector<16x64xf32>
    %213 = arith.truncf %212 : vector<16x64xf32> to vector<16x64xbf16>
    %214 = vector.extract_strided_slice %52 {offsets = [128, 0], sizes = [64, 256], strides = [1, 1]} : vector<256x256xbf16> to vector<64x256xbf16>
    %cst_59 = arith.constant dense<0.000000e+00> : vector<16x256xf32>
    %215 = tpu.matmul %213, %214, %cst_59 {dimension_numbers = #tpu.dot_dimension_numbers<[1], [0], [0], [1], [0, 0, 1, 1], [], []>} : vector<16x64xbf16>, vector<64x256xbf16>, vector<16x256xf32> -> vector<16x256xf32>
    %216 = arith.addf %194, %215 : vector<16x256xf32>
    %217 = vector.extract_strided_slice %146 {offsets = [0, 192], sizes = [16, 64], strides = [1, 1]} : vector<16x256xbf16> to vector<16x64xbf16>
    %218 = vector.extract_strided_slice %147 {offsets = [0, 192], sizes = [16, 64], strides = [1, 1]} : vector<16x256xbf16> to vector<16x64xbf16>
    %219 = vector.extract_strided_slice %148 {offsets = [0, 192], sizes = [16, 64], strides = [1, 1]} : vector<16x256xbf16> to vector<16x64xbf16>
    %cst_60 = arith.constant dense<0.000000e+00> : vector<16x16xf32>
    %220 = tpu.matmul %217, %218, %cst_60 {dimension_numbers = #tpu.dot_dimension_numbers<[1], [1], [0], [0], [0, 0, 1, 0], [], []>} : vector<16x64xbf16>, vector<16x64xbf16>, vector<16x16xf32> -> vector<16x16xf32>
    %221 = vector.broadcast %149 : vector<1x16xf32> to vector<16x16xf32>
    %222 = arith.addf %220, %221 : vector<16x16xf32>
    %cst_61 = arith.constant dense<0xFF800000> : vector<16xf32>
    %223 = vector.multi_reduction <maximumf>, %222, %cst_61 [1] : vector<16x16xf32> to vector<16xf32>
    %224 = vector.shape_cast %223 : vector<16xf32> to vector<16x1xf32>
    %225 = vector.broadcast %224 : vector<16x1xf32> to vector<16x16xf32>
    %226 = arith.subf %222, %225 : vector<16x16xf32>
    %227 = math.exp %226 : vector<16x16xf32>
    %cst_62 = arith.constant dense<0.000000e+00> : vector<16xf32>
    %228 = vector.multi_reduction <add>, %227, %cst_62 [1] : vector<16x16xf32> to vector<16xf32>
    %229 = vector.shape_cast %228 : vector<16xf32> to vector<16x1xf32>
    %230 = tpu.reciprocal %229 {approx = true} : vector<16x1xf32> -> vector<16x1xf32>
    %231 = vector.broadcast %230 : vector<16x1xf32> to vector<16x16xf32>
    %232 = arith.mulf %227, %231 : vector<16x16xf32>
    %233 = arith.truncf %232 : vector<16x16xf32> to vector<16x16xbf16>
    %cst_63 = arith.constant dense<0.000000e+00> : vector<16x64xf32>
    %234 = tpu.matmul %233, %219, %cst_63 {dimension_numbers = #tpu.dot_dimension_numbers<[1], [0], [0], [1], [0, 0, 1, 1], [], []>} : vector<16x16xbf16>, vector<16x64xbf16>, vector<16x64xf32> -> vector<16x64xf32>
    %235 = arith.truncf %234 : vector<16x64xf32> to vector<16x64xbf16>
    %236 = vector.extract_strided_slice %52 {offsets = [192, 0], sizes = [64, 256], strides = [1, 1]} : vector<256x256xbf16> to vector<64x256xbf16>
    %cst_64 = arith.constant dense<0.000000e+00> : vector<16x256xf32>
    %237 = tpu.matmul %235, %236, %cst_64 {dimension_numbers = #tpu.dot_dimension_numbers<[1], [0], [0], [1], [0, 0, 1, 1], [], []>} : vector<16x64xbf16>, vector<64x256xbf16>, vector<16x256xf32> -> vector<16x256xf32>
    %238 = arith.addf %216, %237 : vector<16x256xf32>
    %239 = tpu.concatenate %145, %238 in 0 : vector<16x256xf32>, vector<16x256xf32> -> vector<32x256xf32>
    %c0_65 = arith.constant 0 : index
    %c0_66 = arith.constant 0 : index
    %c0_67 = arith.constant 0 : index
    %240 = vector.load %arg7[%c0_65, %c0_66, %c0_67] : memref<1x1x256xf32, #tpu.memory_space<vmem>>, vector<1x1x256xf32>
    %241 = vector.shape_cast %240 : vector<1x1x256xf32> to vector<1x256xf32>
    %242 = vector.broadcast %241 : vector<1x256xf32> to vector<32x256xf32>
    %243 = arith.addf %239, %242 : vector<32x256xf32>
    %244 = arith.addf %9, %243 : vector<32x256xf32>
    %cst_68 = arith.constant dense<0.000000e+00> : vector<32xf32>
    %245 = vector.multi_reduction <add>, %244, %cst_68 [1] : vector<32x256xf32> to vector<32xf32>
    %246 = vector.shape_cast %245 : vector<32xf32> to vector<32x1xf32>
    %cst_69 = arith.constant 2.560000e+02 : f32
    %247 = vector.broadcast %cst_69 : f32 to vector<32x1xf32>
    %248 = arith.divf %246, %247 : vector<32x1xf32>
    %249 = vector.broadcast %248 : vector<32x1xf32> to vector<32x256xf32>
    %250 = arith.subf %244, %249 : vector<32x256xf32>
    %251 = arith.mulf %250, %250 : vector<32x256xf32>
    %cst_70 = arith.constant dense<0.000000e+00> : vector<32xf32>
    %252 = vector.multi_reduction <add>, %251, %cst_70 [1] : vector<32x256xf32> to vector<32xf32>
    %253 = vector.shape_cast %252 : vector<32xf32> to vector<32x1xf32>
    %cst_71 = arith.constant 2.560000e+02 : f32
    %254 = vector.broadcast %cst_71 : f32 to vector<32x1xf32>
    %255 = arith.divf %253, %254 : vector<32x1xf32>
    %256 = vector.broadcast %248 : vector<32x1xf32> to vector<32x256xf32>
    %257 = arith.subf %244, %256 : vector<32x256xf32>
    %cst_72 = arith.constant 9.99999974E-6 : f32
    %258 = vector.broadcast %cst_72 : f32 to vector<32x1xf32>
    %259 = arith.addf %255, %258 : vector<32x1xf32>
    %260 = math.rsqrt %259 : vector<32x1xf32>
    %261 = vector.broadcast %260 : vector<32x1xf32> to vector<32x256xf32>
    %262 = arith.mulf %257, %261 : vector<32x256xf32>
    %263 = vector.broadcast %7 : vector<1x256xf32> to vector<32x256xf32>
    %264 = arith.mulf %262, %263 : vector<32x256xf32>
    %265 = vector.broadcast %8 : vector<1x256xf32> to vector<32x256xf32>
    %266 = arith.addf %264, %265 : vector<32x256xf32>
    %267 = arith.truncf %266 : vector<32x256xf32> to vector<32x256xbf16>
    %c0_73 = arith.constant 0 : index
    %c0_74 = arith.constant 0 : index
    %c0_75 = arith.constant 0 : index
    %268 = vector.load %arg8[%c0_73, %c0_74, %c0_75] : memref<1x256x1024xbf16, #tpu.memory_space<vmem>>, vector<1x256x1024xbf16>
    %269 = vector.shape_cast %268 : vector<1x256x1024xbf16> to vector<256x1024xbf16>
    %cst_76 = arith.constant dense<0.000000e+00> : vector<32x1024xf32>
    %270 = tpu.matmul %267, %269, %cst_76 {dimension_numbers = #tpu.dot_dimension_numbers<[1], [0], [0], [1], [0, 0, 1, 1], [], []>} : vector<32x256xbf16>, vector<256x1024xbf16>, vector<32x1024xf32> -> vector<32x1024xf32>
    %c0_77 = arith.constant 0 : index
    %c0_78 = arith.constant 0 : index
    %c0_79 = arith.constant 0 : index
    %271 = vector.load %arg9[%c0_77, %c0_78, %c0_79] : memref<1x1x1024xf32, #tpu.memory_space<vmem>>, vector<1x1x1024xf32>
    %272 = vector.shape_cast %271 : vector<1x1x1024xf32> to vector<1x1024xf32>
    %273 = vector.broadcast %272 : vector<1x1024xf32> to vector<32x1024xf32>
    %274 = arith.addf %270, %273 : vector<32x1024xf32>
    %275 = arith.mulf %274, %274 : vector<32x1024xf32>
    %276 = arith.mulf %274, %275 : vector<32x1024xf32>
    %cst_80 = arith.constant 4.471500e-02 : f32
    %277 = vector.broadcast %cst_80 : f32 to vector<32x1024xf32>
    %278 = arith.mulf %277, %276 : vector<32x1024xf32>
    %279 = arith.addf %274, %278 : vector<32x1024xf32>
    %cst_81 = arith.constant 0.797884583 : f32
    %280 = vector.broadcast %cst_81 : f32 to vector<32x1024xf32>
    %281 = arith.mulf %280, %279 : vector<32x1024xf32>
    %282 = math.tanh %281 : vector<32x1024xf32>
    %cst_82 = arith.constant 1.000000e+00 : f32
    %283 = vector.broadcast %cst_82 : f32 to vector<32x1024xf32>
    %284 = arith.addf %283, %282 : vector<32x1024xf32>
    %cst_83 = arith.constant 5.000000e-01 : f32
    %285 = vector.broadcast %cst_83 : f32 to vector<32x1024xf32>
    %286 = arith.mulf %285, %284 : vector<32x1024xf32>
    %287 = arith.mulf %274, %286 : vector<32x1024xf32>
    %288 = arith.truncf %287 : vector<32x1024xf32> to vector<32x1024xbf16>
    %c0_84 = arith.constant 0 : index
    %c0_85 = arith.constant 0 : index
    %c0_86 = arith.constant 0 : index
    %289 = vector.load %arg10[%c0_84, %c0_85, %c0_86] : memref<1x1024x256xbf16, #tpu.memory_space<vmem>>, vector<1x1024x256xbf16>
    %290 = vector.shape_cast %289 : vector<1x1024x256xbf16> to vector<1024x256xbf16>
    %cst_87 = arith.constant dense<0.000000e+00> : vector<32x256xf32>
    %291 = tpu.matmul %288, %290, %cst_87 {dimension_numbers = #tpu.dot_dimension_numbers<[1], [0], [0], [1], [0, 0, 1, 1], [], []>} : vector<32x1024xbf16>, vector<1024x256xbf16>, vector<32x256xf32> -> vector<32x256xf32>
    %c0_88 = arith.constant 0 : index
    %c0_89 = arith.constant 0 : index
    %c0_90 = arith.constant 0 : index
    %292 = vector.load %arg11[%c0_88, %c0_89, %c0_90] : memref<1x1x256xf32, #tpu.memory_space<vmem>>, vector<1x1x256xf32>
    %293 = vector.shape_cast %292 : vector<1x1x256xf32> to vector<1x256xf32>
    %294 = vector.broadcast %293 : vector<1x256xf32> to vector<32x256xf32>
    %295 = arith.addf %291, %294 : vector<32x256xf32>
    %296 = arith.addf %244, %295 : vector<32x256xf32>
    %c0_91 = arith.constant 0 : index
    %c0_92 = arith.constant 0 : index
    %297 = vector.load %arg16[%c0_91, %c0_92] : memref<32x256xf32, #tpu.memory_space<vmem>>, vector<32x256xf32>
    tpu.vector_store %arg16[%c0_91, %c0_92], %296 {strides = array<i32>} : memref<32x256xf32, #tpu.memory_space<vmem>>, vector<32x256xf32>,
    %c3_i32 = arith.constant 3 : i32
    %298 = arith.cmpi eq, %arg0, %c3_i32 : i32
    %299 = arith.extui %298 : i1 to i32
    %c0_i32_93 = arith.constant 0 : i32
    %300 = arith.cmpi ne, %299, %c0_i32_93 : i32
    scf.if %300 {
      %301 = vector.extract_strided_slice %296 {offsets = [0, 0], sizes = [1, 256], strides = [1, 1]} : vector<32x256xf32> to vector<1x256xf32>
      %302 = vector.extract_strided_slice %296 {offsets = [16, 0], sizes = [1, 256], strides = [1, 1]} : vector<32x256xf32> to vector<1x256xf32>
      %303 = tpu.concatenate %301, %302 in 0 : vector<1x256xf32>, vector<1x256xf32> -> vector<2x256xf32>
      %c0_94 = arith.constant 0 : index
      %c0_95 = arith.constant 0 : index
      %304 = vector.load %arg12[%c0_94, %c0_95] : memref<2x256xf32, #tpu.memory_space<vmem>>, vector<2x256xf32>
      %305 = vector.extract_strided_slice %304 {offsets = [0, 0], sizes = [1, 256], strides = [1, 1]} : vector<2x256xf32> to vector<1x256xf32>
      %306 = vector.extract_strided_slice %304 {offsets = [1, 0], sizes = [1, 256], strides = [1, 1]} : vector<2x256xf32> to vector<1x256xf32>
      %cst_96 = arith.constant dense<0.000000e+00> : vector<2xf32>
      %307 = vector.multi_reduction <add>, %303, %cst_96 [1] : vector<2x256xf32> to vector<2xf32>
      %308 = vector.shape_cast %307 : vector<2xf32> to vector<2x1xf32>
      %cst_97 = arith.constant 2.560000e+02 : f32
      %309 = vector.broadcast %cst_97 : f32 to vector<2x1xf32>
      %310 = arith.divf %308, %309 : vector<2x1xf32>
      %311 = vector.broadcast %310 : vector<2x1xf32> to vector<2x256xf32>
      %312 = arith.subf %303, %311 : vector<2x256xf32>
      %313 = arith.mulf %312, %312 : vector<2x256xf32>
      %cst_98 = arith.constant dense<0.000000e+00> : vector<2xf32>
      %314 = vector.multi_reduction <add>, %313, %cst_98 [1] : vector<2x256xf32> to vector<2xf32>
      %315 = vector.shape_cast %314 : vector<2xf32> to vector<2x1xf32>
      %cst_99 = arith.constant 2.560000e+02 : f32
      %316 = vector.broadcast %cst_99 : f32 to vector<2x1xf32>
      %317 = arith.divf %315, %316 : vector<2x1xf32>
      %318 = vector.broadcast %310 : vector<2x1xf32> to vector<2x256xf32>
      %319 = arith.subf %303, %318 : vector<2x256xf32>
      %cst_100 = arith.constant 9.99999974E-6 : f32
      %320 = vector.broadcast %cst_100 : f32 to vector<2x1xf32>
      %321 = arith.addf %317, %320 : vector<2x1xf32>
      %322 = math.rsqrt %321 : vector<2x1xf32>
      %323 = vector.broadcast %322 : vector<2x1xf32> to vector<2x256xf32>
      %324 = arith.mulf %319, %323 : vector<2x256xf32>
      %325 = vector.broadcast %305 : vector<1x256xf32> to vector<2x256xf32>
      %326 = arith.mulf %324, %325 : vector<2x256xf32>
      %327 = vector.broadcast %306 : vector<1x256xf32> to vector<2x256xf32>
      %328 = arith.addf %326, %327 : vector<2x256xf32>
      %329 = arith.truncf %328 : vector<2x256xf32> to vector<2x256xbf16>
      %c0_101 = arith.constant 0 : index
      %c0_102 = arith.constant 0 : index
      %330 = vector.load %arg13[%c0_101, %c0_102] : memref<256x128xbf16, #tpu.memory_space<vmem>>, vector<256x128xbf16>
      %cst_103 = arith.constant dense<0.000000e+00> : vector<2x128xf32>
      %331 = tpu.matmul %329, %330, %cst_103 {dimension_numbers = #tpu.dot_dimension_numbers<[1], [0], [0], [1], [0, 0, 1, 1], [], []>} : vector<2x256xbf16>, vector<256x128xbf16>, vector<2x128xf32> -> vector<2x128xf32>
      %c0_104 = arith.constant 0 : index
      %c0_105 = arith.constant 0 : index
      %332 = vector.load %arg14[%c0_104, %c0_105] : memref<1x128xf32, #tpu.memory_space<vmem>>, vector<1x128xf32>
      %333 = vector.broadcast %332 : vector<1x128xf32> to vector<2x128xf32>
      %334 = arith.addf %331, %333 : vector<2x128xf32>
      %c0_106 = arith.constant 0 : index
      %c0_107 = arith.constant 0 : index
      %335 = vector.load %arg15[%c0_106, %c0_107] : memref<2x128xf32, #tpu.memory_space<vmem>>, vector<2x128xf32>
      tpu.vector_store %arg15[%c0_106, %c0_107], %334 {strides = array<i32>} : memref<2x128xf32, #tpu.memory_space<vmem>>, vector<2x128xf32>,
    } else {
    }
    return
  }
  func.func @transform_0(%arg0: i32) -> (i32, i32) {
    %c0_i32 = arith.constant 0 : i32
    %c0_i32_0 = arith.constant 0 : i32
    %c0_i32_1 = arith.constant 0 : i32
    return %c0_i32, %c0_i32_0 : i32, i32
  }
  func.func @transform_1(%arg0: i32) -> (i32, i32) {
    %c0_i32 = arith.constant 0 : i32
    %c0_i32_0 = arith.constant 0 : i32
    %c0_i32_1 = arith.constant 0 : i32
    return %c0_i32, %c0_i32_0 : i32, i32
  }
  func.func @transform_2(%arg0: i32) -> (i32, i32, i32) {
    %c0_i32 = arith.constant 0 : i32
    %c0_i32_0 = arith.constant 0 : i32
    %c0_i32_1 = arith.constant 0 : i32
    return %arg0, %c0_i32, %c0_i32_0 : i32, i32, i32
  }
  func.func @transform_3(%arg0: i32) -> (i32, i32, i32) {
    %c0_i32 = arith.constant 0 : i32
    %c0_i32_0 = arith.constant 0 : i32
    %c0_i32_1 = arith.constant 0 : i32
    return %arg0, %c0_i32, %c0_i32_0 : i32, i32, i32
  }
  func.func @transform_4(%arg0: i32) -> (i32, i32, i32) {
    %c0_i32 = arith.constant 0 : i32
    %c0_i32_0 = arith.constant 0 : i32
    %c0_i32_1 = arith.constant 0 : i32
    return %arg0, %c0_i32, %c0_i32_0 : i32, i32, i32
  }
  func.func @transform_5(%arg0: i32) -> (i32, i32, i32) {
    %c0_i32 = arith.constant 0 : i32
    %c0_i32_0 = arith.constant 0 : i32
    %c0_i32_1 = arith.constant 0 : i32
    return %arg0, %c0_i32, %c0_i32_0 : i32, i32, i32
  }
  func.func @transform_6(%arg0: i32) -> (i32, i32, i32) {
    %c0_i32 = arith.constant 0 : i32
    %c0_i32_0 = arith.constant 0 : i32
    %c0_i32_1 = arith.constant 0 : i32
    return %arg0, %c0_i32, %c0_i32_0 : i32, i32, i32
  }
  func.func @transform_7(%arg0: i32) -> (i32, i32, i32) {
    %c0_i32 = arith.constant 0 : i32
    %c0_i32_0 = arith.constant 0 : i32
    %c0_i32_1 = arith.constant 0 : i32
    return %arg0, %c0_i32, %c0_i32_0 : i32, i32, i32
  }
  func.func @transform_8(%arg0: i32) -> (i32, i32, i32) {
    %c0_i32 = arith.constant 0 : i32
    %c0_i32_0 = arith.constant 0 : i32
    %c0_i32_1 = arith.constant 0 : i32
    return %arg0, %c0_i32, %c0_i32_0 : i32, i32, i32
  }
  func.func @transform_9(%arg0: i32) -> (i32, i32, i32) {
    %c0_i32 = arith.constant 0 : i32
    %c0_i32_0 = arith.constant 0 : i32
    %c0_i32_1 = arith.constant 0 : i32
    return %arg0, %c0_i32, %c0_i32_0 : i32, i32, i32
  }
  func.func @transform_10(%arg0: i32) -> (i32, i32, i32) {
    %c0_i32 = arith.constant 0 : i32
    %c0_i32_0 = arith.constant 0 : i32
    %c0_i32_1 = arith.constant 0 : i32
    return %arg0, %c0_i32, %c0_i32_0 : i32, i32, i32
  }
  func.func @transform_11(%arg0: i32) -> (i32, i32) {
    %c0_i32 = arith.constant 0 : i32
    %c0_i32_0 = arith.constant 0 : i32
    %c0_i32_1 = arith.constant 0 : i32
    return %c0_i32, %c0_i32_0 : i32, i32
  }
  func.func @transform_12(%arg0: i32) -> (i32, i32) {
    %c0_i32 = arith.constant 0 : i32
    %c0_i32_0 = arith.constant 0 : i32
    %c0_i32_1 = arith.constant 0 : i32
    return %c0_i32, %c0_i32_0 : i32, i32
  }
  func.func @transform_13(%arg0: i32) -> (i32, i32) {
    %c0_i32 = arith.constant 0 : i32
    %c0_i32_0 = arith.constant 0 : i32
    %c0_i32_1 = arith.constant 0 : i32
    return %c0_i32, %c0_i32_0 : i32, i32
  }
  func.func @transform_14(%arg0: i32) -> (i32, i32) {
    %c0_i32 = arith.constant 0 : i32
    %c0_i32_0 = arith.constant 0 : i32
    %c0_i32_1 = arith.constant 0 : i32
    return %c0_i32, %c0_i32_0 : i32, i32
  }
}

</mosaic_0001>

<llo_original>
// kernel: tpu_custom_call.1
$region0: #{tpu_custom_call.1}
  #allocation0 [shape = 'u32[]', space=smem, size = 0x4, offset = 0x4, fixed_abs, tag = 'smem constant byte address 0x4 - core index']
  #allocation1 [shape = 'u32[144,128]{1,0:T(1,128)}', space=vmem, size = 0x12000, scoped, tag = 'internal scratch']
  #allocation2 [shape = 'f32[32,256]{1,0:T(8,128)}', space=vmem, size = 0x8000, scoped, tag = 'scratch operand']
  %s0 = inlined_call_operand.hbm [shape: f32[2,16], index: 0, kind: input, shape index: {}]
  %s1 = inlined_call_operand.hbm [shape: f32[32,256], index: 1, kind: input, shape index: {}]
  %s2 = inlined_call_operand.hbm [shape: f32[4,4,256], index: 2, kind: input, shape index: {}]
  %s3 = inlined_call_operand.hbm [shape: bf16[4,256,768], index: 3, kind: input, shape index: {}]
  %s4 = inlined_call_operand.hbm [shape: f32[4,1,768], index: 4, kind: input, shape index: {}]
  %s5 = inlined_call_operand.hbm [shape: bf16[4,256,256], index: 5, kind: input, shape index: {}]
  %s6 = inlined_call_operand.hbm [shape: f32[4,1,256], index: 6, kind: input, shape index: {}]
  %s7 = inlined_call_operand.hbm [shape: bf16[4,256,1024], index: 7, kind: input, shape index: {}]
  %s8 = inlined_call_operand.hbm [shape: f32[4,1,1024], index: 8, kind: input, shape index: {}]
  %s9 = inlined_call_operand.hbm [shape: bf16[4,1024,256], index: 9, kind: input, shape index: {}]
  %s10 = inlined_call_operand.hbm [shape: f32[4,1,256], index: 10, kind: input, shape index: {}]
  %s11 = inlined_call_operand.hbm [shape: f32[2,256], index: 11, kind: input, shape index: {}]
  %s12 = inlined_call_operand.hbm [shape: bf16[256,128], index: 12, kind: input, shape index: {}]
  %s13 = inlined_call_operand.hbm [shape: f32[1,128], index: 13, kind: input, shape index: {}]
  %s14 = inlined_call_operand.hbm [shape: f32[2,128], index: 14, kind: output, shape index: {}]
  %s15 = sld [smem:[#allocation0]]
  $region153: #{tpu_custom_call.1} parent=0
    _
  %s17 = ssub.s32 1, %s15
  %s18 = scalar_select 0, %s17, %s15
  $region1: #{tpu_custom_call.1} parent=0
    #allocation3 [shape = 'u8[1024]{0}', space=vmem, size = 0x400, scoped, tag = 'input window, operand 0, single buffered']
    #allocation4 [shape = 's32[2]{0}', space=sflag, size = 0x8, scoped, tag = 'scoped memory for tpu_custom_call.1']
    #allocation5 [shape = 's32[2]{0}', space=sflag, size = 0x8, scoped, tag = 'scoped memory for tpu_custom_call.1']
    #allocation6 [shape = 'u8[32768]{0}', space=vmem, size = 0x8000, scoped, tag = 'input window, operand 1, single buffered']
    #allocation7 [shape = 's32[1]{0}', space=sflag, size = 0x4, scoped, tag = 'scoped memory for tpu_custom_call.1']
    #allocation8 [shape = 'u8[8192]{0}', space=vmem, size = 0x2000, scoped, tag = 'input window, operand 2']
    #allocation9 [shape = 'u8[786432]{0}', space=vmem, size = 0xc0000, scoped, tag = 'input window, operand 3']
    #allocation10 [shape = 'u8[6144]{0}', space=vmem, size = 0x1800, scoped, tag = 'input window, operand 4']
    #allocation11 [shape = 'u8[262144]{0}', space=vmem, size = 0x40000, scoped, tag = 'input window, operand 5']
    #allocation12 [shape = 'u8[2048]{0}', space=vmem, size = 0x800, scoped, tag = 'input window, operand 6']
    #allocation13 [shape = 'u8[1048576]{0}', space=vmem, size = 0x100000, scoped, tag = 'input window, operand 7']
    #allocation14 [shape = 'u8[8192]{0}', space=vmem, size = 0x2000, scoped, tag = 'input window, operand 8']
    #allocation15 [shape = 'u8[1048576]{0}', space=vmem, size = 0x100000, scoped, tag = 'input window, operand 9']
    #allocation16 [shape = 'u8[2048]{0}', space=vmem, size = 0x800, scoped, tag = 'input window, operand 10']
    #allocation17 [shape = 'u8[2048]{0}', space=vmem, size = 0x800, scoped, tag = 'input window, operand 11, single buffered']
    #allocation18 [shape = 'u8[65536]{0}', space=vmem, size = 0x10000, scoped, tag = 'input window, operand 12, single buffered']
    #allocation19 [shape = 's32[1]{0}', space=sflag, size = 0x4, scoped, tag = 'scoped memory for tpu_custom_call.1']
    #allocation20 [shape = 'u8[512]{0}', space=vmem, size = 0x400, scoped, tag = 'input window, operand 13, single buffered']
    #allocation21 [shape = 'u8[1024]{0}', space=vmem, size = 0x400, scoped, tag = 'output window, operand 0, single buffered']
    %19 = vsyncpa [#allocation4], 0
    %20 = vsyncpa [#allocation7], 0
    %21 = vsyncpa [#allocation19], 0
    %22 = vsyncpa [#allocation5], 0
    loop: start=0, step=1, limit=6
    $region2: #{tpu_custom_call.1} parent=1 // loop_pre_header
      _
    $region3: #{tpu_custom_call.1} parent=1 // loop_header
      %s24 = sphi 0, %s28
      %p25 = scmp.ge.s32.totalorder %s24, 6
      %s32 = sphi 0, %s32
      %s34 = sphi 0, %s32
      %s35 = sphi 0, %s34
      %s49 = sphi 0, %s35
      %s53 = sphi 0, %s53
      %s55 = sphi 0, %s53
      %s56 = sphi 0, %s55
      %s70 = sphi 0, %s56
      %s76 = sphi 0, %s78
      %s79 = sphi 0, %s76
      %s80 = sphi 0, %s79
      %s96 = sphi 0, %s80
      %s102 = sphi 0, %s104
      %s105 = sphi 0, %s102
      %s106 = sphi 0, %s105
      %s122 = sphi 0, %s106
      %s128 = sphi 0, %s130
      %s131 = sphi 0, %s128
      %s132 = sphi 0, %s131
      %s148 = sphi 0, %s132
      %s154 = sphi 0, %s156
      %s157 = sphi 0, %s154
      %s158 = sphi 0, %s157
      %s174 = sphi 0, %s158
      %s180 = sphi 0, %s182
      %s183 = sphi 0, %s180
      %s184 = sphi 0, %s183
      %s200 = sphi 0, %s184
      %s206 = sphi 0, %s208
      %s209 = sphi 0, %s206
      %s210 = sphi 0, %s209
      %s226 = sphi 0, %s210
      %s232 = sphi 0, %s234
      %s235 = sphi 0, %s232
      %s236 = sphi 0, %s235
      %s252 = sphi 0, %s236
      %s258 = sphi 0, %s260
      %s261 = sphi 0, %s258
      %s262 = sphi 0, %s261
      %s278 = sphi 0, %s262
      %s284 = sphi 0, %s286
      %s287 = sphi 0, %s284
      %s288 = sphi 0, %s287
      %s304 = sphi 0, %s288
      %s308 = sphi 0, %s308
      %s310 = sphi 0, %s308
      %s311 = sphi 0, %s310
      %s325 = sphi 0, %s311
      %s329 = sphi 0, %s329
      %s331 = sphi 0, %s329
      %s332 = sphi 0, %s331
      %s346 = sphi 0, %s332
      %s350 = sphi 0, %s350
      %s352 = sphi 0, %s350
      %s353 = sphi 0, %s352
      %s367 = sphi 0, %s353
      %s371 = sphi 0, %s371
      %s373 = sphi 0, %s371
      %s374 = sphi 0, %s373
      %s388 = sphi 0, %s374
    $region4: #{tpu_custom_call.1} parent=1 // loop_header_branch
      %27 = sbr.rel (%p25) target = $region8
    $region5: #{tpu_custom_call.1} parent=1 // loop_body
      %s29 = ssub.s32 %s24, 1
      %s30 = ssub.s32 %s24, 2
      %s31 = sadd.s32 %s24, 1
      %s33 = sadd.s32 %s32, 1
      %p36 = scmp.eq.s32.totalorder %s24, 3
      %p37 = scmp.ne.s32.totalorder %s32, %s34
      %p38 = scmp.eq.s32.totalorder %s24, 0
      %p39 = por %p37, %p38
      %p40 = scmp.ne.s32.totalorder %s32, %s34
      %p41 = scmp.eq.s32.totalorder %s29, 3
      %p42 = por %p40, %p41
      %p43 = scmp.ne.s32.totalorder %s34, %s35
      %p44 = scmp.eq.s32.totalorder %s29, 0
      %p45 = por %p43, %p44
      %p46 = scmp.ne.s32.totalorder %s34, %s35
      %p47 = scmp.eq.s32.totalorder %s30, 3
      %p48 = por %p46, %p47
      %p50 = scmp.ne.s32.totalorder %s35, %s49
      %p51 = scmp.eq.s32.totalorder %s30, 0
      %p52 = por %p50, %p51
      %s54 = sadd.s32 %s53, 1
      %p57 = scmp.eq.s32.totalorder %s24, 3
      %p58 = scmp.ne.s32.totalorder %s53, %s55
      %p59 = scmp.eq.s32.totalorder %s24, 0
      %p60 = por %p58, %p59
      %p61 = scmp.ne.s32.totalorder %s53, %s55
      %p62 = scmp.eq.s32.totalorder %s29, 3
      %p63 = por %p61, %p62
      %p64 = scmp.ne.s32.totalorder %s55, %s56
      %p65 = scmp.eq.s32.totalorder %s29, 0
      %p66 = por %p64, %p65
      %p67 = scmp.ne.s32.totalorder %s55, %s56
      %p68 = scmp.eq.s32.totalorder %s30, 3
      %p69 = por %p67, %p68
      %p71 = scmp.ne.s32.totalorder %s56, %s70
      %p72 = scmp.eq.s32.totalorder %s30, 0
      %p73 = por %p71, %p72
      %s74 = ssub.s32 %s24, %s31
      %p75 = scmp.eq.s32.totalorder %s74, 0
      %s77 = sadd.s32 %s76, 1
      %s78 = scalar_select %p75, %s76, %s77
      %p81 = pneg %p75
      %p82 = scmp.eq.s32.totalorder %s24, 3
      %p83 = por %p81, %p82
      %p84 = scmp.ne.s32.totalorder %s76, %s79
      %p85 = scmp.eq.s32.totalorder %s24, 0
      %p86 = por %p84, %p85
      %p87 = scmp.ne.s32.totalorder %s76, %s79
      %p88 = scmp.eq.s32.totalorder %s29, 3
      %p89 = por %p87, %p88
      %p90 = scmp.ne.s32.totalorder %s79, %s80
      %p91 = scmp.eq.s32.totalorder %s29, 0
      %p92 = por %p90, %p91
      %p93 = scmp.ne.s32.totalorder %s79, %s80
      %p94 = scmp.eq.s32.totalorder %s30, 3
      %p95 = por %p93, %p94
      %p97 = scmp.ne.s32.totalorder %s80, %s96
      %p98 = scmp.eq.s32.totalorder %s30, 0
      %p99 = por %p97, %p98
      %s100 = ssub.s32 %s24, %s31
      %p101 = scmp.eq.s32.totalorder %s100, 0
      %s103 = sadd.s32 %s102, 1
      %s104 = scalar_select %p101, %s102, %s103
      %p107 = pneg %p101
      %p108 = scmp.eq.s32.totalorder %s24, 3
      %p109 = por %p107, %p108
      %p110 = scmp.ne.s32.totalorder %s102, %s105
      %p111 = scmp.eq.s32.totalorder %s24, 0
      %p112 = por %p110, %p111
      %p113 = scmp.ne.s32.totalorder %s102, %s105
      %p114 = scmp.eq.s32.totalorder %s29, 3
      %p115 = por %p113, %p114
      %p116 = scmp.ne.s32.totalorder %s105, %s106
      %p117 = scmp.eq.s32.totalorder %s29, 0
      %p118 = por %p116, %p117
      %p119 = scmp.ne.s32.totalorder %s105, %s106
      %p120 = scmp.eq.s32.totalorder %s30, 3
      %p121 = por %p119, %p120
      %p123 = scmp.ne.s32.totalorder %s106, %s122
      %p124 = scmp.eq.s32.totalorder %s30, 0
      %p125 = por %p123, %p124
      %s126 = ssub.s32 %s24, %s31
      %p127 = scmp.eq.s32.totalorder %s126, 0
      %s129 = sadd.s32 %s128, 1
      %s130 = scalar_select %p127, %s128, %s129
      %p133 = pneg %p127
      %p134 = scmp.eq.s32.totalorder %s24, 3
      %p135 = por %p133, %p134
      %p136 = scmp.ne.s32.totalorder %s128, %s131
      %p137 = scmp.eq.s32.totalorder %s24, 0
      %p138 = por %p136, %p137
      %p139 = scmp.ne.s32.totalorder %s128, %s131
      %p140 = scmp.eq.s32.totalorder %s29, 3
      %p141 = por %p139, %p140
      %p142 = scmp.ne.s32.totalorder %s131, %s132
      %p143 = scmp.eq.s32.totalorder %s29, 0
      %p144 = por %p142, %p143
      %p145 = scmp.ne.s32.totalorder %s131, %s132
      %p146 = scmp.eq.s32.totalorder %s30, 3
      %p147 = por %p145, %p146
      %p149 = scmp.ne.s32.totalorder %s132, %s148
      %p150 = scmp.eq.s32.totalorder %s30, 0
      %p151 = por %p149, %p150
      %s152 = ssub.s32 %s24, %s31
      %p153 = scmp.eq.s32.totalorder %s152, 0
      %s155 = sadd.s32 %s154, 1
      %s156 = scalar_select %p153, %s154, %s155
      %p159 = pneg %p153
      %p160 = scmp.eq.s32.totalorder %s24, 3
      %p161 = por %p159, %p160
      %p162 = scmp.ne.s32.totalorder %s154, %s157
      %p163 = scmp.eq.s32.totalorder %s24, 0
      %p164 = por %p162, %p163
      %p165 = scmp.ne.s32.totalorder %s154, %s157
      %p166 = scmp.eq.s32.totalorder %s29, 3
      %p167 = por %p165, %p166
      %p168 = scmp.ne.s32.totalorder %s157, %s158
      %p169 = scmp.eq.s32.totalorder %s29, 0
      %p170 = por %p168, %p169
      %p171 = scmp.ne.s32.totalorder %s157, %s158
      %p172 = scmp.eq.s32.totalorder %s30, 3
      %p173 = por %p171, %p172
      %p175 = scmp.ne.s32.totalorder %s158, %s174
      %p176 = scmp.eq.s32.totalorder %s30, 0
      %p177 = por %p175, %p176
      %s178 = ssub.s32 %s24, %s31
      %p179 = scmp.eq.s32.totalorder %s178, 0
      %s181 = sadd.s32 %s180, 1
      %s182 = scalar_select %p179, %s180, %s181
      %p185 = pneg %p179
      %p186 = scmp.eq.s32.totalorder %s24, 3
      %p187 = por %p185, %p186
      %p188 = scmp.ne.s32.totalorder %s180, %s183
      %p189 = scmp.eq.s32.totalorder %s24, 0
      %p190 = por %p188, %p189
      %p191 = scmp.ne.s32.totalorder %s180, %s183
      %p192 = scmp.eq.s32.totalorder %s29, 3
      %p193 = por %p191, %p192
      %p194 = scmp.ne.s32.totalorder %s183, %s184
      %p195 = scmp.eq.s32.totalorder %s29, 0
      %p196 = por %p194, %p195
      %p197 = scmp.ne.s32.totalorder %s183, %s184
      %p198 = scmp.eq.s32.totalorder %s30, 3
      %p199 = por %p197, %p198
      %p201 = scmp.ne.s32.totalorder %s184, %s200
      %p202 = scmp.eq.s32.totalorder %s30, 0
      %p203 = por %p201, %p202
      %s204 = ssub.s32 %s24, %s31
      %p205 = scmp.eq.s32.totalorder %s204, 0
      %s207 = sadd.s32 %s206, 1
      %s208 = scalar_select %p205, %s206, %s207
      %p211 = pneg %p205
      %p212 = scmp.eq.s32.totalorder %s24, 3
      %p213 = por %p211, %p212
      %p214 = scmp.ne.s32.totalorder %s206, %s209
      %p215 = scmp.eq.s32.totalorder %s24, 0
      %p216 = por %p214, %p215
      %p217 = scmp.ne.s32.totalorder %s206, %s209
      %p218 = scmp.eq.s32.totalorder %s29, 3
      %p219 = por %p217, %p218
      %p220 = scmp.ne.s32.totalorder %s209, %s210
      %p221 = scmp.eq.s32.totalorder %s29, 0
      %p222 = por %p220, %p221
      %p223 = scmp.ne.s32.totalorder %s209, %s210
      %p224 = scmp.eq.s32.totalorder %s30, 3
      %p225 = por %p223, %p224
      %p227 = scmp.ne.s32.totalorder %s210, %s226
      %p228 = scmp.eq.s32.totalorder %s30, 0
      %p229 = por %p227, %p228
      %s230 = ssub.s32 %s24, %s31
      %p231 = scmp.eq.s32.totalorder %s230, 0
      %s233 = sadd.s32 %s232, 1
      %s234 = scalar_select %p231, %s232, %s233
      %p237 = pneg %p231
      %p238 = scmp.eq.s32.totalorder %s24, 3
      %p239 = por %p237, %p238
      %p240 = scmp.ne.s32.totalorder %s232, %s235
      %p241 = scmp.eq.s32.totalorder %s24, 0
      %p242 = por %p240, %p241
      %p243 = scmp.ne.s32.totalorder %s232, %s235
      %p244 = scmp.eq.s32.totalorder %s29, 3
      %p245 = por %p243, %p244
      %p246 = scmp.ne.s32.totalorder %s235, %s236
      %p247 = scmp.eq.s32.totalorder %s29, 0
      %p248 = por %p246, %p247
      %p249 = scmp.ne.s32.totalorder %s235, %s236
      %p250 = scmp.eq.s32.totalorder %s30, 3
      %p251 = por %p249, %p250
      %p253 = scmp.ne.s32.totalorder %s236, %s252
      %p254 = scmp.eq.s32.totalorder %s30, 0
      %p255 = por %p253, %p254
      %s256 = ssub.s32 %s24, %s31
      %p257 = scmp.eq.s32.totalorder %s256, 0
      %s259 = sadd.s32 %s258, 1
      %s260 = scalar_select %p257, %s258, %s259
      %p263 = pneg %p257
      %p264 = scmp.eq.s32.totalorder %s24, 3
      %p265 = por %p263, %p264
      %p266 = scmp.ne.s32.totalorder %s258, %s261
      %p267 = scmp.eq.s32.totalorder %s24, 0
      %p268 = por %p266, %p267
      %p269 = scmp.ne.s32.totalorder %s258, %s261
      %p270 = scmp.eq.s32.totalorder %s29, 3
      %p271 = por %p269, %p270
      %p272 = scmp.ne.s32.totalorder %s261, %s262
      %p273 = scmp.eq.s32.totalorder %s29, 0
      %p274 = por %p272, %p273
      %p275 = scmp.ne.s32.totalorder %s261, %s262
      %p276 = scmp.eq.s32.totalorder %s30, 3
      %p277 = por %p275, %p276
      %p279 = scmp.ne.s32.totalorder %s262, %s278
      %p280 = scmp.eq.s32.totalorder %s30, 0
      %p281 = por %p279, %p280
      %s282 = ssub.s32 %s24, %s31
      %p283 = scmp.eq.s32.totalorder %s282, 0
      %s285 = sadd.s32 %s284, 1
      %s286 = scalar_select %p283, %s284, %s285
      %p289 = pneg %p283
      %p290 = scmp.eq.s32.totalorder %s24, 3
      %p291 = por %p289, %p290
      %p292 = scmp.ne.s32.totalorder %s284, %s287
      %p293 = scmp.eq.s32.totalorder %s24, 0
      %p294 = por %p292, %p293
      %p295 = scmp.ne.s32.totalorder %s284, %s287
      %p296 = scmp.eq.s32.totalorder %s29, 3
      %p297 = por %p295, %p296
      %p298 = scmp.ne.s32.totalorder %s287, %s288
      %p299 = scmp.eq.s32.totalorder %s29, 0
      %p300 = por %p298, %p299
      %p301 = scmp.ne.s32.totalorder %s287, %s288
      %p302 = scmp.eq.s32.totalorder %s30, 3
      %p303 = por %p301, %p302
      %p305 = scmp.ne.s32.totalorder %s288, %s304
      %p306 = scmp.eq.s32.totalorder %s30, 0
      %p307 = por %p305, %p306
      %s309 = sadd.s32 %s308, 1
      %p312 = scmp.eq.s32.totalorder %s24, 3
      %p313 = scmp.ne.s32.totalorder %s308, %s310
      %p314 = scmp.eq.s32.totalorder %s24, 0
      %p315 = por %p313, %p314
      %p316 = scmp.ne.s32.totalorder %s308, %s310
      %p317 = scmp.eq.s32.totalorder %s29, 3
      %p318 = por %p316, %p317
      %p319 = scmp.ne.s32.totalorder %s310, %s311
      %p320 = scmp.eq.s32.totalorder %s29, 0
      %p321 = por %p319, %p320
      %p322 = scmp.ne.s32.totalorder %s310, %s311
      %p323 = scmp.eq.s32.totalorder %s30, 3
      %p324 = por %p322, %p323
      %p326 = scmp.ne.s32.totalorder %s311, %s325
      %p327 = scmp.eq.s32.totalorder %s30, 0
      %p328 = por %p326, %p327
      %s330 = sadd.s32 %s329, 1
      %p333 = scmp.eq.s32.totalorder %s24, 3
      %p334 = scmp.ne.s32.totalorder %s329, %s331
      %p335 = scmp.eq.s32.totalorder %s24, 0
      %p336 = por %p334, %p335
      %p337 = scmp.ne.s32.totalorder %s329, %s331
      %p338 = scmp.eq.s32.totalorder %s29, 3
      %p339 = por %p337, %p338
      %p340 = scmp.ne.s32.totalorder %s331, %s332
      %p341 = scmp.eq.s32.totalorder %s29, 0
      %p342 = por %p340, %p341
      %p343 = scmp.ne.s32.totalorder %s331, %s332
      %p344 = scmp.eq.s32.totalorder %s30, 3
      %p345 = por %p343, %p344
      %p347 = scmp.ne.s32.totalorder %s332, %s346
      %p348 = scmp.eq.s32.totalorder %s30, 0
      %p349 = por %p347, %p348
      %s351 = sadd.s32 %s350, 1
      %p354 = scmp.eq.s32.totalorder %s24, 3
      %p355 = scmp.ne.s32.totalorder %s350, %s352
      %p356 = scmp.eq.s32.totalorder %s24, 0
      %p357 = por %p355, %p356
      %p358 = scmp.ne.s32.totalorder %s350, %s352
      %p359 = scmp.eq.s32.totalorder %s29, 3
      %p360 = por %p358, %p359
      %p361 = scmp.ne.s32.totalorder %s352, %s353
      %p362 = scmp.eq.s32.totalorder %s29, 0
      %p363 = por %p361, %p362
      %p364 = scmp.ne.s32.totalorder %s352, %s353
      %p365 = scmp.eq.s32.totalorder %s30, 3
      %p366 = por %p364, %p365
      %p368 = scmp.ne.s32.totalorder %s353, %s367
      %p369 = scmp.eq.s32.totalorder %s30, 0
      %p370 = por %p368, %p369
      %s372 = sadd.s32 %s371, 1
      %p375 = scmp.eq.s32.totalorder %s24, 3
      %p376 = scmp.ne.s32.totalorder %s371, %s373
      %p377 = scmp.eq.s32.totalorder %s24, 0
      %p378 = por %p376, %p377
      %p379 = scmp.ne.s32.totalorder %s371, %s373
      %p380 = scmp.eq.s32.totalorder %s29, 3
      %p381 = por %p379, %p380
      %p382 = scmp.ne.s32.totalorder %s373, %s374
      %p383 = scmp.eq.s32.totalorder %s29, 0
      %p384 = por %p382, %p383
      %p385 = scmp.ne.s32.totalorder %s373, %s374
      %p386 = scmp.eq.s32.totalorder %s30, 3
      %p387 = por %p385, %p386
      %p389 = scmp.ne.s32.totalorder %s374, %s388
      %p390 = scmp.eq.s32.totalorder %s30, 0
      %p391 = por %p389, %p390
      %p392 = scmp.le.s32.totalorder 1, %s24
      %p393 = scmp.lt.s32.totalorder %s24, 5
      %p394 = pnand %p392, %p393
      %p395 = pneg %p394
      // Predicated region
      $region9: #{tpu_custom_call.1} parent=5 // pred_check
        _
      $region10: #{tpu_custom_call.1} parent=5 // pred_check_branch
        %397 = sbr.rel (%p394) target = $region12
      $region11: #{tpu_custom_call.1} parent=5 // pred_region
        %s398 = ssub.s32 %s24, 1
        // Predicated region
        $region13: #{tpu_custom_call.1} parent=11 // pred_check
          %p399 = pneg %p45
        $region14: #{tpu_custom_call.1} parent=11 // pred_check_branch
          %401 = sbr.rel (%p399) target = $region16
        $region15: #{tpu_custom_call.1} parent=11 // pred_region
          %s403 = ssub.s32 32, 32
          %404 = vsyncadd [#allocation4], %s403
          %s406 = sshll.u32 [#allocation3], 4
          %s407 = int_to_ptr.vmem [resolvable:$true] %s406
          %409 = dma.hbm_to_vmem [thread:$0]  %s0, 32, %s407, [#allocation4]
        $region16: #{tpu_custom_call.1} parent=11 // pred_fallthru
          _
        // Predicated region
        $region17: #{tpu_custom_call.1} parent=11 // pred_check
          %p410 = pneg %p66
        $region18: #{tpu_custom_call.1} parent=11 // pred_check_branch
          %412 = sbr.rel (%p410) target = $region20
        $region19: #{tpu_custom_call.1} parent=11 // pred_region
          %s414 = ssub.s32 1024, 1024
          %415 = vsyncadd [#allocation7], %s414
          %s416 = sshll.u32 [#allocation6], 4
          %s417 = int_to_ptr.vmem [resolvable:$true] %s416
          %422 = dma.hbm_to_vmem [thread:$0]  %s1, 1024, %s417, [#allocation7], 256, 256, 16
        $region20: #{tpu_custom_call.1} parent=11 // pred_fallthru
          _
        // Predicated region
        $region21: #{tpu_custom_call.1} parent=11 // pred_check
          %p423 = pneg %p321
        $region22: #{tpu_custom_call.1} parent=11 // pred_check_branch
          %425 = sbr.rel (%p423) target = $region24
        $region23: #{tpu_custom_call.1} parent=11 // pred_region
          %s427 = ssub.s32 64, 64
          %428 = vsyncadd [#allocation7], %s427
          %s430 = sshll.u32 [#allocation17], 4
          %s431 = int_to_ptr.vmem [resolvable:$true] %s430
          %433 = dma.hbm_to_vmem [thread:$0]  %s11, 64, %s431, [#allocation7]
        $region24: #{tpu_custom_call.1} parent=11 // pred_fallthru
          _
        // Predicated region
        $region25: #{tpu_custom_call.1} parent=11 // pred_check
          %p434 = pneg %p342
        $region26: #{tpu_custom_call.1} parent=11 // pred_check_branch
          %436 = sbr.rel (%p434) target = $region28
        $region27: #{tpu_custom_call.1} parent=11 // pred_region
          %s438 = ssub.s32 2048, 2048
          %439 = vsyncadd [#allocation19], %s438
          %s440 = sshll.u32 [#allocation18], 4
          %s441 = int_to_ptr.vmem [resolvable:$true] %s440
          %446 = dma.hbm_to_vmem [thread:$0]  %s12, 2048, %s441, [#allocation19], 64, 64, 4
        $region28: #{tpu_custom_call.1} parent=11 // pred_fallthru
          _
        // Predicated region
        $region29: #{tpu_custom_call.1} parent=11 // pred_check
          %p447 = pneg %p363
        $region30: #{tpu_custom_call.1} parent=11 // pred_check_branch
          %449 = sbr.rel (%p447) target = $region32
        $region31: #{tpu_custom_call.1} parent=11 // pred_region
          %s451 = ssub.s32 16, 16
          %452 = vsyncadd [#allocation19], %s451
          %s454 = sshll.u32 [#allocation20], 4
          %s455 = int_to_ptr.vmem [resolvable:$true] %s454
          %457 = dma.hbm_to_vmem [thread:$0]  %s13, 16, %s455, [#allocation19]
        $region32: #{tpu_custom_call.1} parent=11 // pred_fallthru
          _
      $region12: #{tpu_custom_call.1} parent=5 // pred_fallthru
        _
      %p458 = scmp.lt.s32.totalorder %s24, 4
      // Predicated region
      $region33: #{tpu_custom_call.1} parent=5 // pred_check
        %p459 = pneg %p458
      $region34: #{tpu_custom_call.1} parent=5 // pred_check_branch
        %461 = sbr.rel (%p459) target = $region36
      $region35: #{tpu_custom_call.1} parent=5 // pred_region
        // Predicated region
        $region37: #{tpu_custom_call.1} parent=35 // pred_check
          %p462 = pneg %p86
        $region38: #{tpu_custom_call.1} parent=35 // pred_check_branch
          %464 = sbr.rel (%p462) target = $region40
        $region39: #{tpu_custom_call.1} parent=35 // pred_region
          %s465 = sand.u32 %s24, 1
          %s466 = scalar_lea.sflag [#allocation4], %s465
          %s467 = sand.u32 %s76, 1
          %s468 = smul.addr %s467, 8
          %s469 = scalar_lea.vmem [#allocation8], %s468
          %s471 = ssub.s32 128, 128
          %472 = vsyncadd %s466, %s471
          %s473 = smul.addr %s24, 2
          %s474 = smul.addr %s473, 64
          %s475 = scalar_lea.hbm %s2, %s474
          %s477 = sshll.u32 %s469, 4
          %s478 = int_to_ptr.vmem [resolvable:$true] %s477
          %480 = dma.hbm_to_vmem [thread:$0]  %s475, 128, %s478, %s466
        $region40: #{tpu_custom_call.1} parent=35 // pred_fallthru
          _
        // Predicated region
        $region41: #{tpu_custom_call.1} parent=35 // pred_check
          %p481 = pneg %p112
        $region42: #{tpu_custom_call.1} parent=35 // pred_check_branch
          %483 = sbr.rel (%p481) target = $region44
        $region43: #{tpu_custom_call.1} parent=35 // pred_region
          %s484 = sand.u32 %s24, 1
          %s485 = scalar_lea.sflag [#allocation4], %s484
          %s486 = sand.u32 %s102, 1
          %s487 = smul.addr %s486, 768
          %s488 = scalar_lea.vmem [#allocation9], %s487
          %s490 = ssub.s32 12288, 12288
          %491 = vsyncadd %s485, %s490
          %s492 = smul.addr %s24, 192
          %s493 = smul.addr %s492, 64
          %s494 = scalar_lea.hbm %s3, %s493
          %s495 = sshll.u32 %s488, 4
          %s496 = int_to_ptr.vmem [resolvable:$true] %s495
          %501 = dma.hbm_to_vmem [thread:$0]  %s494, 12288, %s496, %s485, 384, 384, 24
        $region44: #{tpu_custom_call.1} parent=35 // pred_fallthru
          _
        // Predicated region
        $region45: #{tpu_custom_call.1} parent=35 // pred_check
          %p502 = pneg %p138
        $region46: #{tpu_custom_call.1} parent=35 // pred_check_branch
          %504 = sbr.rel (%p502) target = $region48
        $region47: #{tpu_custom_call.1} parent=35 // pred_region
          %s505 = sand.u32 %s24, 1
          %s506 = scalar_lea.sflag [#allocation4], %s505
          %s507 = sand.u32 %s128, 1
          %s508 = smul.addr %s507, 6
          %s509 = scalar_lea.vmem [#allocation10], %s508
          %s511 = ssub.s32 96, 96
          %512 = vsyncadd %s506, %s511
          %s513 = smul.addr %s24, 6
          %s514 = smul.addr %s513, 16
          %s515 = scalar_lea.hbm %s4, %s514
          %s517 = sshll.u32 %s509, 4
          %s518 = int_to_ptr.vmem [resolvable:$true] %s517
          %520 = dma.hbm_to_vmem [thread:$0]  %s515, 96, %s518, %s506
        $region48: #{tpu_custom_call.1} parent=35 // pred_fallthru
          _
        // Predicated region
        $region49: #{tpu_custom_call.1} parent=35 // pred_check
          %p521 = pneg %p164
        $region50: #{tpu_custom_call.1} parent=35 // pred_check_branch
          %523 = sbr.rel (%p521) target = $region52
        $region51: #{tpu_custom_call.1} parent=35 // pred_region
          %s524 = sand.u32 %s24, 1
          %s525 = scalar_lea.sflag [#allocation4], %s524
          %s526 = sand.u32 %s154, 1
          %s527 = smul.addr %s526, 256
          %s528 = scalar_lea.vmem [#allocation11], %s527
          %s530 = ssub.s32 4096, 4096
          %531 = vsyncadd %s525, %s530
          %s532 = smul.addr %s24, 64
          %s533 = smul.addr %s532, 64
          %s534 = scalar_lea.hbm %s5, %s533
          %s535 = sshll.u32 %s528, 4
          %s536 = int_to_ptr.vmem [resolvable:$true] %s535
          %541 = dma.hbm_to_vmem [thread:$0]  %s534, 4096, %s536, %s525, 128, 128, 8
        $region52: #{tpu_custom_call.1} parent=35 // pred_fallthru
          _
        // Predicated region
        $region53: #{tpu_custom_call.1} parent=35 // pred_check
          %p542 = pneg %p190
        $region54: #{tpu_custom_call.1} parent=35 // pred_check_branch
          %544 = sbr.rel (%p542) target = $region56
        $region55: #{tpu_custom_call.1} parent=35 // pred_region
          %s545 = sand.u32 %s24, 1
          %s546 = scalar_lea.sflag [#allocation4], %s545
          %s547 = sand.u32 %s180, 1
          %s548 = smul.addr %s547, 2
          %s549 = scalar_lea.vmem [#allocation12], %s548
          %s551 = ssub.s32 32, 32
          %552 = vsyncadd %s546, %s551
          %s553 = smul.addr %s24, 2
          %s554 = smul.addr %s553, 16
          %s555 = scalar_lea.hbm %s6, %s554
          %s557 = sshll.u32 %s549, 4
          %s558 = int_to_ptr.vmem [resolvable:$true] %s557
          %560 = dma.hbm_to_vmem [thread:$0]  %s555, 32, %s558, %s546
        $region56: #{tpu_custom_call.1} parent=35 // pred_fallthru
          _
        // Predicated region
        $region57: #{tpu_custom_call.1} parent=35 // pred_check
          %p561 = pneg %p216
        $region58: #{tpu_custom_call.1} parent=35 // pred_check_branch
          %563 = sbr.rel (%p561) target = $region60
        $region59: #{tpu_custom_call.1} parent=35 // pred_region
          %s564 = sand.u32 %s24, 1
          %s565 = scalar_lea.sflag [#allocation4], %s564
          %s566 = sand.u32 %s206, 1
          %s567 = smul.addr %s566, 1024
          %s568 = scalar_lea.vmem [#allocation13], %s567
          %s570 = ssub.s32 16384, 16384
          %571 = vsyncadd %s565, %s570
          %s572 = smul.addr %s24, 256
          %s573 = smul.addr %s572, 64
          %s574 = scalar_lea.hbm %s7, %s573
          %s575 = sshll.u32 %s568, 4
          %s576 = int_to_ptr.vmem [resolvable:$true] %s575
          %581 = dma.hbm_to_vmem [thread:$0]  %s574, 16384, %s576, %s565, 512, 512, 32
        $region60: #{tpu_custom_call.1} parent=35 // pred_fallthru
          _
        // Predicated region
        $region61: #{tpu_custom_call.1} parent=35 // pred_check
          %p582 = pneg %p242
        $region62: #{tpu_custom_call.1} parent=35 // pred_check_branch
          %584 = sbr.rel (%p582) target = $region64
        $region63: #{tpu_custom_call.1} parent=35 // pred_region
          %s585 = sand.u32 %s24, 1
          %s586 = scalar_lea.sflag [#allocation4], %s585
          %s587 = sand.u32 %s232, 1
          %s588 = smul.addr %s587, 8
          %s589 = scalar_lea.vmem [#allocation14], %s588
          %s591 = ssub.s32 128, 128
          %592 = vsyncadd %s586, %s591
          %s593 = smul.addr %s24, 8
          %s594 = smul.addr %s593, 16
          %s595 = scalar_lea.hbm %s8, %s594
          %s597 = sshll.u32 %s589, 4
          %s598 = int_to_ptr.vmem [resolvable:$true] %s597
          %600 = dma.hbm_to_vmem [thread:$0]  %s595, 128, %s598, %s586
        $region64: #{tpu_custom_call.1} parent=35 // pred_fallthru
          _
        // Predicated region
        $region65: #{tpu_custom_call.1} parent=35 // pred_check
          %p601 = pneg %p268
        $region66: #{tpu_custom_call.1} parent=35 // pred_check_branch
          %603 = sbr.rel (%p601) target = $region68
        $region67: #{tpu_custom_call.1} parent=35 // pred_region
          %s604 = sand.u32 %s24, 1
          %s605 = scalar_lea.sflag [#allocation4], %s604
          %s606 = sand.u32 %s258, 1
          %s607 = smul.addr %s606, 1024
          %s608 = scalar_lea.vmem [#allocation15], %s607
          %s610 = ssub.s32 16384, 16384
          %611 = vsyncadd %s605, %s610
          %s612 = smul.addr %s24, 256
          %s613 = smul.addr %s612, 64
          %s614 = scalar_lea.hbm %s9, %s613
          %s615 = sshll.u32 %s608, 4
          %s616 = int_to_ptr.vmem [resolvable:$true] %s615
          %621 = dma.hbm_to_vmem [thread:$0]  %s614, 16384, %s616, %s605, 128, 128, 8
        $region68: #{tpu_custom_call.1} parent=35 // pred_fallthru
          _
        // Predicated region
        $region69: #{tpu_custom_call.1} parent=35 // pred_check
          %p622 = pneg %p294
        $region70: #{tpu_custom_call.1} parent=35 // pred_check_branch
          %624 = sbr.rel (%p622) target = $region72
        $region71: #{tpu_custom_call.1} parent=35 // pred_region
          %s625 = sand.u32 %s24, 1
          %s626 = scalar_lea.sflag [#allocation4], %s625
          %s627 = sand.u32 %s284, 1
          %s628 = smul.addr %s627, 2
          %s629 = scalar_lea.vmem [#allocation16], %s628
          %s631 = ssub.s32 32, 32
          %632 = vsyncadd %s626, %s631
          %s633 = smul.addr %s24, 2
          %s634 = smul.addr %s633, 16
          %s635 = scalar_lea.hbm %s10, %s634
          %s637 = sshll.u32 %s629, 4
          %s638 = int_to_ptr.vmem [resolvable:$true] %s637
          %640 = dma.hbm_to_vmem [thread:$0]  %s635, 32, %s638, %s626
        $region72: #{tpu_custom_call.1} parent=35 // pred_fallthru
          _
      $region36: #{tpu_custom_call.1} parent=5 // pred_fallthru
        _
      %p641 = scmp.le.s32.totalorder 1, %s24
      %p642 = scmp.lt.s32.totalorder %s24, 5
      %p643 = pnand %p641, %p642
      %p644 = pneg %p643
      // Predicated region
      $region73: #{tpu_custom_call.1} parent=5 // pred_check
        _
      $region74: #{tpu_custom_call.1} parent=5 // pred_check_branch
        %646 = sbr.rel (%p643) target = $region76
      $region75: #{tpu_custom_call.1} parent=5 // pred_region
        %s647 = ssub.s32 %s24, 1
        // Predicated region
        $region77: #{tpu_custom_call.1} parent=75 // pred_check
          %p648 = pneg %p45
        $region78: #{tpu_custom_call.1} parent=75 // pred_check_branch
          %650 = sbr.rel (%p648) target = $region80
        $region79: #{tpu_custom_call.1} parent=75 // pred_region
          %651 = dma.done [#allocation4], 32
        $region80: #{tpu_custom_call.1} parent=75 // pred_fallthru
          _
        // Predicated region
        $region81: #{tpu_custom_call.1} parent=75 // pred_check
          %p652 = pneg %p66
        $region82: #{tpu_custom_call.1} parent=75 // pred_check_branch
          %654 = sbr.rel (%p652) target = $region84
        $region83: #{tpu_custom_call.1} parent=75 // pred_region
          %655 = dma.done [#allocation7], 1024
        $region84: #{tpu_custom_call.1} parent=75 // pred_fallthru
          _
        %s656 = sand.u32 %s29, 1
        %s657 = scalar_lea.sflag [#allocation4], %s656
        %s658 = sand.u32 %s79, 1
        %s659 = smul.addr %s658, 8
        %s660 = scalar_lea.vmem [#allocation8], %s659
        // Predicated region
        $region85: #{tpu_custom_call.1} parent=75 // pred_check
          %p661 = pneg %p92
        $region86: #{tpu_custom_call.1} parent=75 // pred_check_branch
          %663 = sbr.rel (%p661) target = $region88
        $region87: #{tpu_custom_call.1} parent=75 // pred_region
          %664 = dma.done %s657, 128
        $region88: #{tpu_custom_call.1} parent=75 // pred_fallthru
          _
        %s665 = sand.u32 %s29, 1
        %s666 = scalar_lea.sflag [#allocation4], %s665
        %s667 = sand.u32 %s105, 1
        %s668 = smul.addr %s667, 768
        %s669 = scalar_lea.vmem [#allocation9], %s668
        // Predicated region
        $region89: #{tpu_custom_call.1} parent=75 // pred_check
          %p670 = pneg %p118
        $region90: #{tpu_custom_call.1} parent=75 // pred_check_branch
          %672 = sbr.rel (%p670) target = $region92
        $region91: #{tpu_custom_call.1} parent=75 // pred_region
          %673 = dma.done %s666, 12288
        $region92: #{tpu_custom_call.1} parent=75 // pred_fallthru
          _
        %s674 = sand.u32 %s29, 1
        %s675 = scalar_lea.sflag [#allocation4], %s674
        %s676 = sand.u32 %s131, 1
        %s677 = smul.addr %s676, 6
        %s678 = scalar_lea.vmem [#allocation10], %s677
        // Predicated region
        $region93: #{tpu_custom_call.1} parent=75 // pred_check
          %p679 = pneg %p144
        $region94: #{tpu_custom_call.1} parent=75 // pred_check_branch
          %681 = sbr.rel (%p679) target = $region96
        $region95: #{tpu_custom_call.1} parent=75 // pred_region
          %682 = dma.done %s675, 96
        $region96: #{tpu_custom_call.1} parent=75 // pred_fallthru
          _
        %s683 = sand.u32 %s29, 1
        %s684 = scalar_lea.sflag [#allocation4], %s683
        %s685 = sand.u32 %s157, 1
        %s686 = smul.addr %s685, 256
        %s687 = scalar_lea.vmem [#allocation11], %s686
        // Predicated region
        $region97: #{tpu_custom_call.1} parent=75 // pred_check
          %p688 = pneg %p170
        $region98: #{tpu_custom_call.1} parent=75 // pred_check_branch
          %690 = sbr.rel (%p688) target = $region100
        $region99: #{tpu_custom_call.1} parent=75 // pred_region
          %691 = dma.done %s684, 4096
        $region100: #{tpu_custom_call.1} parent=75 // pred_fallthru
          _
        %s692 = sand.u32 %s29, 1
        %s693 = scalar_lea.sflag [#allocation4], %s692
        %s694 = sand.u32 %s183, 1
        %s695 = smul.addr %s694, 2
        %s696 = scalar_lea.vmem [#allocation12], %s695
        // Predicated region
        $region101: #{tpu_custom_call.1} parent=75 // pred_check
          %p697 = pneg %p196
        $region102: #{tpu_custom_call.1} parent=75 // pred_check_branch
          %699 = sbr.rel (%p697) target = $region104
        $region103: #{tpu_custom_call.1} parent=75 // pred_region
          %700 = dma.done %s693, 32
        $region104: #{tpu_custom_call.1} parent=75 // pred_fallthru
          _
        %s701 = sand.u32 %s29, 1
        %s702 = scalar_lea.sflag [#allocation4], %s701
        %s703 = sand.u32 %s209, 1
        %s704 = smul.addr %s703, 1024
        %s705 = scalar_lea.vmem [#allocation13], %s704
        // Predicated region
        $region105: #{tpu_custom_call.1} parent=75 // pred_check
          %p706 = pneg %p222
        $region106: #{tpu_custom_call.1} parent=75 // pred_check_branch
          %708 = sbr.rel (%p706) target = $region108
        $region107: #{tpu_custom_call.1} parent=75 // pred_region
          %709 = dma.done %s702, 16384
        $region108: #{tpu_custom_call.1} parent=75 // pred_fallthru
          _
        %s710 = sand.u32 %s29, 1
        %s711 = scalar_lea.sflag [#allocation4], %s710
        %s712 = sand.u32 %s235, 1
        %s713 = smul.addr %s712, 8
        %s714 = scalar_lea.vmem [#allocation14], %s713
        // Predicated region
        $region109: #{tpu_custom_call.1} parent=75 // pred_check
          %p715 = pneg %p248
        $region110: #{tpu_custom_call.1} parent=75 // pred_check_branch
          %717 = sbr.rel (%p715) target = $region112
        $region111: #{tpu_custom_call.1} parent=75 // pred_region
          %718 = dma.done %s711, 128
        $region112: #{tpu_custom_call.1} parent=75 // pred_fallthru
          _
        %s719 = sand.u32 %s29, 1
        %s720 = scalar_lea.sflag [#allocation4], %s719
        %s721 = sand.u32 %s261, 1
        %s722 = smul.addr %s721, 1024
        %s723 = scalar_lea.vmem [#allocation15], %s722
        // Predicated region
        $region113: #{tpu_custom_call.1} parent=75 // pred_check
          %p724 = pneg %p274
        $region114: #{tpu_custom_call.1} parent=75 // pred_check_branch
          %726 = sbr.rel (%p724) target = $region116
        $region115: #{tpu_custom_call.1} parent=75 // pred_region
          %727 = dma.done %s720, 16384
        $region116: #{tpu_custom_call.1} parent=75 // pred_fallthru
          _
        %s728 = sand.u32 %s29, 1
        %s729 = scalar_lea.sflag [#allocation4], %s728
        %s730 = sand.u32 %s287, 1
        %s731 = smul.addr %s730, 2
        %s732 = scalar_lea.vmem [#allocation16], %s731
        // Predicated region
        $region117: #{tpu_custom_call.1} parent=75 // pred_check
          %p733 = pneg %p300
        $region118: #{tpu_custom_call.1} parent=75 // pred_check_branch
          %735 = sbr.rel (%p733) target = $region120
        $region119: #{tpu_custom_call.1} parent=75 // pred_region
          %736 = dma.done %s729, 32
        $region120: #{tpu_custom_call.1} parent=75 // pred_fallthru
          _
        // Predicated region
        $region121: #{tpu_custom_call.1} parent=75 // pred_check
          %p737 = pneg %p321
        $region122: #{tpu_custom_call.1} parent=75 // pred_check_branch
          %739 = sbr.rel (%p737) target = $region124
        $region123: #{tpu_custom_call.1} parent=75 // pred_region
          %740 = dma.done [#allocation7], 64
        $region124: #{tpu_custom_call.1} parent=75 // pred_fallthru
          _
        // Predicated region
        $region125: #{tpu_custom_call.1} parent=75 // pred_check
          %p741 = pneg %p342
        $region126: #{tpu_custom_call.1} parent=75 // pred_check_branch
          %743 = sbr.rel (%p741) target = $region128
        $region127: #{tpu_custom_call.1} parent=75 // pred_region
          %744 = dma.done [#allocation19], 2048
        $region128: #{tpu_custom_call.1} parent=75 // pred_fallthru
          _
        // Predicated region
        $region129: #{tpu_custom_call.1} parent=75 // pred_check
          %p745 = pneg %p363
        $region130: #{tpu_custom_call.1} parent=75 // pred_check_branch
          %747 = sbr.rel (%p745) target = $region132
        $region131: #{tpu_custom_call.1} parent=75 // pred_region
          %748 = dma.done [#allocation19], 16
        $region132: #{tpu_custom_call.1} parent=75 // pred_fallthru
          _
        %p749 = pneg %p45
        %p750 = pneg %p42
        %p751 = pneg %p66
        %p752 = pneg %p63
        %s753 = sand.u32 %s29, 1
        %s754 = scalar_lea.sflag [#allocation4], %s753
        %s755 = sand.u32 %s79, 1
        %s756 = smul.addr %s755, 8
        %s757 = scalar_lea.vmem [#allocation8], %s756
        %p758 = pneg %p92
        %p759 = pneg %p89
        %s760 = sand.u32 %s29, 1
        %s761 = scalar_lea.sflag [#allocation4], %s760
        %s762 = sand.u32 %s105, 1
        %s763 = smul.addr %s762, 768
        %s764 = scalar_lea.vmem [#allocation9], %s763
        %p765 = pneg %p118
        %p766 = pneg %p115
        %s767 = sand.u32 %s29, 1
        %s768 = scalar_lea.sflag [#allocation4], %s767
        %s769 = sand.u32 %s131, 1
        %s770 = smul.addr %s769, 6
        %s771 = scalar_lea.vmem [#allocation10], %s770
        %p772 = pneg %p144
        %p773 = pneg %p141
        %s774 = sand.u32 %s29, 1
        %s775 = scalar_lea.sflag [#allocation4], %s774
        %s776 = sand.u32 %s157, 1
        %s777 = smul.addr %s776, 256
        %s778 = scalar_lea.vmem [#allocation11], %s777
        %p779 = pneg %p170
        %p780 = pneg %p167
        %s781 = sand.u32 %s29, 1
        %s782 = scalar_lea.sflag [#allocation4], %s781
        %s783 = sand.u32 %s183, 1
        %s784 = smul.addr %s783, 2
        %s785 = scalar_lea.vmem [#allocation12], %s784
        %p786 = pneg %p196
        %p787 = pneg %p193
        %s788 = sand.u32 %s29, 1
        %s789 = scalar_lea.sflag [#allocation4], %s788
        %s790 = sand.u32 %s209, 1
        %s791 = smul.addr %s790, 1024
        %s792 = scalar_lea.vmem [#allocation13], %s791
        %p793 = pneg %p222
        %p794 = pneg %p219
        %s795 = sand.u32 %s29, 1
        %s796 = scalar_lea.sflag [#allocation4], %s795
        %s797 = sand.u32 %s235, 1
        %s798 = smul.addr %s797, 8
        %s799 = scalar_lea.vmem [#allocation14], %s798
        %p800 = pneg %p248
        %p801 = pneg %p245
        %s802 = sand.u32 %s29, 1
        %s803 = scalar_lea.sflag [#allocation4], %s802
        %s804 = sand.u32 %s261, 1
        %s805 = smul.addr %s804, 1024
        %s806 = scalar_lea.vmem [#allocation15], %s805
        %p807 = pneg %p274
        %p808 = pneg %p271
        %s809 = sand.u32 %s29, 1
        %s810 = scalar_lea.sflag [#allocation4], %s809
        %s811 = sand.u32 %s287, 1
        %s812 = smul.addr %s811, 2
        %s813 = scalar_lea.vmem [#allocation16], %s812
        %p814 = pneg %p300
        %p815 = pneg %p297
        %p816 = pneg %p321
        %p817 = pneg %p318
        %p818 = pneg %p342
        %p819 = pneg %p339
        %p820 = pneg %p363
        %p821 = pneg %p360
        %p822 = pneg %p384
        %p823 = pneg %p381
        %p825 = scmp.eq.s32.totalorder %s29, 0
        // Predicated region
        $region133: #{tpu_custom_call.1} parent=75 // pred_check
          %p826 = pneg %p825
        $region134: #{tpu_custom_call.1} parent=75 // pred_check_branch
          %828 = sbr.rel (%p826) target = $region136
        $region135: #{tpu_custom_call.1} parent=75 // pred_region
          %v829 = vld [vmem:[#allocation6] sm:$0xff]
          %v830 = vld [vmem:[#allocation6 + $0x8] sm:$0xff]
          %v831 = vld [vmem:[#allocation6 + $0x10] sm:$0xff]
          %v832 = vld [vmem:[#allocation6 + $0x18] sm:$0xff]
          %v833 = vld [vmem:[#allocation6 + $0x20] sm:$0xff]
          %v834 = vld [vmem:[#allocation6 + $0x28] sm:$0xff]
          %v835 = vld [vmem:[#allocation6 + $0x30] sm:$0xff]
          %v836 = vld [vmem:[#allocation6 + $0x38] sm:$0xff]
          %837 = vst [vmem:[#allocation2] sm:$0xff] %v829
          %838 = vst [vmem:[#allocation2 + $0x8] sm:$0xff] %v830
          %839 = vst [vmem:[#allocation2 + $0x10] sm:$0xff] %v831
          %840 = vst [vmem:[#allocation2 + $0x18] sm:$0xff] %v832
          %841 = vst [vmem:[#allocation2 + $0x20] sm:$0xff] %v833
          %842 = vst [vmem:[#allocation2 + $0x28] sm:$0xff] %v834
          %843 = vst [vmem:[#allocation2 + $0x30] sm:$0xff] %v835
          %844 = vst [vmem:[#allocation2 + $0x38] sm:$0xff] %v836
        $region136: #{tpu_custom_call.1} parent=75 // pred_fallthru
          _
        %v845 = vld [vmem:[%s660] sm:$0xff]
        %v846 = vld [vmem:[#allocation2] sm:$0xff]
        %v847 = vld [vmem:[#allocation2 + $0x8] sm:$0xff]
        %v848 = vld [vmem:[#allocation2 + $0x10] sm:$0xff]
        %v849 = vld [vmem:[#allocation2 + $0x18] sm:$0xff]
        %v850 = vld [vmem:[#allocation2 + $0x20] sm:$0xff]
        %v851 = vld [vmem:[#allocation2 + $0x28] sm:$0xff]
        %v852 = vld [vmem:[#allocation2 + $0x30] sm:$0xff]
        %v853 = vld [vmem:[#allocation2 + $0x38] sm:$0xff]
        %v854 = vld [vmem:[#allocation3] sm:$0x3]
        %v855 = vadd.f32 %v846, %v847
        %856 = vadd.xlane.f32.xlu0 %v855
        %v857 = vpop.xlane.xlu0 %856
        %v858 = vadd.f32 %v848, %v849
        %859 = vadd.xlane.f32.xlu0 %v858
        %v860 = vpop.xlane.xlu0 %859
        %v861 = vadd.f32 %v850, %v851
        %862 = vadd.xlane.f32.xlu0 %v861
        %v863 = vpop.xlane.xlu0 %862
        %v864 = vadd.f32 %v852, %v853
        %865 = vadd.xlane.f32.xlu0 %v864
        %v866 = vpop.xlane.xlu0 %865
        %v867 = vrcp.pop 256.0
        %v868 = vmul.f32 %v857, %v867
        %v869 = vmul.f32 %v860, %v867
        %v870 = vmul.f32 %v863, %v867
        %v871 = vmul.f32 %v866, %v867
        %v872 = vsub.f32 %v846, %v868
        %v873 = vsub.f32 %v847, %v868
        %v874 = vsub.f32 %v848, %v869
        %v875 = vsub.f32 %v849, %v869
        %v876 = vsub.f32 %v850, %v870
        %v877 = vsub.f32 %v851, %v870
        %v878 = vsub.f32 %v852, %v871
        %v879 = vsub.f32 %v853, %v871
        %v880 = vmul.f32 %v872, %v872
        %v881 = vmul.f32 %v873, %v873
        %v882 = vmul.f32 %v874, %v874
        %v883 = vmul.f32 %v875, %v875
        %v884 = vmul.f32 %v876, %v876
        %v885 = vmul.f32 %v877, %v877
        %v886 = vmul.f32 %v878, %v878
        %v887 = vmul.f32 %v879, %v879
        %v888 = vadd.f32 %v880, %v881
        %889 = vadd.xlane.f32.xlu0 %v888
        %v890 = vpop.xlane.xlu0 %889
        %v891 = vadd.f32 %v882, %v883
        %892 = vadd.xlane.f32.xlu0 %v891
        %v893 = vpop.xlane.xlu0 %892
        %v894 = vadd.f32 %v884, %v885
        %895 = vadd.xlane.f32.xlu0 %v894
        %v896 = vpop.xlane.xlu0 %895
        %v897 = vadd.f32 %v886, %v887
        %898 = vadd.xlane.f32.xlu0 %v897
        %v899 = vpop.xlane.xlu0 %898
        %v900 = vmul.f32 %v890, %v867
        %v901 = vmul.f32 %v893, %v867
        %v902 = vmul.f32 %v896, %v867
        %v903 = vmul.f32 %v899, %v867
        %v904 = vadd.f32 %v900, 1e-05
        %v905 = vadd.f32 %v901, 1e-05
        %v906 = vadd.f32 %v902, 1e-05
        %v907 = vadd.f32 %v903, 1e-05
        %v908 = vrsqrt.pop %v904
        %v909 = vrsqrt.pop %v905
        %v910 = vrsqrt.pop %v906
        %v911 = vrsqrt.pop %v907
        %v912 = vmul.f32 %v872, %v908
        %v913 = vmul.f32 %v873, %v908
        %v914 = vmul.f32 %v874, %v909
        %v915 = vmul.f32 %v875, %v909
        %v916 = vmul.f32 %v876, %v910
        %v917 = vmul.f32 %v877, %v910
        %v918 = vmul.f32 %v878, %v911
        %v919 = vmul.f32 %v879, %v911
        %v921 = vlaneseq
        %v922 = vshrl.u32 %v921, 7
        %v923 = vsub.s32 0, %v922
        %v924 = vrot.slane %v845, %v923
        %v925 = vlaneseq
        %v926 = vshrl.u32 %v925, 7
        %v927 = vsub.s32 4, %v926
        %v928 = vrot.slane %v845, %v927
        %v931 = vlaneseq
        %v932 = vshrl.u32 %v931, 7
        %v933 = vsub.s32 0, %v932
        %v934 = vrot.slane %v924, %v933
        %v935 = vlaneseq
        %v936 = vshrl.u32 %v935, 7
        %v937 = vsub.s32 0, %v936
        %v938 = vrot.slane %v928, %v937
        %v939 = vmul.f32 %v912, %v934
        %v940 = vmul.f32 %v913, %v938
        %v941 = vmul.f32 %v914, %v934
        %v942 = vmul.f32 %v915, %v938
        %v943 = vmul.f32 %v916, %v934
        %v944 = vmul.f32 %v917, %v938
        %v945 = vmul.f32 %v918, %v934
        %v946 = vmul.f32 %v919, %v938
        %v947 = vlaneseq
        %v948 = vshrl.u32 %v947, 7
        %v949 = vsub.s32 1, %v948
        %v950 = vrot.slane %v845, %v949
        %v951 = vlaneseq
        %v952 = vshrl.u32 %v951, 7
        %v953 = vsub.s32 5, %v952
        %v954 = vrot.slane %v845, %v953
        %v957 = vlaneseq
        %v958 = vshrl.u32 %v957, 7
        %v959 = vsub.s32 1, %v958
        %v960 = vrot.slane %v950, %v959
        %v961 = vlaneseq
        %v962 = vshrl.u32 %v961, 7
        %v963 = vsub.s32 1, %v962
        %v964 = vrot.slane %v954, %v963
        %v965 = vadd.f32 %v939, %v960
        %v966 = vadd.f32 %v940, %v964
        %v967 = vadd.f32 %v941, %v960
        %v968 = vadd.f32 %v942, %v964
        %v969 = vadd.f32 %v943, %v960
        %v970 = vadd.f32 %v944, %v964
        %v971 = vadd.f32 %v945, %v960
        %v972 = vadd.f32 %v946, %v964
        %v973 = vpack.c.bf16 %v967, %v965
        %v974 = vpack.c.bf16 %v968, %v966
        %v975 = vpack.c.bf16 %v971, %v969
        %v976 = vpack.c.bf16 %v972, %v970
        %v977 = vld [vmem:[%s669] sm:$0xff]
        %v978 = vld [vmem:[%s669 + $0x8] sm:$0xff]
        %v979 = vld [vmem:[%s669 + $0x10] sm:$0xff]
        %v980 = vld [vmem:[%s669 + $0x18] sm:$0xff]
        %v981 = vld [vmem:[%s669 + $0x20] sm:$0xff]
        %v982 = vld [vmem:[%s669 + $0x28] sm:$0xff]
        %v983 = vld [vmem:[%s669 + $0x30] sm:$0xff]
        %v984 = vld [vmem:[%s669 + $0x38] sm:$0xff]
        %v985 = vld [vmem:[%s669 + $0x40] sm:$0xff]
        %v986 = vld [vmem:[%s669 + $0x48] sm:$0xff]
        %v987 = vld [vmem:[%s669 + $0x50] sm:$0xff]
        %v988 = vld [vmem:[%s669 + $0x58] sm:$0xff]
        %v989 = vld [vmem:[%s669 + $0x60] sm:$0xff]
        %v990 = vld [vmem:[%s669 + $0x68] sm:$0xff]
        %v991 = vld [vmem:[%s669 + $0x70] sm:$0xff]
        %v992 = vld [vmem:[%s669 + $0x78] sm:$0xff]
        %v993 = vld [vmem:[%s669 + $0x80] sm:$0xff]
        %v994 = vld [vmem:[%s669 + $0x88] sm:$0xff]
        %v995 = vld [vmem:[%s669 + $0x90] sm:$0xff]
        %v996 = vld [vmem:[%s669 + $0x98] sm:$0xff]
        %v997 = vld [vmem:[%s669 + $0xa0] sm:$0xff]
        %v998 = vld [vmem:[%s669 + $0xa8] sm:$0xff]
        %v999 = vld [vmem:[%s669 + $0xb0] sm:$0xff]
        %v1000 = vld [vmem:[%s669 + $0xb8] sm:$0xff]
        %v1001 = vld [vmem:[%s669 + $0xc0] sm:$0xff]
        %v1002 = vld [vmem:[%s669 + $0xc8] sm:$0xff]
        %v1003 = vld [vmem:[%s669 + $0xd0] sm:$0xff]
        %v1004 = vld [vmem:[%s669 + $0xd8] sm:$0xff]
        %v1005 = vld [vmem:[%s669 + $0xe0] sm:$0xff]
        %v1006 = vld [vmem:[%s669 + $0xe8] sm:$0xff]
        %v1007 = vld [vmem:[%s669 + $0xf0] sm:$0xff]
        %v1008 = vld [vmem:[%s669 + $0xf8] sm:$0xff]
        %v1009 = vld [vmem:[%s669 + $0x100] sm:$0xff]
        %v1010 = vld [vmem:[%s669 + $0x108] sm:$0xff]
        %v1011 = vld [vmem:[%s669 + $0x110] sm:$0xff]
        %v1012 = vld [vmem:[%s669 + $0x118] sm:$0xff]
        %v1013 = vld [vmem:[%s669 + $0x120] sm:$0xff]
        %v1014 = vld [vmem:[%s669 + $0x128] sm:$0xff]
        %v1015 = vld [vmem:[%s669 + $0x130] sm:$0xff]
        %v1016 = vld [vmem:[%s669 + $0x138] sm:$0xff]
        %v1017 = vld [vmem:[%s669 + $0x140] sm:$0xff]
        %v1018 = vld [vmem:[%s669 + $0x148] sm:$0xff]
        %v1019 = vld [vmem:[%s669 + $0x150] sm:$0xff]
        %v1020 = vld [vmem:[%s669 + $0x158] sm:$0xff]
        %v1021 = vld [vmem:[%s669 + $0x160] sm:$0xff]
        %v1022 = vld [vmem:[%s669 + $0x168] sm:$0xff]
        %v1023 = vld [vmem:[%s669 + $0x170] sm:$0xff]
        %v1024 = vld [vmem:[%s669 + $0x178] sm:$0xff]
        %v1025 = vld [vmem:[%s669 + $0x180] sm:$0xff]
        %v1026 = vld [vmem:[%s669 + $0x188] sm:$0xff]
        %v1027 = vld [vmem:[%s669 + $0x190] sm:$0xff]
        %v1028 = vld [vmem:[%s669 + $0x198] sm:$0xff]
        %v1029 = vld [vmem:[%s669 + $0x1a0] sm:$0xff]
        %v1030 = vld [vmem:[%s669 + $0x1a8] sm:$0xff]
        %v1031 = vld [vmem:[%s669 + $0x1b0] sm:$0xff]
        %v1032 = vld [vmem:[%s669 + $0x1b8] sm:$0xff]
        %v1033 = vld [vmem:[%s669 + $0x1c0] sm:$0xff]
        %v1034 = vld [vmem:[%s669 + $0x1c8] sm:$0xff]
        %v1035 = vld [vmem:[%s669 + $0x1d0] sm:$0xff]
        %v1036 = vld [vmem:[%s669 + $0x1d8] sm:$0xff]
        %v1037 = vld [vmem:[%s669 + $0x1e0] sm:$0xff]
        %v1038 = vld [vmem:[%s669 + $0x1e8] sm:$0xff]
        %v1039 = vld [vmem:[%s669 + $0x1f0] sm:$0xff]
        %v1040 = vld [vmem:[%s669 + $0x1f8] sm:$0xff]
        %v1041 = vld [vmem:[%s669 + $0x200] sm:$0xff]
        %v1042 = vld [vmem:[%s669 + $0x208] sm:$0xff]
        %v1043 = vld [vmem:[%s669 + $0x210] sm:$0xff]
        %v1044 = vld [vmem:[%s669 + $0x218] sm:$0xff]
        %v1045 = vld [vmem:[%s669 + $0x220] sm:$0xff]
        %v1046 = vld [vmem:[%s669 + $0x228] sm:$0xff]
        %v1047 = vld [vmem:[%s669 + $0x230] sm:$0xff]
        %v1048 = vld [vmem:[%s669 + $0x238] sm:$0xff]
        %v1049 = vld [vmem:[%s669 + $0x240] sm:$0xff]
        %v1050 = vld [vmem:[%s669 + $0x248] sm:$0xff]
        %v1051 = vld [vmem:[%s669 + $0x250] sm:$0xff]
        %v1052 = vld [vmem:[%s669 + $0x258] sm:$0xff]
        %v1053 = vld [vmem:[%s669 + $0x260] sm:$0xff]
        %v1054 = vld [vmem:[%s669 + $0x268] sm:$0xff]
        %v1055 = vld [vmem:[%s669 + $0x270] sm:$0xff]
        %v1056 = vld [vmem:[%s669 + $0x278] sm:$0xff]
        %v1057 = vld [vmem:[%s669 + $0x280] sm:$0xff]
        %v1058 = vld [vmem:[%s669 + $0x288] sm:$0xff]
        %v1059 = vld [vmem:[%s669 + $0x290] sm:$0xff]
        %v1060 = vld [vmem:[%s669 + $0x298] sm:$0xff]
        %v1061 = vld [vmem:[%s669 + $0x2a0] sm:$0xff]
        %v1062 = vld [vmem:[%s669 + $0x2a8] sm:$0xff]
        %v1063 = vld [vmem:[%s669 + $0x2b0] sm:$0xff]
        %v1064 = vld [vmem:[%s669 + $0x2b8] sm:$0xff]
        %v1065 = vld [vmem:[%s669 + $0x2c0] sm:$0xff]
        %v1066 = vld [vmem:[%s669 + $0x2c8] sm:$0xff]
        %v1067 = vld [vmem:[%s669 + $0x2d0] sm:$0xff]
        %v1068 = vld [vmem:[%s669 + $0x2d8] sm:$0xff]
        %v1069 = vld [vmem:[%s669 + $0x2e0] sm:$0xff]
        %v1070 = vld [vmem:[%s669 + $0x2e8] sm:$0xff]
        %v1071 = vld [vmem:[%s669 + $0x2f0] sm:$0xff]
        %v1072 = vld [vmem:[%s669 + $0x2f8] sm:$0xff]
        %v1073 = vld [vmem:[%s678] sm:$0x3f]
        %v1075 = vlaneseq
        %v1076 = vshrl.u32 %v1075, 7
        %v1077 = vsub.s32 0, %v1076
        %v1078 = vrot.slane %v1073, %v1077
        %v1079 = vlaneseq
        %v1080 = vshrl.u32 %v1079, 7
        %v1081 = vsub.s32 1, %v1080
        %v1082 = vrot.slane %v1073, %v1081
        %v1083 = vlaneseq
        %v1084 = vshrl.u32 %v1083, 7
        %v1085 = vsub.s32 2, %v1084
        %v1086 = vrot.slane %v1073, %v1085
        %v1087 = vlaneseq
        %v1088 = vshrl.u32 %v1087, 7
        %v1089 = vsub.s32 3, %v1088
        %v1090 = vrot.slane %v1073, %v1089
        %v1091 = vlaneseq
        %v1092 = vshrl.u32 %v1091, 7
        %v1093 = vsub.s32 4, %v1092
        %v1094 = vrot.slane %v1073, %v1093
        %v1095 = vlaneseq
        %v1096 = vshrl.u32 %v1095, 7
        %v1097 = vsub.s32 5, %v1096
        %v1098 = vrot.slane %v1073, %v1097
        %v1201 = vunpack.c.l.b16 %v977
        %v1202 = vunpack.c.h.b16 %v977
        %v1203 = vunpack.c.l.b16 %v978
        %v1204 = vunpack.c.h.b16 %v978
        %v1205 = vunpack.c.l.b16 %v979
        %v1206 = vunpack.c.h.b16 %v979
        %v1207 = vunpack.c.l.b16 %v980
        %v1208 = vunpack.c.h.b16 %v980
        %v1209 = vunpack.c.l.b16 %v981
        %v1210 = vunpack.c.h.b16 %v981
        %v1211 = vunpack.c.l.b16 %v982
        %v1212 = vunpack.c.h.b16 %v982
        %v1213 = vunpack.c.l.b16 %v983
        %v1214 = vunpack.c.h.b16 %v983
        %v1215 = vunpack.c.l.b16 %v984
        %v1216 = vunpack.c.h.b16 %v984
        %v1217 = vunpack.c.l.b16 %v985
        %v1218 = vunpack.c.h.b16 %v985
        %v1219 = vunpack.c.l.b16 %v986
        %v1220 = vunpack.c.h.b16 %v986
        %v1221 = vunpack.c.l.b16 %v987
        %v1222 = vunpack.c.h.b16 %v987
        %v1223 = vunpack.c.l.b16 %v988
        %v1224 = vunpack.c.h.b16 %v988
        %v1225 = vunpack.c.l.b16 %v989
        %v1226 = vunpack.c.h.b16 %v989
        %v1227 = vunpack.c.l.b16 %v990
        %v1228 = vunpack.c.h.b16 %v990
        %v1229 = vunpack.c.l.b16 %v991
        %v1230 = vunpack.c.h.b16 %v991
        %v1231 = vunpack.c.l.b16 %v992
        %v1232 = vunpack.c.h.b16 %v992
        %v1233 = vunpack.c.l.b16 %v993
        %v1234 = vunpack.c.h.b16 %v993
        %v1235 = vunpack.c.l.b16 %v994
        %v1236 = vunpack.c.h.b16 %v994
        %v1237 = vunpack.c.l.b16 %v995
        %v1238 = vunpack.c.h.b16 %v995
        %v1239 = vunpack.c.l.b16 %v996
        %v1240 = vunpack.c.h.b16 %v996
        %v1241 = vunpack.c.l.b16 %v997
        %v1242 = vunpack.c.h.b16 %v997
        %v1243 = vunpack.c.l.b16 %v998
        %v1244 = vunpack.c.h.b16 %v998
        %v1245 = vunpack.c.l.b16 %v999
        %v1246 = vunpack.c.h.b16 %v999
        %v1247 = vunpack.c.l.b16 %v1000
        %v1248 = vunpack.c.h.b16 %v1000
        %v1249 = vunpack.c.l.b16 %v1001
        %v1250 = vunpack.c.h.b16 %v1001
        %v1251 = vunpack.c.l.b16 %v1002
        %v1252 = vunpack.c.h.b16 %v1002
        %v1253 = vunpack.c.l.b16 %v1003
        %v1254 = vunpack.c.h.b16 %v1003
        %v1255 = vunpack.c.l.b16 %v1004
        %v1256 = vunpack.c.h.b16 %v1004
        %v1257 = vunpack.c.l.b16 %v1005
        %v1258 = vunpack.c.h.b16 %v1005
        %v1259 = vunpack.c.l.b16 %v1006
        %v1260 = vunpack.c.h.b16 %v1006
        %v1261 = vunpack.c.l.b16 %v1007
        %v1262 = vunpack.c.h.b16 %v1007
        %v1263 = vunpack.c.l.b16 %v1008
        %v1264 = vunpack.c.h.b16 %v1008
        %v1265 = vunpack.c.l.b16 %v1009
        %v1266 = vunpack.c.h.b16 %v1009
        %v1267 = vunpack.c.l.b16 %v1010
        %v1268 = vunpack.c.h.b16 %v1010
        %v1269 = vunpack.c.l.b16 %v1011
        %v1270 = vunpack.c.h.b16 %v1011
        %v1271 = vunpack.c.l.b16 %v1012
        %v1272 = vunpack.c.h.b16 %v1012
        %v1273 = vunpack.c.l.b16 %v1013
        %v1274 = vunpack.c.h.b16 %v1013
        %v1275 = vunpack.c.l.b16 %v1014
        %v1276 = vunpack.c.h.b16 %v1014
        %v1277 = vunpack.c.l.b16 %v1015
        %v1278 = vunpack.c.h.b16 %v1015
        %v1279 = vunpack.c.l.b16 %v1016
        %v1280 = vunpack.c.h.b16 %v1016
        %v1281 = vunpack.c.l.b16 %v1017
        %v1282 = vunpack.c.h.b16 %v1017
        %v1283 = vunpack.c.l.b16 %v1018
        %v1284 = vunpack.c.h.b16 %v1018
        %v1285 = vunpack.c.l.b16 %v1019
        %v1286 = vunpack.c.h.b16 %v1019
        %v1287 = vunpack.c.l.b16 %v1020
        %v1288 = vunpack.c.h.b16 %v1020
        %v1289 = vunpack.c.l.b16 %v1021
        %v1290 = vunpack.c.h.b16 %v1021
        %v1291 = vunpack.c.l.b16 %v1022
        %v1292 = vunpack.c.h.b16 %v1022
        %v1293 = vunpack.c.l.b16 %v1023
        %v1294 = vunpack.c.h.b16 %v1023
        %v1295 = vunpack.c.l.b16 %v1024
        %v1296 = vunpack.c.h.b16 %v1024
        %v1297 = vunpack.c.l.b16 %v1025
        %v1298 = vunpack.c.h.b16 %v1025
        %v1299 = vunpack.c.l.b16 %v1026
        %v1300 = vunpack.c.h.b16 %v1026
        %v1301 = vunpack.c.l.b16 %v1027
        %v1302 = vunpack.c.h.b16 %v1027
        %v1303 = vunpack.c.l.b16 %v1028
        %v1304 = vunpack.c.h.b16 %v1028
        %v1305 = vunpack.c.l.b16 %v1029
        %v1306 = vunpack.c.h.b16 %v1029
        %v1307 = vunpack.c.l.b16 %v1030
        %v1308 = vunpack.c.h.b16 %v1030
        %v1309 = vunpack.c.l.b16 %v1031
        %v1310 = vunpack.c.h.b16 %v1031
        %v1311 = vunpack.c.l.b16 %v1032
        %v1312 = vunpack.c.h.b16 %v1032
        %v1313 = vunpack.c.l.b16 %v1033
        %v1314 = vunpack.c.h.b16 %v1033
        %v1315 = vunpack.c.l.b16 %v1034
        %v1316 = vunpack.c.h.b16 %v1034
        %v1317 = vunpack.c.l.b16 %v1035
        %v1318 = vunpack.c.h.b16 %v1035
        %v1319 = vunpack.c.l.b16 %v1036
        %v1320 = vunpack.c.h.b16 %v1036
        %v1321 = vunpack.c.l.b16 %v1037
        %v1322 = vunpack.c.h.b16 %v1037
        %v1323 = vunpack.c.l.b16 %v1038
        %v1324 = vunpack.c.h.b16 %v1038
        %v1325 = vunpack.c.l.b16 %v1039
        %v1326 = vunpack.c.h.b16 %v1039
        %v1327 = vunpack.c.l.b16 %v1040
        %v1328 = vunpack.c.h.b16 %v1040
        %v1329 = vunpack.c.l.b16 %v1041
        %v1330 = vunpack.c.h.b16 %v1041
        %v1331 = vunpack.c.l.b16 %v1042
        %v1332 = vunpack.c.h.b16 %v1042
        %v1333 = vunpack.c.l.b16 %v1043
        %v1334 = vunpack.c.h.b16 %v1043
        %v1335 = vunpack.c.l.b16 %v1044
        %v1336 = vunpack.c.h.b16 %v1044
        %v1337 = vunpack.c.l.b16 %v1045
        %v1338 = vunpack.c.h.b16 %v1045
        %v1339 = vunpack.c.l.b16 %v1046
        %v1340 = vunpack.c.h.b16 %v1046
        %v1341 = vunpack.c.l.b16 %v1047
        %v1342 = vunpack.c.h.b16 %v1047
        %v1343 = vunpack.c.l.b16 %v1048
        %v1344 = vunpack.c.h.b16 %v1048
        %v1345 = vunpack.c.l.b16 %v1049
        %v1346 = vunpack.c.h.b16 %v1049
        %v1347 = vunpack.c.l.b16 %v1050
        %v1348 = vunpack.c.h.b16 %v1050
        %v1349 = vunpack.c.l.b16 %v1051
        %v1350 = vunpack.c.h.b16 %v1051
        %v1351 = vunpack.c.l.b16 %v1052
        %v1352 = vunpack.c.h.b16 %v1052
        %v1353 = vunpack.c.l.b16 %v1053
        %v1354 = vunpack.c.h.b16 %v1053
        %v1355 = vunpack.c.l.b16 %v1054
        %v1356 = vunpack.c.h.b16 %v1054
        %v1357 = vunpack.c.l.b16 %v1055
        %v1358 = vunpack.c.h.b16 %v1055
        %v1359 = vunpack.c.l.b16 %v1056
        %v1360 = vunpack.c.h.b16 %v1056
        %v1361 = vunpack.c.l.b16 %v1057
        %v1362 = vunpack.c.h.b16 %v1057
        %v1363 = vunpack.c.l.b16 %v1058
        %v1364 = vunpack.c.h.b16 %v1058
        %v1365 = vunpack.c.l.b16 %v1059
        %v1366 = vunpack.c.h.b16 %v1059
        %v1367 = vunpack.c.l.b16 %v1060
        %v1368 = vunpack.c.h.b16 %v1060
        %v1369 = vunpack.c.l.b16 %v1061
        %v1370 = vunpack.c.h.b16 %v1061
        %v1371 = vunpack.c.l.b16 %v1062
        %v1372 = vunpack.c.h.b16 %v1062
        %v1373 = vunpack.c.l.b16 %v1063
        %v1374 = vunpack.c.h.b16 %v1063
        %v1375 = vunpack.c.l.b16 %v1064
        %v1376 = vunpack.c.h.b16 %v1064
        %v1377 = vunpack.c.l.b16 %v1065
        %v1378 = vunpack.c.h.b16 %v1065
        %v1379 = vunpack.c.l.b16 %v1066
        %v1380 = vunpack.c.h.b16 %v1066
        %v1381 = vunpack.c.l.b16 %v1067
        %v1382 = vunpack.c.h.b16 %v1067
        %v1383 = vunpack.c.l.b16 %v1068
        %v1384 = vunpack.c.h.b16 %v1068
        %v1385 = vunpack.c.l.b16 %v1069
        %v1386 = vunpack.c.h.b16 %v1069
        %v1387 = vunpack.c.l.b16 %v1070
        %v1388 = vunpack.c.h.b16 %v1070
        %v1389 = vunpack.c.l.b16 %v1071
        %v1390 = vunpack.c.h.b16 %v1071
        %v1391 = vunpack.c.l.b16 %v1072
        %v1392 = vunpack.c.h.b16 %v1072
        %v1393 = vpack.c.b16 %v1207, %v1201
        %v1394 = vpack.c.b16 %v1208, %v1202
        %v1395 = vpack.c.b16 %v1209, %v1203
        %v1396 = vpack.c.b16 %v1210, %v1204
        %v1397 = vpack.c.b16 %v1211, %v1205
        %v1398 = vpack.c.b16 %v1212, %v1206
        %v1399 = vpack.c.b16 %v1219, %v1213
        %v1400 = vpack.c.b16 %v1220, %v1214
        %v1401 = vpack.c.b16 %v1221, %v1215
        %v1402 = vpack.c.b16 %v1222, %v1216
        %v1403 = vpack.c.b16 %v1223, %v1217
        %v1404 = vpack.c.b16 %v1224, %v1218
        %v1405 = vpack.c.b16 %v1231, %v1225
        %v1406 = vpack.c.b16 %v1232, %v1226
        %v1407 = vpack.c.b16 %v1233, %v1227
        %v1408 = vpack.c.b16 %v1234, %v1228
        %v1409 = vpack.c.b16 %v1235, %v1229
        %v1410 = vpack.c.b16 %v1236, %v1230
        %v1411 = vpack.c.b16 %v1243, %v1237
        %v1412 = vpack.c.b16 %v1244, %v1238
        %v1413 = vpack.c.b16 %v1245, %v1239
        %v1414 = vpack.c.b16 %v1246, %v1240
        %v1415 = vpack.c.b16 %v1247, %v1241
        %v1416 = vpack.c.b16 %v1248, %v1242
        %v1417 = vpack.c.b16 %v1255, %v1249
        %v1418 = vpack.c.b16 %v1256, %v1250
        %v1419 = vpack.c.b16 %v1257, %v1251
        %v1420 = vpack.c.b16 %v1258, %v1252
        %v1421 = vpack.c.b16 %v1259, %v1253
        %v1422 = vpack.c.b16 %v1260, %v1254
        %v1423 = vpack.c.b16 %v1267, %v1261
        %v1424 = vpack.c.b16 %v1268, %v1262
        %v1425 = vpack.c.b16 %v1269, %v1263
        %v1426 = vpack.c.b16 %v1270, %v1264
        %v1427 = vpack.c.b16 %v1271, %v1265
        %v1428 = vpack.c.b16 %v1272, %v1266
        %v1429 = vpack.c.b16 %v1279, %v1273
        %v1430 = vpack.c.b16 %v1280, %v1274
        %v1431 = vpack.c.b16 %v1281, %v1275
        %v1432 = vpack.c.b16 %v1282, %v1276
        %v1433 = vpack.c.b16 %v1283, %v1277
        %v1434 = vpack.c.b16 %v1284, %v1278
        %v1435 = vpack.c.b16 %v1291, %v1285
        %v1436 = vpack.c.b16 %v1292, %v1286
        %v1437 = vpack.c.b16 %v1293, %v1287
        %v1438 = vpack.c.b16 %v1294, %v1288
        %v1439 = vpack.c.b16 %v1295, %v1289
        %v1440 = vpack.c.b16 %v1296, %v1290
        %v1441 = vpack.c.b16 %v1303, %v1297
        %v1442 = vpack.c.b16 %v1304, %v1298
        %v1443 = vpack.c.b16 %v1305, %v1299
        %v1444 = vpack.c.b16 %v1306, %v1300
        %v1445 = vpack.c.b16 %v1307, %v1301
        %v1446 = vpack.c.b16 %v1308, %v1302
        %v1447 = vpack.c.b16 %v1315, %v1309
        %v1448 = vpack.c.b16 %v1316, %v1310
        %v1449 = vpack.c.b16 %v1317, %v1311
        %v1450 = vpack.c.b16 %v1318, %v1312
        %v1451 = vpack.c.b16 %v1319, %v1313
        %v1452 = vpack.c.b16 %v1320, %v1314
        %v1453 = vpack.c.b16 %v1327, %v1321
        %v1454 = vpack.c.b16 %v1328, %v1322
        %v1455 = vpack.c.b16 %v1329, %v1323
        %v1456 = vpack.c.b16 %v1330, %v1324
        %v1457 = vpack.c.b16 %v1331, %v1325
        %v1458 = vpack.c.b16 %v1332, %v1326
        %v1459 = vpack.c.b16 %v1339, %v1333
        %v1460 = vpack.c.b16 %v1340, %v1334
        %v1461 = vpack.c.b16 %v1341, %v1335
        %v1462 = vpack.c.b16 %v1342, %v1336
        %v1463 = vpack.c.b16 %v1343, %v1337
        %v1464 = vpack.c.b16 %v1344, %v1338
        %v1465 = vpack.c.b16 %v1351, %v1345
        %v1466 = vpack.c.b16 %v1352, %v1346
        %v1467 = vpack.c.b16 %v1353, %v1347
        %v1468 = vpack.c.b16 %v1354, %v1348
        %v1469 = vpack.c.b16 %v1355, %v1349
        %v1470 = vpack.c.b16 %v1356, %v1350
        %v1471 = vpack.c.b16 %v1363, %v1357
        %v1472 = vpack.c.b16 %v1364, %v1358
        %v1473 = vpack.c.b16 %v1365, %v1359
        %v1474 = vpack.c.b16 %v1366, %v1360
        %v1475 = vpack.c.b16 %v1367, %v1361
        %v1476 = vpack.c.b16 %v1368, %v1362
        %v1477 = vpack.c.b16 %v1375, %v1369
        %v1478 = vpack.c.b16 %v1376, %v1370
        %v1479 = vpack.c.b16 %v1377, %v1371
        %v1480 = vpack.c.b16 %v1378, %v1372
        %v1481 = vpack.c.b16 %v1379, %v1373
        %v1482 = vpack.c.b16 %v1380, %v1374
        %v1483 = vpack.c.b16 %v1387, %v1381
        %v1484 = vpack.c.b16 %v1388, %v1382
        %v1485 = vpack.c.b16 %v1389, %v1383
        %v1486 = vpack.c.b16 %v1390, %v1384
        %v1487 = vpack.c.b16 %v1391, %v1385
        %v1488 = vpack.c.b16 %v1392, %v1386
        %1585 = vmatprep.subr.bf16.mxu0 %v1394
        %1586 = vmatpush1.bf16.msra.mxu0 %v1393
        %1587 = vmatprep.subr.bf16.mxu0 %v1400
        %1588 = vmatpush1.bf16.msra.mxu0 %v1399
        %1589 = vmatprep.subr.bf16.mxu0 %v1406
        %1590 = vmatpush1.bf16.msra.mxu0 %v1405
        %1591 = vmatprep.subr.bf16.mxu0 %v1412
        %1592 = vmatpush1.bf16.msra.mxu0 %v1411
        %1593 = vmatprep.subr.bf16.mxu0 %v1418
        %1594 = vmatpush1.bf16.msra.mxu0 %v1417
        %1595 = vmatprep.subr.bf16.mxu0 %v1424
        %1596 = vmatpush1.bf16.msra.mxu0 %v1423
        %1597 = vmatprep.subr.bf16.mxu0 %v1430
        %1598 = vmatpush1.bf16.msra.mxu0 %v1429
        %1599 = vmatprep.subr.bf16.mxu0 %v1436
        %1600 = vmatpush1.bf16.msra.mxu0 %v1435
        %1601 = vmatprep.subr.bf16.mxu0 %v1442
        %1602 = vmatpush1.bf16.msra.mxu0 %v1441
        %1603 = vmatprep.subr.bf16.mxu0 %v1448
        %1604 = vmatpush1.bf16.msra.mxu0 %v1447
        %1605 = vmatprep.subr.bf16.mxu0 %v1454
        %1606 = vmatpush1.bf16.msra.mxu0 %v1453
        %1607 = vmatprep.subr.bf16.mxu0 %v1460
        %1608 = vmatpush1.bf16.msra.mxu0 %v1459
        %1609 = vmatprep.subr.bf16.mxu0 %v1466
        %1610 = vmatpush1.bf16.msra.mxu0 %v1465
        %1611 = vmatprep.subr.bf16.mxu0 %v1472
        %1612 = vmatpush1.bf16.msra.mxu0 %v1471
        %1613 = vmatprep.subr.bf16.mxu0 %v1478
        %1614 = vmatpush1.bf16.msra.mxu0 %v1477
        %1615 = vmatprep.subr.bf16.mxu0 %v1484
        %1616 = vmatpush1.bf16.msra.mxu0 %v1483
        %1617 = vmatprep.mubr.bf16.mxu0 %v974
        %1618 = vmatmul.mubr.bf16.gmra.mrb[0].mxu0 %v973
        %v1619 = vpop.f32.mrb[0].mxu0
        %v1620 = vadd.f32 %v1078, %v1619
        %v1621 = vpop.f32.mrb[0].mxu0
        %v1622 = vadd.f32 %v1082, %v1621
        %v1623 = vpop.f32.mrb[0].mxu0
        %v1624 = vadd.f32 %v1078, %v1623
        %v1625 = vpop.f32.mrb[0].mxu0
        %v1626 = vadd.f32 %v1082, %v1625
        %1627 = vmatprep.mubr.bf16.mxu0 %v976
        %1628 = vmatmul.mubr.bf16.gmra.mrb[0].mxu0 %v975
        %v1629 = vpop.f32.mrb[0].mxu0
        %v1630 = vadd.f32 %v1078, %v1629
        %v1631 = vpop.f32.mrb[0].mxu0
        %v1632 = vadd.f32 %v1082, %v1631
        %v1633 = vpop.f32.mrb[0].mxu0
        %v1634 = vadd.f32 %v1078, %v1633
        %v1635 = vpop.f32.mrb[0].mxu0
        %v1636 = vadd.f32 %v1082, %v1635
        %1637 = vdwg.mxu0
        %1638 = vmatprep.subr.bf16.mxu0 %v1396
        %1639 = vmatpush1.bf16.msra.mxu0 %v1395
        %1640 = vmatprep.subr.bf16.mxu0 %v1402
        %1641 = vmatpush1.bf16.msra.mxu0 %v1401
        %1642 = vmatprep.subr.bf16.mxu0 %v1408
        %1643 = vmatpush1.bf16.msra.mxu0 %v1407
        %1644 = vmatprep.subr.bf16.mxu0 %v1414
        %1645 = vmatpush1.bf16.msra.mxu0 %v1413
        %1646 = vmatprep.subr.bf16.mxu0 %v1420
        %1647 = vmatpush1.bf16.msra.mxu0 %v1419
        %1648 = vmatprep.subr.bf16.mxu0 %v1426
        %1649 = vmatpush1.bf16.msra.mxu0 %v1425
        %1650 = vmatprep.subr.bf16.mxu0 %v1432
        %1651 = vmatpush1.bf16.msra.mxu0 %v1431
        %1652 = vmatprep.subr.bf16.mxu0 %v1438
        %1653 = vmatpush1.bf16.msra.mxu0 %v1437
        %1654 = vmatprep.subr.bf16.mxu0 %v1444
        %1655 = vmatpush1.bf16.msra.mxu0 %v1443
        %1656 = vmatprep.subr.bf16.mxu0 %v1450
        %1657 = vmatpush1.bf16.msra.mxu0 %v1449
        %1658 = vmatprep.subr.bf16.mxu0 %v1456
        %1659 = vmatpush1.bf16.msra.mxu0 %v1455
        %1660 = vmatprep.subr.bf16.mxu0 %v1462
        %1661 = vmatpush1.bf16.msra.mxu0 %v1461
        %1662 = vmatprep.subr.bf16.mxu0 %v1468
        %1663 = vmatpush1.bf16.msra.mxu0 %v1467
        %1664 = vmatprep.subr.bf16.mxu0 %v1474
        %1665 = vmatpush1.bf16.msra.mxu0 %v1473
        %1666 = vmatprep.subr.bf16.mxu0 %v1480
        %1667 = vmatpush1.bf16.msra.mxu0 %v1479
        %1668 = vmatprep.subr.bf16.mxu0 %v1486
        %1669 = vmatpush1.bf16.msra.mxu0 %v1485
        %1670 = vmatprep.mubr.bf16.mxu0 %v974
        %1671 = vmatmul.mubr.bf16.gmra.mrb[0].mxu0 %v973
        %v1672 = vpop.f32.mrb[0].mxu0
        %v1673 = vadd.f32 %v1086, %v1672
        %v1674 = vpop.f32.mrb[0].mxu0
        %v1675 = vadd.f32 %v1090, %v1674
        %v1676 = vpop.f32.mrb[0].mxu0
        %v1677 = vadd.f32 %v1086, %v1676
        %v1678 = vpop.f32.mrb[0].mxu0
        %v1679 = vadd.f32 %v1090, %v1678
        %1680 = vmatprep.mubr.bf16.mxu0 %v976
        %1681 = vmatmul.mubr.bf16.gmra.mrb[0].mxu0 %v975
        %v1682 = vpop.f32.mrb[0].mxu0
        %v1683 = vadd.f32 %v1086, %v1682
        %v1684 = vpop.f32.mrb[0].mxu0
        %v1685 = vadd.f32 %v1090, %v1684
        %v1686 = vpop.f32.mrb[0].mxu0
        %v1687 = vadd.f32 %v1086, %v1686
        %v1688 = vpop.f32.mrb[0].mxu0
        %v1689 = vadd.f32 %v1090, %v1688
        %1690 = vdwg.mxu0
        %1691 = vmatprep.subr.bf16.mxu0 %v1398
        %1692 = vmatpush1.bf16.msra.mxu0 %v1397
        %1693 = vmatprep.subr.bf16.mxu0 %v1404
        %1694 = vmatpush1.bf16.msra.mxu0 %v1403
        %1695 = vmatprep.subr.bf16.mxu0 %v1410
        %1696 = vmatpush1.bf16.msra.mxu0 %v1409
        %1697 = vmatprep.subr.bf16.mxu0 %v1416
        %1698 = vmatpush1.bf16.msra.mxu0 %v1415
        %1699 = vmatprep.subr.bf16.mxu0 %v1422
        %1700 = vmatpush1.bf16.msra.mxu0 %v1421
        %1701 = vmatprep.subr.bf16.mxu0 %v1428
        %1702 = vmatpush1.bf16.msra.mxu0 %v1427
        %1703 = vmatprep.subr.bf16.mxu0 %v1434
        %1704 = vmatpush1.bf16.msra.mxu0 %v1433
        %1705 = vmatprep.subr.bf16.mxu0 %v1440
        %1706 = vmatpush1.bf16.msra.mxu0 %v1439
        %1707 = vmatprep.subr.bf16.mxu0 %v1446
        %1708 = vmatpush1.bf16.msra.mxu0 %v1445
        %1709 = vmatprep.subr.bf16.mxu0 %v1452
        %1710 = vmatpush1.bf16.msra.mxu0 %v1451
        %1711 = vmatprep.subr.bf16.mxu0 %v1458
        %1712 = vmatpush1.bf16.msra.mxu0 %v1457
        %1713 = vmatprep.subr.bf16.mxu0 %v1464
        %1714 = vmatpush1.bf16.msra.mxu0 %v1463
        %1715 = vmatprep.subr.bf16.mxu0 %v1470
        %1716 = vmatpush1.bf16.msra.mxu0 %v1469
        %1717 = vmatprep.subr.bf16.mxu0 %v1476
        %1718 = vmatpush1.bf16.msra.mxu0 %v1475
        %1719 = vmatprep.subr.bf16.mxu0 %v1482
        %1720 = vmatpush1.bf16.msra.mxu0 %v1481
        %1721 = vmatprep.subr.bf16.mxu0 %v1488
        %1722 = vmatpush1.bf16.msra.mxu0 %v1487
        %1723 = vmatprep.mubr.bf16.mxu0 %v974
        %1724 = vmatmul.mubr.bf16.gmra.mrb[0].mxu0 %v973
        %v1725 = vpop.f32.mrb[0].mxu0
        %v1726 = vadd.f32 %v1094, %v1725
        %v1727 = vpop.f32.mrb[0].mxu0
        %v1728 = vadd.f32 %v1098, %v1727
        %v1729 = vpop.f32.mrb[0].mxu0
        %v1730 = vadd.f32 %v1094, %v1729
        %v1731 = vpop.f32.mrb[0].mxu0
        %v1732 = vadd.f32 %v1098, %v1731
        %1733 = vmatprep.mubr.bf16.mxu0 %v976
        %1734 = vmatmul.mubr.bf16.gmra.mrb[0].mxu0 %v975
        %v1735 = vpop.f32.mrb[0].mxu0
        %v1736 = vadd.f32 %v1094, %v1735
        %v1737 = vpop.f32.mrb[0].mxu0
        %v1738 = vadd.f32 %v1098, %v1737
        %v1739 = vpop.f32.mrb[0].mxu0
        %v1740 = vadd.f32 %v1094, %v1739
        %v1741 = vpop.f32.mrb[0].mxu0
        %v1742 = vadd.f32 %v1098, %v1741
        %1743 = vdwg.mxu0
        %v1744 = vmul.f32 %v1620, 0.125
        %v1745 = vmul.f32 %v1622, 0.125
        %v1746 = vmul.f32 %v1624, 0.125
        %v1747 = vmul.f32 %v1626, 0.125
        %v1748 = vmul.f32 %v1630, 0.125
        %v1749 = vmul.f32 %v1632, 0.125
        %v1750 = vmul.f32 %v1634, 0.125
        %v1751 = vmul.f32 %v1636, 0.125
        %v1752 = vpack.c.bf16 %v1746, %v1744
        %v1753 = vpack.c.bf16 %v1747, %v1745
        %v1754 = vpack.c.bf16 %v1750, %v1748
        %v1755 = vpack.c.bf16 %v1751, %v1749
        %v1756 = vpack.c.bf16 %v1677, %v1673
        %v1757 = vpack.c.bf16 %v1679, %v1675
        %v1758 = vpack.c.bf16 %v1687, %v1683
        %v1759 = vpack.c.bf16 %v1689, %v1685
        %v1760 = vpack.c.bf16 %v1730, %v1726
        %v1761 = vpack.c.bf16 %v1732, %v1728
        %v1762 = vpack.c.bf16 %v1740, %v1736
        %v1763 = vpack.c.bf16 %v1742, %v1738
        %v1764 = vld [vmem:[%s687] sm:$0xff]
        %v1765 = vld [vmem:[%s687 + $0x8] sm:$0xff]
        %v1766 = vld [vmem:[%s687 + $0x10] sm:$0xff]
        %v1767 = vld [vmem:[%s687 + $0x18] sm:$0xff]
        %v1768 = vld [vmem:[%s687 + $0x20] sm:$0xff]
        %v1769 = vld [vmem:[%s687 + $0x28] sm:$0xff]
        %v1770 = vld [vmem:[%s687 + $0x30] sm:$0xff]
        %v1771 = vld [vmem:[%s687 + $0x38] sm:$0xff]
        %v1772 = vld [vmem:[%s687 + $0x40] sm:$0xff]
        %v1773 = vld [vmem:[%s687 + $0x48] sm:$0xff]
        %v1774 = vld [vmem:[%s687 + $0x50] sm:$0xff]
        %v1775 = vld [vmem:[%s687 + $0x58] sm:$0xff]
        %v1776 = vld [vmem:[%s687 + $0x60] sm:$0xff]
        %v1777 = vld [vmem:[%s687 + $0x68] sm:$0xff]
        %v1778 = vld [vmem:[%s687 + $0x70] sm:$0xff]
        %v1779 = vld [vmem:[%s687 + $0x78] sm:$0xff]
        %v1780 = vld [vmem:[%s687 + $0x80] sm:$0xff]
        %v1781 = vld [vmem:[%s687 + $0x88] sm:$0xff]
        %v1782 = vld [vmem:[%s687 + $0x90] sm:$0xff]
        %v1783 = vld [vmem:[%s687 + $0x98] sm:$0xff]
        %v1784 = vld [vmem:[%s687 + $0xa0] sm:$0xff]
        %v1785 = vld [vmem:[%s687 + $0xa8] sm:$0xff]
        %v1786 = vld [vmem:[%s687 + $0xb0] sm:$0xff]
        %v1787 = vld [vmem:[%s687 + $0xb8] sm:$0xff]
        %v1788 = vld [vmem:[%s687 + $0xc0] sm:$0xff]
        %v1789 = vld [vmem:[%s687 + $0xc8] sm:$0xff]
        %v1790 = vld [vmem:[%s687 + $0xd0] sm:$0xff]
        %v1791 = vld [vmem:[%s687 + $0xd8] sm:$0xff]
        %v1792 = vld [vmem:[%s687 + $0xe0] sm:$0xff]
        %v1793 = vld [vmem:[%s687 + $0xe8] sm:$0xff]
        %v1794 = vld [vmem:[%s687 + $0xf0] sm:$0xff]
        %v1795 = vld [vmem:[%s687 + $0xf8] sm:$0xff]
        %v1796 = vlaneseq
        %v1797 = vshrl.u32 %v1796, 7
        %v1798 = vsub.s32 0, %v1797
        %v1799 = vrot.slane %v854, %v1798
        %vm1800 = vcmask 523264
        %v1802 = vsel %vm1800, %v1752, 0
        %v1805 = vsel %vm1800, %v1756, 0
        %1807 = vmatprep.subr.bf16.mxu0 0
        %1808 = vmatpush1.bf16.xpose.msra.mxu0 %v1805
        %1809 = vmatprep.subr.bf16.mxu0 0
        %1810 = vmatpush1.bf16.xpose.msra.mxu0 0
        %1811 = vmatprep.subr.bf16.mxu0 0
        %1812 = vmatpush1.bf16.xpose.msra.mxu0 0
        %1813 = vmatprep.subr.bf16.mxu0 0
        %1814 = vmatpush1.bf16.xpose.msra.mxu0 0
        %1815 = vmatprep.subr.bf16.mxu0 0
        %1816 = vmatpush1.bf16.xpose.msra.mxu0 0
        %1817 = vmatprep.subr.bf16.mxu0 0
        %1818 = vmatpush1.bf16.xpose.msra.mxu0 0
        %1819 = vmatprep.subr.bf16.mxu0 0
        %1820 = vmatpush1.bf16.xpose.msra.mxu0 0
        %1821 = vmatprep.subr.bf16.mxu0 0
        %1822 = vmatpush1.bf16.xpose.msra.mxu0 0
        %1823 = vmatprep.subr.bf16.mxu0 0
        %1824 = vmatpush1.bf16.xpose.msra.mxu0 0
        %1825 = vmatprep.subr.bf16.mxu0 0
        %1826 = vmatpush1.bf16.xpose.msra.mxu0 0
        %1827 = vmatprep.subr.bf16.mxu0 0
        %1828 = vmatpush1.bf16.xpose.msra.mxu0 0
        %1829 = vmatprep.subr.bf16.mxu0 0
        %1830 = vmatpush1.bf16.xpose.msra.mxu0 0
        %1831 = vmatprep.subr.bf16.mxu0 0
        %1832 = vmatpush1.bf16.xpose.msra.mxu0 0
        %1833 = vmatprep.subr.bf16.mxu0 0
        %1834 = vmatpush1.bf16.xpose.msra.mxu0 0
        %1835 = vmatprep.subr.bf16.mxu0 0
        %1836 = vmatpush1.bf16.xpose.msra.mxu0 0
        %1837 = vmatprep.subr.bf16.mxu0 0
        %1838 = vmatpush1.bf16.xpose.msra.mxu0 0
        %1839 = vmatprep.mubr.bf16.mxu0 0
        %1840 = vmatmul.mubr.bf16.gmra.mrb[0].mxu0 %v1802
        %v1841 = vpop.f32.mrb[0].mxu0
        %v1842 = vadd.f32 %v1799, %v1841
        %v1843 = vpop.f32.mrb[0].mxu0
        %v1844 = vpop.f32.mrb[0].mxu0
        %v1845 = vadd.f32 %v1799, %v1844
        %v1846 = vpop.f32.mrb[0].mxu0
        %1847 = vdwg.mxu0
        %vm1848 = vcmask 130048
        %v1849 = vsel %vm1848, %v1842, -inf
        %1850 = vmax.xlane.f32.xlu0 %v1849
        %v1851 = vpop.xlane.xlu0 %1850
        %v1852 = vsel %vm1848, %v1845, -inf
        %1853 = vmax.xlane.f32.xlu0 %v1852
        %v1854 = vpop.xlane.xlu0 %1853
        %v1855 = vsub.f32 %v1842, %v1851
        %v1856 = vsub.f32 %v1845, %v1854
        %v1857 = vmul.f32 %v1855, 1.442695
        %v1858 = vpow.pop %v1857
        %v1859 = vmul.f32 %v1856, 1.442695
        %v1860 = vpow.pop %v1859
        %v1861 = vsel %vm1848, %v1858, 0.0
        %1862 = vadd.xlane.f32.xlu0 %v1861
        %v1863 = vpop.xlane.xlu0 %1862
        %v1864 = vsel %vm1848, %v1860, 0.0
        %1865 = vadd.xlane.f32.xlu0 %v1864
        %v1866 = vpop.xlane.xlu0 %1865
        %v1867 = vrcp.pop %v1863
        %v1868 = vrcp.pop %v1866
        %v1869 = vmul.f32 %v1858, %v1867
        %v1870 = vmul.f32 %v1860, %v1868
        %v1871 = vpack.c.bf16 %v1870, %v1869
        %v1873 = vsel %vm1848, %v1871, 0
        %1875 = vmatprep.subr.bf16.mxu0 0
        %1876 = vmatpush1.bf16.msra.mxu0 %v1760
        %1877 = vmatprep.subr.bf16.mxu0 0
        %1878 = vmatpush1.bf16.msra.mxu0 0
        %1879 = vmatprep.subr.bf16.mxu0 0
        %1880 = vmatpush1.bf16.msra.mxu0 0
        %1881 = vmatprep.subr.bf16.mxu0 0
        %1882 = vmatpush1.bf16.msra.mxu0 0
        %1883 = vmatprep.subr.bf16.mxu0 0
        %1884 = vmatpush1.bf16.msra.mxu0 0
        %1885 = vmatprep.subr.bf16.mxu0 0
        %1886 = vmatpush1.bf16.msra.mxu0 0
        %1887 = vmatprep.subr.bf16.mxu0 0
        %1888 = vmatpush1.bf16.msra.mxu0 0
        %1889 = vmatprep.subr.bf16.mxu0 0
        %1890 = vmatpush1.bf16.msra.mxu0 0
        %1891 = vmatprep.subr.bf16.mxu0 0
        %1892 = vmatpush1.bf16.msra.mxu0 0
        %1893 = vmatprep.subr.bf16.mxu0 0
        %1894 = vmatpush1.bf16.msra.mxu0 0
        %1895 = vmatprep.subr.bf16.mxu0 0
        %1896 = vmatpush1.bf16.msra.mxu0 0
        %1897 = vmatprep.subr.bf16.mxu0 0
        %1898 = vmatpush1.bf16.msra.mxu0 0
        %1899 = vmatprep.subr.bf16.mxu0 0
        %1900 = vmatpush1.bf16.msra.mxu0 0
        %1901 = vmatprep.subr.bf16.mxu0 0
        %1902 = vmatpush1.bf16.msra.mxu0 0
        %1903 = vmatprep.subr.bf16.mxu0 0
        %1904 = vmatpush1.bf16.msra.mxu0 0
        %1905 = vmatprep.subr.bf16.mxu0 0
        %1906 = vmatpush1.bf16.msra.mxu0 0
        %1907 = vmatprep.mubr.bf16.mxu0 0
        %1908 = vmatmul.mubr.bf16.gmra.mrb[0].mxu0 %v1873
        %v1909 = vpop.f32.mrb[0].mxu0
        %v1910 = vadd.f32 0.0, %v1909
        %v1911 = vpop.f32.mrb[0].mxu0
        %v1912 = vpop.f32.mrb[0].mxu0
        %v1913 = vadd.f32 0.0, %v1912
        %v1914 = vpop.f32.mrb[0].mxu0
        %1915 = vdwg.mxu0
        %v1916 = vpack.c.bf16 %v1913, %v1910
        %1918 = vrot.lane.b32.xlu0 %v1752, 64
        %v1919 = vpop.permute.xlu0 %1918
        %1921 = vrot.lane.b32.xlu0 %v1756, 64
        %v1922 = vpop.permute.xlu0 %1921
        %v1924 = vsel %vm1800, %v1919, 0
        %v1927 = vsel %vm1800, %v1922, 0
        %1929 = vmatprep.subr.bf16.mxu0 0
        %1930 = vmatpush1.bf16.xpose.msra.mxu0 %v1927
        %1931 = vmatprep.subr.bf16.mxu0 0
        %1932 = vmatpush1.bf16.xpose.msra.mxu0 0
        %1933 = vmatprep.subr.bf16.mxu0 0
        %1934 = vmatpush1.bf16.xpose.msra.mxu0 0
        %1935 = vmatprep.subr.bf16.mxu0 0
        %1936 = vmatpush1.bf16.xpose.msra.mxu0 0
        %1937 = vmatprep.subr.bf16.mxu0 0
        %1938 = vmatpush1.bf16.xpose.msra.mxu0 0
        %1939 = vmatprep.subr.bf16.mxu0 0
        %1940 = vmatpush1.bf16.xpose.msra.mxu0 0
        %1941 = vmatprep.subr.bf16.mxu0 0
        %1942 = vmatpush1.bf16.xpose.msra.mxu0 0
        %1943 = vmatprep.subr.bf16.mxu0 0
        %1944 = vmatpush1.bf16.xpose.msra.mxu0 0
        %1945 = vmatprep.subr.bf16.mxu0 0
        %1946 = vmatpush1.bf16.xpose.msra.mxu0 0
        %1947 = vmatprep.subr.bf16.mxu0 0
        %1948 = vmatpush1.bf16.xpose.msra.mxu0 0
        %1949 = vmatprep.subr.bf16.mxu0 0
        %1950 = vmatpush1.bf16.xpose.msra.mxu0 0
        %1951 = vmatprep.subr.bf16.mxu0 0
        %1952 = vmatpush1.bf16.xpose.msra.mxu0 0
        %1953 = vmatprep.subr.bf16.mxu0 0
        %1954 = vmatpush1.bf16.xpose.msra.mxu0 0
        %1955 = vmatprep.subr.bf16.mxu0 0
        %1956 = vmatpush1.bf16.xpose.msra.mxu0 0
        %1957 = vmatprep.subr.bf16.mxu0 0
        %1958 = vmatpush1.bf16.xpose.msra.mxu0 0
        %1959 = vmatprep.subr.bf16.mxu0 0
        %1960 = vmatpush1.bf16.xpose.msra.mxu0 0
        %1961 = vmatprep.mubr.bf16.mxu0 0
        %1962 = vmatmul.mubr.bf16.gmra.mrb[0].mxu0 %v1924
        %v1963 = vpop.f32.mrb[0].mxu0
        %v1964 = vadd.f32 %v1799, %v1963
        %v1965 = vpop.f32.mrb[0].mxu0
        %v1966 = vpop.f32.mrb[0].mxu0
        %v1967 = vadd.f32 %v1799, %v1966
        %v1968 = vpop.f32.mrb[0].mxu0
        %1969 = vdwg.mxu0
        %v1970 = vsel %vm1848, %v1964, -inf
        %1971 = vmax.xlane.f32.xlu0 %v1970
        %v1972 = vpop.xlane.xlu0 %1971
        %v1973 = vsel %vm1848, %v1967, -inf
        %1974 = vmax.xlane.f32.xlu0 %v1973
        %v1975 = vpop.xlane.xlu0 %1974
        %v1976 = vsub.f32 %v1964, %v1972
        %v1977 = vsub.f32 %v1967, %v1975
        %v1978 = vmul.f32 %v1976, 1.442695
        %v1979 = vpow.pop %v1978
        %v1980 = vmul.f32 %v1977, 1.442695
        %v1981 = vpow.pop %v1980
        %v1982 = vsel %vm1848, %v1979, 0.0
        %1983 = vadd.xlane.f32.xlu0 %v1982
        %v1984 = vpop.xlane.xlu0 %1983
        %v1985 = vsel %vm1848, %v1981, 0.0
        %1986 = vadd.xlane.f32.xlu0 %v1985
        %v1987 = vpop.xlane.xlu0 %1986
        %v1988 = vrcp.pop %v1984
        %v1989 = vrcp.pop %v1987
        %v1990 = vmul.f32 %v1979, %v1988
        %v1991 = vmul.f32 %v1981, %v1989
        %v1992 = vpack.c.bf16 %v1991, %v1990
        %1994 = vrot.lane.b32.xlu0 %v1760, 64
        %v1995 = vpop.permute.xlu0 %1994
        %v1998 = vsel %vm1848, %v1992, 0
        %2000 = vmatprep.subr.bf16.mxu0 0
        %2001 = vmatpush1.bf16.msra.mxu0 %v1995
        %2002 = vmatprep.subr.bf16.mxu0 0
        %2003 = vmatpush1.bf16.msra.mxu0 0
        %2004 = vmatprep.subr.bf16.mxu0 0
        %2005 = vmatpush1.bf16.msra.mxu0 0
        %2006 = vmatprep.subr.bf16.mxu0 0
        %2007 = vmatpush1.bf16.msra.mxu0 0
        %2008 = vmatprep.subr.bf16.mxu0 0
        %2009 = vmatpush1.bf16.msra.mxu0 0
        %2010 = vmatprep.subr.bf16.mxu0 0
        %2011 = vmatpush1.bf16.msra.mxu0 0
        %2012 = vmatprep.subr.bf16.mxu0 0
        %2013 = vmatpush1.bf16.msra.mxu0 0
        %2014 = vmatprep.subr.bf16.mxu0 0
        %2015 = vmatpush1.bf16.msra.mxu0 0
        %2016 = vmatprep.subr.bf16.mxu0 0
        %2017 = vmatpush1.bf16.msra.mxu0 0
        %2018 = vmatprep.subr.bf16.mxu0 0
        %2019 = vmatpush1.bf16.msra.mxu0 0
        %2020 = vmatprep.subr.bf16.mxu0 0
        %2021 = vmatpush1.bf16.msra.mxu0 0
        %2022 = vmatprep.subr.bf16.mxu0 0
        %2023 = vmatpush1.bf16.msra.mxu0 0
        %2024 = vmatprep.subr.bf16.mxu0 0
        %2025 = vmatpush1.bf16.msra.mxu0 0
        %2026 = vmatprep.subr.bf16.mxu0 0
        %2027 = vmatpush1.bf16.msra.mxu0 0
        %2028 = vmatprep.subr.bf16.mxu0 0
        %2029 = vmatpush1.bf16.msra.mxu0 0
        %2030 = vmatprep.subr.bf16.mxu0 0
        %2031 = vmatpush1.bf16.msra.mxu0 0
        %2032 = vmatprep.mubr.bf16.mxu0 0
        %2033 = vmatmul.mubr.bf16.gmra.mrb[0].mxu0 %v1998
        %v2034 = vpop.f32.mrb[0].mxu0
        %v2035 = vadd.f32 0.0, %v2034
        %v2036 = vpop.f32.mrb[0].mxu0
        %v2037 = vpop.f32.mrb[0].mxu0
        %v2038 = vadd.f32 0.0, %v2037
        %v2039 = vpop.f32.mrb[0].mxu0
        %2040 = vdwg.mxu0
        %v2041 = vpack.c.bf16 %v2038, %v2035
        %v2050 = vunpack.c.l.b16 %v1772
        %v2051 = vunpack.c.h.b16 %v1772
        %v2052 = vunpack.c.l.b16 %v1773
        %v2053 = vunpack.c.h.b16 %v1773
        %v2054 = vunpack.c.l.b16 %v1774
        %v2055 = vunpack.c.h.b16 %v1774
        %v2056 = vunpack.c.l.b16 %v1775
        %v2057 = vunpack.c.h.b16 %v1775
        %v2058 = vunpack.c.l.b16 %v1776
        %v2059 = vunpack.c.h.b16 %v1776
        %v2060 = vunpack.c.l.b16 %v1777
        %v2061 = vunpack.c.h.b16 %v1777
        %v2062 = vunpack.c.l.b16 %v1778
        %v2063 = vunpack.c.h.b16 %v1778
        %v2064 = vunpack.c.l.b16 %v1779
        %v2065 = vunpack.c.h.b16 %v1779
        %v2066 = vpack.c.b16 %v2052, %v2050
        %v2067 = vpack.c.b16 %v2053, %v2051
        %v2068 = vpack.c.b16 %v2056, %v2054
        %v2069 = vpack.c.b16 %v2057, %v2055
        %v2070 = vpack.c.b16 %v2060, %v2058
        %v2071 = vpack.c.b16 %v2061, %v2059
        %v2072 = vpack.c.b16 %v2064, %v2062
        %v2073 = vpack.c.b16 %v2065, %v2063
        %v2083 = vsel %vm1800, %v2041, 0
        %2085 = vmatprep.subr.bf16.mxu0 %v2067
        %2086 = vmatpush1.bf16.msra.mxu0 %v2066
        %2087 = vmatprep.subr.bf16.mxu0 %v2069
        %2088 = vmatpush1.bf16.msra.mxu0 %v2068
        %2089 = vmatprep.subr.bf16.mxu0 %v2071
        %2090 = vmatpush1.bf16.msra.mxu0 %v2070
        %2091 = vmatprep.subr.bf16.mxu0 %v2073
        %2092 = vmatpush1.bf16.msra.mxu0 %v2072
        %2093 = vmatprep.subr.bf16.mxu0 0
        %2094 = vmatpush1.bf16.msra.mxu0 0
        %2095 = vmatprep.subr.bf16.mxu0 0
        %2096 = vmatpush1.bf16.msra.mxu0 0
        %2097 = vmatprep.subr.bf16.mxu0 0
        %2098 = vmatpush1.bf16.msra.mxu0 0
        %2099 = vmatprep.subr.bf16.mxu0 0
        %2100 = vmatpush1.bf16.msra.mxu0 0
        %2101 = vmatprep.subr.bf16.mxu0 0
        %2102 = vmatpush1.bf16.msra.mxu0 0
        %2103 = vmatprep.subr.bf16.mxu0 0
        %2104 = vmatpush1.bf16.msra.mxu0 0
        %2105 = vmatprep.subr.bf16.mxu0 0
        %2106 = vmatpush1.bf16.msra.mxu0 0
        %2107 = vmatprep.subr.bf16.mxu0 0
        %2108 = vmatpush1.bf16.msra.mxu0 0
        %2109 = vmatprep.subr.bf16.mxu0 0
        %2110 = vmatpush1.bf16.msra.mxu0 0
        %2111 = vmatprep.subr.bf16.mxu0 0
        %2112 = vmatpush1.bf16.msra.mxu0 0
        %2113 = vmatprep.subr.bf16.mxu0 0
        %2114 = vmatpush1.bf16.msra.mxu0 0
        %2115 = vmatprep.subr.bf16.mxu0 0
        %2116 = vmatpush1.bf16.msra.mxu0 0
        %2117 = vmatprep.mubr.bf16.mxu0 0
        %2118 = vmatmul.mubr.bf16.gmra.mrb[0].mxu0 %v2083
        %v2119 = vpop.f32.mrb[0].mxu0
        %v2120 = vadd.f32 0.0, %v2119
        %v2121 = vpop.f32.mrb[0].mxu0
        %v2122 = vadd.f32 0.0, %v2121
        %v2123 = vpop.f32.mrb[0].mxu0
        %v2124 = vadd.f32 0.0, %v2123
        %v2125 = vpop.f32.mrb[0].mxu0
        %v2126 = vadd.f32 0.0, %v2125
        %2127 = vdwg.mxu0
        %v2136 = vunpack.c.l.b16 %v1764
        %v2137 = vunpack.c.h.b16 %v1764
        %v2138 = vunpack.c.l.b16 %v1765
        %v2139 = vunpack.c.h.b16 %v1765
        %v2140 = vunpack.c.l.b16 %v1766
        %v2141 = vunpack.c.h.b16 %v1766
        %v2142 = vunpack.c.l.b16 %v1767
        %v2143 = vunpack.c.h.b16 %v1767
        %v2144 = vunpack.c.l.b16 %v1768
        %v2145 = vunpack.c.h.b16 %v1768
        %v2146 = vunpack.c.l.b16 %v1769
        %v2147 = vunpack.c.h.b16 %v1769
        %v2148 = vunpack.c.l.b16 %v1770
        %v2149 = vunpack.c.h.b16 %v1770
        %v2150 = vunpack.c.l.b16 %v1771
        %v2151 = vunpack.c.h.b16 %v1771
        %v2152 = vpack.c.b16 %v2138, %v2136
        %v2153 = vpack.c.b16 %v2139, %v2137
        %v2154 = vpack.c.b16 %v2142, %v2140
        %v2155 = vpack.c.b16 %v2143, %v2141
        %v2156 = vpack.c.b16 %v2146, %v2144
        %v2157 = vpack.c.b16 %v2147, %v2145
        %v2158 = vpack.c.b16 %v2150, %v2148
        %v2159 = vpack.c.b16 %v2151, %v2149
        %v2169 = vsel %vm1800, %v1916, 0
        %2171 = vmatprep.subr.bf16.mxu0 %v2153
        %2172 = vmatpush1.bf16.msra.mxu0 %v2152
        %2173 = vmatprep.subr.bf16.mxu0 %v2155
        %2174 = vmatpush1.bf16.msra.mxu0 %v2154
        %2175 = vmatprep.subr.bf16.mxu0 %v2157
        %2176 = vmatpush1.bf16.msra.mxu0 %v2156
        %2177 = vmatprep.subr.bf16.mxu0 %v2159
        %2178 = vmatpush1.bf16.msra.mxu0 %v2158
        %2179 = vmatprep.subr.bf16.mxu0 0
        %2180 = vmatpush1.bf16.msra.mxu0 0
        %2181 = vmatprep.subr.bf16.mxu0 0
        %2182 = vmatpush1.bf16.msra.mxu0 0
        %2183 = vmatprep.subr.bf16.mxu0 0
        %2184 = vmatpush1.bf16.msra.mxu0 0
        %2185 = vmatprep.subr.bf16.mxu0 0
        %2186 = vmatpush1.bf16.msra.mxu0 0
        %2187 = vmatprep.subr.bf16.mxu0 0
        %2188 = vmatpush1.bf16.msra.mxu0 0
        %2189 = vmatprep.subr.bf16.mxu0 0
        %2190 = vmatpush1.bf16.msra.mxu0 0
        %2191 = vmatprep.subr.bf16.mxu0 0
        %2192 = vmatpush1.bf16.msra.mxu0 0
        %2193 = vmatprep.subr.bf16.mxu0 0
        %2194 = vmatpush1.bf16.msra.mxu0 0
        %2195 = vmatprep.subr.bf16.mxu0 0
        %2196 = vmatpush1.bf16.msra.mxu0 0
        %2197 = vmatprep.subr.bf16.mxu0 0
        %2198 = vmatpush1.bf16.msra.mxu0 0
        %2199 = vmatprep.subr.bf16.mxu0 0
        %2200 = vmatpush1.bf16.msra.mxu0 0
        %2201 = vmatprep.subr.bf16.mxu0 0
        %2202 = vmatpush1.bf16.msra.mxu0 0
        %2203 = vmatprep.mubr.bf16.mxu0 0
        %2204 = vmatmul.mubr.bf16.gmra.mrb[0].mxu0 %v2169
        %v2205 = vpop.f32.mrb[0].mxu0
        %v2206 = vadd.f32 %v2120, %v2205
        %v2207 = vpop.f32.mrb[0].mxu0
        %v2208 = vadd.f32 %v2122, %v2207
        %v2209 = vpop.f32.mrb[0].mxu0
        %v2210 = vadd.f32 %v2124, %v2209
        %v2211 = vpop.f32.mrb[0].mxu0
        %v2212 = vadd.f32 %v2126, %v2211
        %2213 = vdwg.mxu0
        %v2215 = vsel %vm1800, %v1753, 0
        %v2218 = vsel %vm1800, %v1757, 0
        %2220 = vmatprep.subr.bf16.mxu0 0
        %2221 = vmatpush1.bf16.xpose.msra.mxu0 %v2218
        %2222 = vmatprep.subr.bf16.mxu0 0
        %2223 = vmatpush1.bf16.xpose.msra.mxu0 0
        %2224 = vmatprep.subr.bf16.mxu0 0
        %2225 = vmatpush1.bf16.xpose.msra.mxu0 0
        %2226 = vmatprep.subr.bf16.mxu0 0
        %2227 = vmatpush1.bf16.xpose.msra.mxu0 0
        %2228 = vmatprep.subr.bf16.mxu0 0
        %2229 = vmatpush1.bf16.xpose.msra.mxu0 0
        %2230 = vmatprep.subr.bf16.mxu0 0
        %2231 = vmatpush1.bf16.xpose.msra.mxu0 0
        %2232 = vmatprep.subr.bf16.mxu0 0
        %2233 = vmatpush1.bf16.xpose.msra.mxu0 0
        %2234 = vmatprep.subr.bf16.mxu0 0
        %2235 = vmatpush1.bf16.xpose.msra.mxu0 0
        %2236 = vmatprep.subr.bf16.mxu0 0
        %2237 = vmatpush1.bf16.xpose.msra.mxu0 0
        %2238 = vmatprep.subr.bf16.mxu0 0
        %2239 = vmatpush1.bf16.xpose.msra.mxu0 0
        %2240 = vmatprep.subr.bf16.mxu0 0
        %2241 = vmatpush1.bf16.xpose.msra.mxu0 0
        %2242 = vmatprep.subr.bf16.mxu0 0
        %2243 = vmatpush1.bf16.xpose.msra.mxu0 0
        %2244 = vmatprep.subr.bf16.mxu0 0
        %2245 = vmatpush1.bf16.xpose.msra.mxu0 0
        %2246 = vmatprep.subr.bf16.mxu0 0
        %2247 = vmatpush1.bf16.xpose.msra.mxu0 0
        %2248 = vmatprep.subr.bf16.mxu0 0
        %2249 = vmatpush1.bf16.xpose.msra.mxu0 0
        %2250 = vmatprep.subr.bf16.mxu0 0
        %2251 = vmatpush1.bf16.xpose.msra.mxu0 0
        %2252 = vmatprep.mubr.bf16.mxu0 0
        %2253 = vmatmul.mubr.bf16.gmra.mrb[0].mxu0 %v2215
        %v2254 = vpop.f32.mrb[0].mxu0
        %v2255 = vadd.f32 %v1799, %v2254
        %v2256 = vpop.f32.mrb[0].mxu0
        %v2257 = vpop.f32.mrb[0].mxu0
        %v2258 = vadd.f32 %v1799, %v2257
        %v2259 = vpop.f32.mrb[0].mxu0
        %2260 = vdwg.mxu0
        %v2261 = vsel %vm1848, %v2255, -inf
        %2262 = vmax.xlane.f32.xlu0 %v2261
        %v2263 = vpop.xlane.xlu0 %2262
        %v2264 = vsel %vm1848, %v2258, -inf
        %2265 = vmax.xlane.f32.xlu0 %v2264
        %v2266 = vpop.xlane.xlu0 %2265
        %v2267 = vsub.f32 %v2255, %v2263
        %v2268 = vsub.f32 %v2258, %v2266
        %v2269 = vmul.f32 %v2267, 1.442695
        %v2270 = vpow.pop %v2269
        %v2271 = vmul.f32 %v2268, 1.442695
        %v2272 = vpow.pop %v2271
        %v2273 = vsel %vm1848, %v2270, 0.0
        %2274 = vadd.xlane.f32.xlu0 %v2273
        %v2275 = vpop.xlane.xlu0 %2274
        %v2276 = vsel %vm1848, %v2272, 0.0
        %2277 = vadd.xlane.f32.xlu0 %v2276
        %v2278 = vpop.xlane.xlu0 %2277
        %v2279 = vrcp.pop %v2275
        %v2280 = vrcp.pop %v2278
        %v2281 = vmul.f32 %v2270, %v2279
        %v2282 = vmul.f32 %v2272, %v2280
        %v2283 = vpack.c.bf16 %v2282, %v2281
        %v2285 = vsel %vm1848, %v2283, 0
        %2287 = vmatprep.subr.bf16.mxu0 0
        %2288 = vmatpush1.bf16.msra.mxu0 %v1761
        %2289 = vmatprep.subr.bf16.mxu0 0
        %2290 = vmatpush1.bf16.msra.mxu0 0
        %2291 = vmatprep.subr.bf16.mxu0 0
        %2292 = vmatpush1.bf16.msra.mxu0 0
        %2293 = vmatprep.subr.bf16.mxu0 0
        %2294 = vmatpush1.bf16.msra.mxu0 0
        %2295 = vmatprep.subr.bf16.mxu0 0
        %2296 = vmatpush1.bf16.msra.mxu0 0
        %2297 = vmatprep.subr.bf16.mxu0 0
        %2298 = vmatpush1.bf16.msra.mxu0 0
        %2299 = vmatprep.subr.bf16.mxu0 0
        %2300 = vmatpush1.bf16.msra.mxu0 0
        %2301 = vmatprep.subr.bf16.mxu0 0
        %2302 = vmatpush1.bf16.msra.mxu0 0
        %2303 = vmatprep.subr.bf16.mxu0 0
        %2304 = vmatpush1.bf16.msra.mxu0 0
        %2305 = vmatprep.subr.bf16.mxu0 0
        %2306 = vmatpush1.bf16.msra.mxu0 0
        %2307 = vmatprep.subr.bf16.mxu0 0
        %2308 = vmatpush1.bf16.msra.mxu0 0
        %2309 = vmatprep.subr.bf16.mxu0 0
        %2310 = vmatpush1.bf16.msra.mxu0 0
        %2311 = vmatprep.subr.bf16.mxu0 0
        %2312 = vmatpush1.bf16.msra.mxu0 0
        %2313 = vmatprep.subr.bf16.mxu0 0
        %2314 = vmatpush1.bf16.msra.mxu0 0
        %2315 = vmatprep.subr.bf16.mxu0 0
        %2316 = vmatpush1.bf16.msra.mxu0 0
        %2317 = vmatprep.subr.bf16.mxu0 0
        %2318 = vmatpush1.bf16.msra.mxu0 0
        %2319 = vmatprep.mubr.bf16.mxu0 0
        %2320 = vmatmul.mubr.bf16.gmra.mrb[0].mxu0 %v2285
        %v2321 = vpop.f32.mrb[0].mxu0
        %v2322 = vadd.f32 0.0, %v2321
        %v2323 = vpop.f32.mrb[0].mxu0
        %v2324 = vpop.f32.mrb[0].mxu0
        %v2325 = vadd.f32 0.0, %v2324
        %v2326 = vpop.f32.mrb[0].mxu0
        %2327 = vdwg.mxu0
        %v2328 = vpack.c.bf16 %v2325, %v2322
        %v2337 = vunpack.c.l.b16 %v1780
        %v2338 = vunpack.c.h.b16 %v1780
        %v2339 = vunpack.c.l.b16 %v1781
        %v2340 = vunpack.c.h.b16 %v1781
        %v2341 = vunpack.c.l.b16 %v1782
        %v2342 = vunpack.c.h.b16 %v1782
        %v2343 = vunpack.c.l.b16 %v1783
        %v2344 = vunpack.c.h.b16 %v1783
        %v2345 = vunpack.c.l.b16 %v1784
        %v2346 = vunpack.c.h.b16 %v1784
        %v2347 = vunpack.c.l.b16 %v1785
        %v2348 = vunpack.c.h.b16 %v1785
        %v2349 = vunpack.c.l.b16 %v1786
        %v2350 = vunpack.c.h.b16 %v1786
        %v2351 = vunpack.c.l.b16 %v1787
        %v2352 = vunpack.c.h.b16 %v1787
        %v2353 = vpack.c.b16 %v2339, %v2337
        %v2354 = vpack.c.b16 %v2340, %v2338
        %v2355 = vpack.c.b16 %v2343, %v2341
        %v2356 = vpack.c.b16 %v2344, %v2342
        %v2357 = vpack.c.b16 %v2347, %v2345
        %v2358 = vpack.c.b16 %v2348, %v2346
        %v2359 = vpack.c.b16 %v2351, %v2349
        %v2360 = vpack.c.b16 %v2352, %v2350
        %v2370 = vsel %vm1800, %v2328, 0
        %2372 = vmatprep.subr.bf16.mxu0 %v2354
        %2373 = vmatpush1.bf16.msra.mxu0 %v2353
        %2374 = vmatprep.subr.bf16.mxu0 %v2356
        %2375 = vmatpush1.bf16.msra.mxu0 %v2355
        %2376 = vmatprep.subr.bf16.mxu0 %v2358
        %2377 = vmatpush1.bf16.msra.mxu0 %v2357
        %2378 = vmatprep.subr.bf16.mxu0 %v2360
        %2379 = vmatpush1.bf16.msra.mxu0 %v2359
        %2380 = vmatprep.subr.bf16.mxu0 0
        %2381 = vmatpush1.bf16.msra.mxu0 0
        %2382 = vmatprep.subr.bf16.mxu0 0
        %2383 = vmatpush1.bf16.msra.mxu0 0
        %2384 = vmatprep.subr.bf16.mxu0 0
        %2385 = vmatpush1.bf16.msra.mxu0 0
        %2386 = vmatprep.subr.bf16.mxu0 0
        %2387 = vmatpush1.bf16.msra.mxu0 0
        %2388 = vmatprep.subr.bf16.mxu0 0
        %2389 = vmatpush1.bf16.msra.mxu0 0
        %2390 = vmatprep.subr.bf16.mxu0 0
        %2391 = vmatpush1.bf16.msra.mxu0 0
        %2392 = vmatprep.subr.bf16.mxu0 0
        %2393 = vmatpush1.bf16.msra.mxu0 0
        %2394 = vmatprep.subr.bf16.mxu0 0
        %2395 = vmatpush1.bf16.msra.mxu0 0
        %2396 = vmatprep.subr.bf16.mxu0 0
        %2397 = vmatpush1.bf16.msra.mxu0 0
        %2398 = vmatprep.subr.bf16.mxu0 0
        %2399 = vmatpush1.bf16.msra.mxu0 0
        %2400 = vmatprep.subr.bf16.mxu0 0
        %2401 = vmatpush1.bf16.msra.mxu0 0
        %2402 = vmatprep.subr.bf16.mxu0 0
        %2403 = vmatpush1.bf16.msra.mxu0 0
        %2404 = vmatprep.mubr.bf16.mxu0 0
        %2405 = vmatmul.mubr.bf16.gmra.mrb[0].mxu0 %v2370
        %v2406 = vpop.f32.mrb[0].mxu0
        %v2407 = vadd.f32 0.0, %v2406
        %v2408 = vpop.f32.mrb[0].mxu0
        %v2409 = vadd.f32 0.0, %v2408
        %v2410 = vpop.f32.mrb[0].mxu0
        %v2411 = vadd.f32 0.0, %v2410
        %v2412 = vpop.f32.mrb[0].mxu0
        %v2413 = vadd.f32 0.0, %v2412
        %2414 = vdwg.mxu0
        %v2415 = vadd.f32 %v2206, %v2407
        %v2416 = vadd.f32 %v2208, %v2409
        %v2417 = vadd.f32 %v2210, %v2411
        %v2418 = vadd.f32 %v2212, %v2413
        %2420 = vrot.lane.b32.xlu0 %v1753, 64
        %v2421 = vpop.permute.xlu0 %2420
        %2423 = vrot.lane.b32.xlu0 %v1757, 64
        %v2424 = vpop.permute.xlu0 %2423
        %v2426 = vsel %vm1800, %v2421, 0
        %v2429 = vsel %vm1800, %v2424, 0
        %2431 = vmatprep.subr.bf16.mxu0 0
        %2432 = vmatpush1.bf16.xpose.msra.mxu0 %v2429
        %2433 = vmatprep.subr.bf16.mxu0 0
        %2434 = vmatpush1.bf16.xpose.msra.mxu0 0
        %2435 = vmatprep.subr.bf16.mxu0 0
        %2436 = vmatpush1.bf16.xpose.msra.mxu0 0
        %2437 = vmatprep.subr.bf16.mxu0 0
        %2438 = vmatpush1.bf16.xpose.msra.mxu0 0
        %2439 = vmatprep.subr.bf16.mxu0 0
        %2440 = vmatpush1.bf16.xpose.msra.mxu0 0
        %2441 = vmatprep.subr.bf16.mxu0 0
        %2442 = vmatpush1.bf16.xpose.msra.mxu0 0
        %2443 = vmatprep.subr.bf16.mxu0 0
        %2444 = vmatpush1.bf16.xpose.msra.mxu0 0
        %2445 = vmatprep.subr.bf16.mxu0 0
        %2446 = vmatpush1.bf16.xpose.msra.mxu0 0
        %2447 = vmatprep.subr.bf16.mxu0 0
        %2448 = vmatpush1.bf16.xpose.msra.mxu0 0
        %2449 = vmatprep.subr.bf16.mxu0 0
        %2450 = vmatpush1.bf16.xpose.msra.mxu0 0
        %2451 = vmatprep.subr.bf16.mxu0 0
        %2452 = vmatpush1.bf16.xpose.msra.mxu0 0
        %2453 = vmatprep.subr.bf16.mxu0 0
        %2454 = vmatpush1.bf16.xpose.msra.mxu0 0
        %2455 = vmatprep.subr.bf16.mxu0 0
        %2456 = vmatpush1.bf16.xpose.msra.mxu0 0
        %2457 = vmatprep.subr.bf16.mxu0 0
        %2458 = vmatpush1.bf16.xpose.msra.mxu0 0
        %2459 = vmatprep.subr.bf16.mxu0 0
        %2460 = vmatpush1.bf16.xpose.msra.mxu0 0
        %2461 = vmatprep.subr.bf16.mxu0 0
        %2462 = vmatpush1.bf16.xpose.msra.mxu0 0
        %2463 = vmatprep.mubr.bf16.mxu0 0
        %2464 = vmatmul.mubr.bf16.gmra.mrb[0].mxu0 %v2426
        %v2465 = vpop.f32.mrb[0].mxu0
        %v2466 = vadd.f32 %v1799, %v2465
        %v2467 = vpop.f32.mrb[0].mxu0
        %v2468 = vpop.f32.mrb[0].mxu0
        %v2469 = vadd.f32 %v1799, %v2468
        %v2470 = vpop.f32.mrb[0].mxu0
        %2471 = vdwg.mxu0
        %v2472 = vsel %vm1848, %v2466, -inf
        %2473 = vmax.xlane.f32.xlu0 %v2472
        %v2474 = vpop.xlane.xlu0 %2473
        %v2475 = vsel %vm1848, %v2469, -inf
        %2476 = vmax.xlane.f32.xlu0 %v2475
        %v2477 = vpop.xlane.xlu0 %2476
        %v2478 = vsub.f32 %v2466, %v2474
        %v2479 = vsub.f32 %v2469, %v2477
        %v2480 = vmul.f32 %v2478, 1.442695
        %v2481 = vpow.pop %v2480
        %v2482 = vmul.f32 %v2479, 1.442695
        %v2483 = vpow.pop %v2482
        %v2484 = vsel %vm1848, %v2481, 0.0
        %2485 = vadd.xlane.f32.xlu0 %v2484
        %v2486 = vpop.xlane.xlu0 %2485
        %v2487 = vsel %vm1848, %v2483, 0.0
        %2488 = vadd.xlane.f32.xlu0 %v2487
        %v2489 = vpop.xlane.xlu0 %2488
        %v2490 = vrcp.pop %v2486
        %v2491 = vrcp.pop %v2489
        %v2492 = vmul.f32 %v2481, %v2490
        %v2493 = vmul.f32 %v2483, %v2491
        %v2494 = vpack.c.bf16 %v2493, %v2492
        %2496 = vrot.lane.b32.xlu0 %v1761, 64
        %v2497 = vpop.permute.xlu0 %2496
        %v2500 = vsel %vm1848, %v2494, 0
        %2502 = vmatprep.subr.bf16.mxu0 0
        %2503 = vmatpush1.bf16.msra.mxu0 %v2497
        %2504 = vmatprep.subr.bf16.mxu0 0
        %2505 = vmatpush1.bf16.msra.mxu0 0
        %2506 = vmatprep.subr.bf16.mxu0 0
        %2507 = vmatpush1.bf16.msra.mxu0 0
        %2508 = vmatprep.subr.bf16.mxu0 0
        %2509 = vmatpush1.bf16.msra.mxu0 0
        %2510 = vmatprep.subr.bf16.mxu0 0
        %2511 = vmatpush1.bf16.msra.mxu0 0
        %2512 = vmatprep.subr.bf16.mxu0 0
        %2513 = vmatpush1.bf16.msra.mxu0 0
        %2514 = vmatprep.subr.bf16.mxu0 0
        %2515 = vmatpush1.bf16.msra.mxu0 0
        %2516 = vmatprep.subr.bf16.mxu0 0
        %2517 = vmatpush1.bf16.msra.mxu0 0
        %2518 = vmatprep.subr.bf16.mxu0 0
        %2519 = vmatpush1.bf16.msra.mxu0 0
        %2520 = vmatprep.subr.bf16.mxu0 0
        %2521 = vmatpush1.bf16.msra.mxu0 0
        %2522 = vmatprep.subr.bf16.mxu0 0
        %2523 = vmatpush1.bf16.msra.mxu0 0
        %2524 = vmatprep.subr.bf16.mxu0 0
        %2525 = vmatpush1.bf16.msra.mxu0 0
        %2526 = vmatprep.subr.bf16.mxu0 0
        %2527 = vmatpush1.bf16.msra.mxu0 0
        %2528 = vmatprep.subr.bf16.mxu0 0
        %2529 = vmatpush1.bf16.msra.mxu0 0
        %2530 = vmatprep.subr.bf16.mxu0 0
        %2531 = vmatpush1.bf16.msra.mxu0 0
        %2532 = vmatprep.subr.bf16.mxu0 0
        %2533 = vmatpush1.bf16.msra.mxu0 0
        %2534 = vmatprep.mubr.bf16.mxu0 0
        %2535 = vmatmul.mubr.bf16.gmra.mrb[0].mxu0 %v2500
        %v2536 = vpop.f32.mrb[0].mxu0
        %v2537 = vadd.f32 0.0, %v2536
        %v2538 = vpop.f32.mrb[0].mxu0
        %v2539 = vpop.f32.mrb[0].mxu0
        %v2540 = vadd.f32 0.0, %v2539
        %v2541 = vpop.f32.mrb[0].mxu0
        %2542 = vdwg.mxu0
        %v2543 = vpack.c.bf16 %v2540, %v2537
        %v2552 = vunpack.c.l.b16 %v1788
        %v2553 = vunpack.c.h.b16 %v1788
        %v2554 = vunpack.c.l.b16 %v1789
        %v2555 = vunpack.c.h.b16 %v1789
        %v2556 = vunpack.c.l.b16 %v1790
        %v2557 = vunpack.c.h.b16 %v1790
        %v2558 = vunpack.c.l.b16 %v1791
        %v2559 = vunpack.c.h.b16 %v1791
        %v2560 = vunpack.c.l.b16 %v1792
        %v2561 = vunpack.c.h.b16 %v1792
        %v2562 = vunpack.c.l.b16 %v1793
        %v2563 = vunpack.c.h.b16 %v1793
        %v2564 = vunpack.c.l.b16 %v1794
        %v2565 = vunpack.c.h.b16 %v1794
        %v2566 = vunpack.c.l.b16 %v1795
        %v2567 = vunpack.c.h.b16 %v1795
        %v2568 = vpack.c.b16 %v2554, %v2552
        %v2569 = vpack.c.b16 %v2555, %v2553
        %v2570 = vpack.c.b16 %v2558, %v2556
        %v2571 = vpack.c.b16 %v2559, %v2557
        %v2572 = vpack.c.b16 %v2562, %v2560
        %v2573 = vpack.c.b16 %v2563, %v2561
        %v2574 = vpack.c.b16 %v2566, %v2564
        %v2575 = vpack.c.b16 %v2567, %v2565
        %v2585 = vsel %vm1800, %v2543, 0
        %2587 = vmatprep.subr.bf16.mxu0 %v2569
        %2588 = vmatpush1.bf16.msra.mxu0 %v2568
        %2589 = vmatprep.subr.bf16.mxu0 %v2571
        %2590 = vmatpush1.bf16.msra.mxu0 %v2570
        %2591 = vmatprep.subr.bf16.mxu0 %v2573
        %2592 = vmatpush1.bf16.msra.mxu0 %v2572
        %2593 = vmatprep.subr.bf16.mxu0 %v2575
        %2594 = vmatpush1.bf16.msra.mxu0 %v2574
        %2595 = vmatprep.subr.bf16.mxu0 0
        %2596 = vmatpush1.bf16.msra.mxu0 0
        %2597 = vmatprep.subr.bf16.mxu0 0
        %2598 = vmatpush1.bf16.msra.mxu0 0
        %2599 = vmatprep.subr.bf16.mxu0 0
        %2600 = vmatpush1.bf16.msra.mxu0 0
        %2601 = vmatprep.subr.bf16.mxu0 0
        %2602 = vmatpush1.bf16.msra.mxu0 0
        %2603 = vmatprep.subr.bf16.mxu0 0
        %2604 = vmatpush1.bf16.msra.mxu0 0
        %2605 = vmatprep.subr.bf16.mxu0 0
        %2606 = vmatpush1.bf16.msra.mxu0 0
        %2607 = vmatprep.subr.bf16.mxu0 0
        %2608 = vmatpush1.bf16.msra.mxu0 0
        %2609 = vmatprep.subr.bf16.mxu0 0
        %2610 = vmatpush1.bf16.msra.mxu0 0
        %2611 = vmatprep.subr.bf16.mxu0 0
        %2612 = vmatpush1.bf16.msra.mxu0 0
        %2613 = vmatprep.subr.bf16.mxu0 0
        %2614 = vmatpush1.bf16.msra.mxu0 0
        %2615 = vmatprep.subr.bf16.mxu0 0
        %2616 = vmatpush1.bf16.msra.mxu0 0
        %2617 = vmatprep.subr.bf16.mxu0 0
        %2618 = vmatpush1.bf16.msra.mxu0 0
        %2619 = vmatprep.mubr.bf16.mxu0 0
        %2620 = vmatmul.mubr.bf16.gmra.mrb[0].mxu0 %v2585
        %v2621 = vpop.f32.mrb[0].mxu0
        %v2622 = vadd.f32 0.0, %v2621
        %v2623 = vpop.f32.mrb[0].mxu0
        %v2624 = vadd.f32 0.0, %v2623
        %v2625 = vpop.f32.mrb[0].mxu0
        %v2626 = vadd.f32 0.0, %v2625
        %v2627 = vpop.f32.mrb[0].mxu0
        %v2628 = vadd.f32 0.0, %v2627
        %2629 = vdwg.mxu0
        %v2630 = vadd.f32 %v2415, %v2622
        %v2631 = vadd.f32 %v2416, %v2624
        %v2632 = vadd.f32 %v2417, %v2626
        %v2633 = vadd.f32 %v2418, %v2628
        %v2634 = vlaneseq
        %v2635 = vshrl.u32 %v2634, 7
        %v2636 = vsub.s32 1, %v2635
        %v2637 = vrot.slane %v854, %v2636
        %v2639 = vsel %vm1800, %v1754, 0
        %v2642 = vsel %vm1800, %v1758, 0
        %2644 = vmatprep.subr.bf16.mxu0 0
        %2645 = vmatpush1.bf16.xpose.msra.mxu0 %v2642
        %2646 = vmatprep.subr.bf16.mxu0 0
        %2647 = vmatpush1.bf16.xpose.msra.mxu0 0
        %2648 = vmatprep.subr.bf16.mxu0 0
        %2649 = vmatpush1.bf16.xpose.msra.mxu0 0
        %2650 = vmatprep.subr.bf16.mxu0 0
        %2651 = vmatpush1.bf16.xpose.msra.mxu0 0
        %2652 = vmatprep.subr.bf16.mxu0 0
        %2653 = vmatpush1.bf16.xpose.msra.mxu0 0
        %2654 = vmatprep.subr.bf16.mxu0 0
        %2655 = vmatpush1.bf16.xpose.msra.mxu0 0
        %2656 = vmatprep.subr.bf16.mxu0 0
        %2657 = vmatpush1.bf16.xpose.msra.mxu0 0
        %2658 = vmatprep.subr.bf16.mxu0 0
        %2659 = vmatpush1.bf16.xpose.msra.mxu0 0
        %2660 = vmatprep.subr.bf16.mxu0 0
        %2661 = vmatpush1.bf16.xpose.msra.mxu0 0
        %2662 = vmatprep.subr.bf16.mxu0 0
        %2663 = vmatpush1.bf16.xpose.msra.mxu0 0
        %2664 = vmatprep.subr.bf16.mxu0 0
        %2665 = vmatpush1.bf16.xpose.msra.mxu0 0
        %2666 = vmatprep.subr.bf16.mxu0 0
        %2667 = vmatpush1.bf16.xpose.msra.mxu0 0
        %2668 = vmatprep.subr.bf16.mxu0 0
        %2669 = vmatpush1.bf16.xpose.msra.mxu0 0
        %2670 = vmatprep.subr.bf16.mxu0 0
        %2671 = vmatpush1.bf16.xpose.msra.mxu0 0
        %2672 = vmatprep.subr.bf16.mxu0 0
        %2673 = vmatpush1.bf16.xpose.msra.mxu0 0
        %2674 = vmatprep.subr.bf16.mxu0 0
        %2675 = vmatpush1.bf16.xpose.msra.mxu0 0
        %2676 = vmatprep.mubr.bf16.mxu0 0
        %2677 = vmatmul.mubr.bf16.gmra.mrb[0].mxu0 %v2639
        %v2678 = vpop.f32.mrb[0].mxu0
        %v2679 = vadd.f32 %v2637, %v2678
        %v2680 = vpop.f32.mrb[0].mxu0
        %v2681 = vpop.f32.mrb[0].mxu0
        %v2682 = vadd.f32 %v2637, %v2681
        %v2683 = vpop.f32.mrb[0].mxu0
        %2684 = vdwg.mxu0
        %v2685 = vsel %vm1848, %v2679, -inf
        %2686 = vmax.xlane.f32.xlu0 %v2685
        %v2687 = vpop.xlane.xlu0 %2686
        %v2688 = vsel %vm1848, %v2682, -inf
        %2689 = vmax.xlane.f32.xlu0 %v2688
        %v2690 = vpop.xlane.xlu0 %2689
        %v2691 = vsub.f32 %v2679, %v2687
        %v2692 = vsub.f32 %v2682, %v2690
        %v2693 = vmul.f32 %v2691, 1.442695
        %v2694 = vpow.pop %v2693
        %v2695 = vmul.f32 %v2692, 1.442695
        %v2696 = vpow.pop %v2695
        %v2697 = vsel %vm1848, %v2694, 0.0
        %2698 = vadd.xlane.f32.xlu0 %v2697
        %v2699 = vpop.xlane.xlu0 %2698
        %v2700 = vsel %vm1848, %v2696, 0.0
        %2701 = vadd.xlane.f32.xlu0 %v2700
        %v2702 = vpop.xlane.xlu0 %2701
        %v2703 = vrcp.pop %v2699
        %v2704 = vrcp.pop %v2702
        %v2705 = vmul.f32 %v2694, %v2703
        %v2706 = vmul.f32 %v2696, %v2704
        %v2707 = vpack.c.bf16 %v2706, %v2705
        %v2709 = vsel %vm1848, %v2707, 0
        %2711 = vmatprep.subr.bf16.mxu0 0
        %2712 = vmatpush1.bf16.msra.mxu0 %v1762
        %2713 = vmatprep.subr.bf16.mxu0 0
        %2714 = vmatpush1.bf16.msra.mxu0 0
        %2715 = vmatprep.subr.bf16.mxu0 0
        %2716 = vmatpush1.bf16.msra.mxu0 0
        %2717 = vmatprep.subr.bf16.mxu0 0
        %2718 = vmatpush1.bf16.msra.mxu0 0
        %2719 = vmatprep.subr.bf16.mxu0 0
        %2720 = vmatpush1.bf16.msra.mxu0 0
        %2721 = vmatprep.subr.bf16.mxu0 0
        %2722 = vmatpush1.bf16.msra.mxu0 0
        %2723 = vmatprep.subr.bf16.mxu0 0
        %2724 = vmatpush1.bf16.msra.mxu0 0
        %2725 = vmatprep.subr.bf16.mxu0 0
        %2726 = vmatpush1.bf16.msra.mxu0 0
        %2727 = vmatprep.subr.bf16.mxu0 0
        %2728 = vmatpush1.bf16.msra.mxu0 0
        %2729 = vmatprep.subr.bf16.mxu0 0
        %2730 = vmatpush1.bf16.msra.mxu0 0
        %2731 = vmatprep.subr.bf16.mxu0 0
        %2732 = vmatpush1.bf16.msra.mxu0 0
        %2733 = vmatprep.subr.bf16.mxu0 0
        %2734 = vmatpush1.bf16.msra.mxu0 0
        %2735 = vmatprep.subr.bf16.mxu0 0
        %2736 = vmatpush1.bf16.msra.mxu0 0
        %2737 = vmatprep.subr.bf16.mxu0 0
        %2738 = vmatpush1.bf16.msra.mxu0 0
        %2739 = vmatprep.subr.bf16.mxu0 0
        %2740 = vmatpush1.bf16.msra.mxu0 0
        %2741 = vmatprep.subr.bf16.mxu0 0
        %2742 = vmatpush1.bf16.msra.mxu0 0
        %2743 = vmatprep.mubr.bf16.mxu0 0
        %2744 = vmatmul.mubr.bf16.gmra.mrb[0].mxu0 %v2709
        %v2745 = vpop.f32.mrb[0].mxu0
        %v2746 = vadd.f32 0.0, %v2745
        %v2747 = vpop.f32.mrb[0].mxu0
        %v2748 = vpop.f32.mrb[0].mxu0
        %v2749 = vadd.f32 0.0, %v2748
        %v2750 = vpop.f32.mrb[0].mxu0
        %2751 = vdwg.mxu0
        %v2752 = vpack.c.bf16 %v2749, %v2746
        %2754 = vrot.lane.b32.xlu0 %v1754, 64
        %v2755 = vpop.permute.xlu0 %2754
        %2757 = vrot.lane.b32.xlu0 %v1758, 64
        %v2758 = vpop.permute.xlu0 %2757
        %v2760 = vsel %vm1800, %v2755, 0
        %v2763 = vsel %vm1800, %v2758, 0
        %2765 = vmatprep.subr.bf16.mxu0 0
        %2766 = vmatpush1.bf16.xpose.msra.mxu0 %v2763
        %2767 = vmatprep.subr.bf16.mxu0 0
        %2768 = vmatpush1.bf16.xpose.msra.mxu0 0
        %2769 = vmatprep.subr.bf16.mxu0 0
        %2770 = vmatpush1.bf16.xpose.msra.mxu0 0
        %2771 = vmatprep.subr.bf16.mxu0 0
        %2772 = vmatpush1.bf16.xpose.msra.mxu0 0
        %2773 = vmatprep.subr.bf16.mxu0 0
        %2774 = vmatpush1.bf16.xpose.msra.mxu0 0
        %2775 = vmatprep.subr.bf16.mxu0 0
        %2776 = vmatpush1.bf16.xpose.msra.mxu0 0
        %2777 = vmatprep.subr.bf16.mxu0 0
        %2778 = vmatpush1.bf16.xpose.msra.mxu0 0
        %2779 = vmatprep.subr.bf16.mxu0 0
        %2780 = vmatpush1.bf16.xpose.msra.mxu0 0
        %2781 = vmatprep.subr.bf16.mxu0 0
        %2782 = vmatpush1.bf16.xpose.msra.mxu0 0
        %2783 = vmatprep.subr.bf16.mxu0 0
        %2784 = vmatpush1.bf16.xpose.msra.mxu0 0
        %2785 = vmatprep.subr.bf16.mxu0 0
        %2786 = vmatpush1.bf16.xpose.msra.mxu0 0
        %2787 = vmatprep.subr.bf16.mxu0 0
        %2788 = vmatpush1.bf16.xpose.msra.mxu0 0
        %2789 = vmatprep.subr.bf16.mxu0 0
        %2790 = vmatpush1.bf16.xpose.msra.mxu0 0
        %2791 = vmatprep.subr.bf16.mxu0 0
        %2792 = vmatpush1.bf16.xpose.msra.mxu0 0
        %2793 = vmatprep.subr.bf16.mxu0 0
        %2794 = vmatpush1.bf16.xpose.msra.mxu0 0
        %2795 = vmatprep.subr.bf16.mxu0 0
        %2796 = vmatpush1.bf16.xpose.msra.mxu0 0
        %2797 = vmatprep.mubr.bf16.mxu0 0
        %2798 = vmatmul.mubr.bf16.gmra.mrb[0].mxu0 %v2760
        %v2799 = vpop.f32.mrb[0].mxu0
        %v2800 = vadd.f32 %v2637, %v2799
        %v2801 = vpop.f32.mrb[0].mxu0
        %v2802 = vpop.f32.mrb[0].mxu0
        %v2803 = vadd.f32 %v2637, %v2802
        %v2804 = vpop.f32.mrb[0].mxu0
        %2805 = vdwg.mxu0
        %v2806 = vsel %vm1848, %v2800, -inf
        %2807 = vmax.xlane.f32.xlu0 %v2806
        %v2808 = vpop.xlane.xlu0 %2807
        %v2809 = vsel %vm1848, %v2803, -inf
        %2810 = vmax.xlane.f32.xlu0 %v2809
        %v2811 = vpop.xlane.xlu0 %2810
        %v2812 = vsub.f32 %v2800, %v2808
        %v2813 = vsub.f32 %v2803, %v2811
        %v2814 = vmul.f32 %v2812, 1.442695
        %v2815 = vpow.pop %v2814
        %v2816 = vmul.f32 %v2813, 1.442695
        %v2817 = vpow.pop %v2816
        %v2818 = vsel %vm1848, %v2815, 0.0
        %2819 = vadd.xlane.f32.xlu0 %v2818
        %v2820 = vpop.xlane.xlu0 %2819
        %v2821 = vsel %vm1848, %v2817, 0.0
        %2822 = vadd.xlane.f32.xlu0 %v2821
        %v2823 = vpop.xlane.xlu0 %2822
        %v2824 = vrcp.pop %v2820
        %v2825 = vrcp.pop %v2823
        %v2826 = vmul.f32 %v2815, %v2824
        %v2827 = vmul.f32 %v2817, %v2825
        %v2828 = vpack.c.bf16 %v2827, %v2826
        %2830 = vrot.lane.b32.xlu0 %v1762, 64
        %v2831 = vpop.permute.xlu0 %2830
        %v2834 = vsel %vm1848, %v2828, 0
        %2836 = vmatprep.subr.bf16.mxu0 0
        %2837 = vmatpush1.bf16.msra.mxu0 %v2831
        %2838 = vmatprep.subr.bf16.mxu0 0
        %2839 = vmatpush1.bf16.msra.mxu0 0
        %2840 = vmatprep.subr.bf16.mxu0 0
        %2841 = vmatpush1.bf16.msra.mxu0 0
        %2842 = vmatprep.subr.bf16.mxu0 0
        %2843 = vmatpush1.bf16.msra.mxu0 0
        %2844 = vmatprep.subr.bf16.mxu0 0
        %2845 = vmatpush1.bf16.msra.mxu0 0
        %2846 = vmatprep.subr.bf16.mxu0 0
        %2847 = vmatpush1.bf16.msra.mxu0 0
        %2848 = vmatprep.subr.bf16.mxu0 0
        %2849 = vmatpush1.bf16.msra.mxu0 0
        %2850 = vmatprep.subr.bf16.mxu0 0
        %2851 = vmatpush1.bf16.msra.mxu0 0
        %2852 = vmatprep.subr.bf16.mxu0 0
        %2853 = vmatpush1.bf16.msra.mxu0 0
        %2854 = vmatprep.subr.bf16.mxu0 0
        %2855 = vmatpush1.bf16.msra.mxu0 0
        %2856 = vmatprep.subr.bf16.mxu0 0
        %2857 = vmatpush1.bf16.msra.mxu0 0
        %2858 = vmatprep.subr.bf16.mxu0 0
        %2859 = vmatpush1.bf16.msra.mxu0 0
        %2860 = vmatprep.subr.bf16.mxu0 0
        %2861 = vmatpush1.bf16.msra.mxu0 0
        %2862 = vmatprep.subr.bf16.mxu0 0
        %2863 = vmatpush1.bf16.msra.mxu0 0
        %2864 = vmatprep.subr.bf16.mxu0 0
        %2865 = vmatpush1.bf16.msra.mxu0 0
        %2866 = vmatprep.subr.bf16.mxu0 0
        %2867 = vmatpush1.bf16.msra.mxu0 0
        %2868 = vmatprep.mubr.bf16.mxu0 0
        %2869 = vmatmul.mubr.bf16.gmra.mrb[0].mxu0 %v2834
        %v2870 = vpop.f32.mrb[0].mxu0
        %v2871 = vadd.f32 0.0, %v2870
        %v2872 = vpop.f32.mrb[0].mxu0
        %v2873 = vpop.f32.mrb[0].mxu0
        %v2874 = vadd.f32 0.0, %v2873
        %v2875 = vpop.f32.mrb[0].mxu0
        %2876 = vdwg.mxu0
        %v2877 = vpack.c.bf16 %v2874, %v2871
        %v2879 = vsel %vm1800, %v2877, 0
        %2881 = vmatprep.subr.bf16.mxu0 %v2067
        %2882 = vmatpush1.bf16.msra.mxu0 %v2066
        %2883 = vmatprep.subr.bf16.mxu0 %v2069
        %2884 = vmatpush1.bf16.msra.mxu0 %v2068
        %2885 = vmatprep.subr.bf16.mxu0 %v2071
        %2886 = vmatpush1.bf16.msra.mxu0 %v2070
        %2887 = vmatprep.subr.bf16.mxu0 %v2073
        %2888 = vmatpush1.bf16.msra.mxu0 %v2072
        %2889 = vmatprep.subr.bf16.mxu0 0
        %2890 = vmatpush1.bf16.msra.mxu0 0
        %2891 = vmatprep.subr.bf16.mxu0 0
        %2892 = vmatpush1.bf16.msra.mxu0 0
        %2893 = vmatprep.subr.bf16.mxu0 0
        %2894 = vmatpush1.bf16.msra.mxu0 0
        %2895 = vmatprep.subr.bf16.mxu0 0
        %2896 = vmatpush1.bf16.msra.mxu0 0
        %2897 = vmatprep.subr.bf16.mxu0 0
        %2898 = vmatpush1.bf16.msra.mxu0 0
        %2899 = vmatprep.subr.bf16.mxu0 0
        %2900 = vmatpush1.bf16.msra.mxu0 0
        %2901 = vmatprep.subr.bf16.mxu0 0
        %2902 = vmatpush1.bf16.msra.mxu0 0
        %2903 = vmatprep.subr.bf16.mxu0 0
        %2904 = vmatpush1.bf16.msra.mxu0 0
        %2905 = vmatprep.subr.bf16.mxu0 0
        %2906 = vmatpush1.bf16.msra.mxu0 0
        %2907 = vmatprep.subr.bf16.mxu0 0
        %2908 = vmatpush1.bf16.msra.mxu0 0
        %2909 = vmatprep.subr.bf16.mxu0 0
        %2910 = vmatpush1.bf16.msra.mxu0 0
        %2911 = vmatprep.subr.bf16.mxu0 0
        %2912 = vmatpush1.bf16.msra.mxu0 0
        %2913 = vmatprep.mubr.bf16.mxu0 0
        %2914 = vmatmul.mubr.bf16.gmra.mrb[0].mxu0 %v2879
        %v2915 = vpop.f32.mrb[0].mxu0
        %v2916 = vadd.f32 0.0, %v2915
        %v2917 = vpop.f32.mrb[0].mxu0
        %v2918 = vadd.f32 0.0, %v2917
        %v2919 = vpop.f32.mrb[0].mxu0
        %v2920 = vadd.f32 0.0, %v2919
        %v2921 = vpop.f32.mrb[0].mxu0
        %v2922 = vadd.f32 0.0, %v2921
        %2923 = vdwg.mxu0
        %v2925 = vsel %vm1800, %v2752, 0
        %2927 = vmatprep.subr.bf16.mxu0 %v2153
        %2928 = vmatpush1.bf16.msra.mxu0 %v2152
        %2929 = vmatprep.subr.bf16.mxu0 %v2155
        %2930 = vmatpush1.bf16.msra.mxu0 %v2154
        %2931 = vmatprep.subr.bf16.mxu0 %v2157
        %2932 = vmatpush1.bf16.msra.mxu0 %v2156
        %2933 = vmatprep.subr.bf16.mxu0 %v2159
        %2934 = vmatpush1.bf16.msra.mxu0 %v2158
        %2935 = vmatprep.subr.bf16.mxu0 0
        %2936 = vmatpush1.bf16.msra.mxu0 0
        %2937 = vmatprep.subr.bf16.mxu0 0
        %2938 = vmatpush1.bf16.msra.mxu0 0
        %2939 = vmatprep.subr.bf16.mxu0 0
        %2940 = vmatpush1.bf16.msra.mxu0 0
        %2941 = vmatprep.subr.bf16.mxu0 0
        %2942 = vmatpush1.bf16.msra.mxu0 0
        %2943 = vmatprep.subr.bf16.mxu0 0
        %2944 = vmatpush1.bf16.msra.mxu0 0
        %2945 = vmatprep.subr.bf16.mxu0 0
        %2946 = vmatpush1.bf16.msra.mxu0 0
        %2947 = vmatprep.subr.bf16.mxu0 0
        %2948 = vmatpush1.bf16.msra.mxu0 0
        %2949 = vmatprep.subr.bf16.mxu0 0
        %2950 = vmatpush1.bf16.msra.mxu0 0
        %2951 = vmatprep.subr.bf16.mxu0 0
        %2952 = vmatpush1.bf16.msra.mxu0 0
        %2953 = vmatprep.subr.bf16.mxu0 0
        %2954 = vmatpush1.bf16.msra.mxu0 0
        %2955 = vmatprep.subr.bf16.mxu0 0
        %2956 = vmatpush1.bf16.msra.mxu0 0
        %2957 = vmatprep.subr.bf16.mxu0 0
        %2958 = vmatpush1.bf16.msra.mxu0 0
        %2959 = vmatprep.mubr.bf16.mxu0 0
        %2960 = vmatmul.mubr.bf16.gmra.mrb[0].mxu0 %v2925
        %v2961 = vpop.f32.mrb[0].mxu0
        %v2962 = vadd.f32 %v2916, %v2961
        %v2963 = vpop.f32.mrb[0].mxu0
        %v2964 = vadd.f32 %v2918, %v2963
        %v2965 = vpop.f32.mrb[0].mxu0
        %v2966 = vadd.f32 %v2920, %v2965
        %v2967 = vpop.f32.mrb[0].mxu0
        %v2968 = vadd.f32 %v2922, %v2967
        %2969 = vdwg.mxu0
        %v2971 = vsel %vm1800, %v1755, 0
        %v2974 = vsel %vm1800, %v1759, 0
        %2976 = vmatprep.subr.bf16.mxu0 0
        %2977 = vmatpush1.bf16.xpose.msra.mxu0 %v2974
        %2978 = vmatprep.subr.bf16.mxu0 0
        %2979 = vmatpush1.bf16.xpose.msra.mxu0 0
        %2980 = vmatprep.subr.bf16.mxu0 0
        %2981 = vmatpush1.bf16.xpose.msra.mxu0 0
        %2982 = vmatprep.subr.bf16.mxu0 0
        %2983 = vmatpush1.bf16.xpose.msra.mxu0 0
        %2984 = vmatprep.subr.bf16.mxu0 0
        %2985 = vmatpush1.bf16.xpose.msra.mxu0 0
        %2986 = vmatprep.subr.bf16.mxu0 0
        %2987 = vmatpush1.bf16.xpose.msra.mxu0 0
        %2988 = vmatprep.subr.bf16.mxu0 0
        %2989 = vmatpush1.bf16.xpose.msra.mxu0 0
        %2990 = vmatprep.subr.bf16.mxu0 0
        %2991 = vmatpush1.bf16.xpose.msra.mxu0 0
        %2992 = vmatprep.subr.bf16.mxu0 0
        %2993 = vmatpush1.bf16.xpose.msra.mxu0 0
        %2994 = vmatprep.subr.bf16.mxu0 0
        %2995 = vmatpush1.bf16.xpose.msra.mxu0 0
        %2996 = vmatprep.subr.bf16.mxu0 0
        %2997 = vmatpush1.bf16.xpose.msra.mxu0 0
        %2998 = vmatprep.subr.bf16.mxu0 0
        %2999 = vmatpush1.bf16.xpose.msra.mxu0 0
        %3000 = vmatprep.subr.bf16.mxu0 0
        %3001 = vmatpush1.bf16.xpose.msra.mxu0 0
        %3002 = vmatprep.subr.bf16.mxu0 0
        %3003 = vmatpush1.bf16.xpose.msra.mxu0 0
        %3004 = vmatprep.subr.bf16.mxu0 0
        %3005 = vmatpush1.bf16.xpose.msra.mxu0 0
        %3006 = vmatprep.subr.bf16.mxu0 0
        %3007 = vmatpush1.bf16.xpose.msra.mxu0 0
        %3008 = vmatprep.mubr.bf16.mxu0 0
        %3009 = vmatmul.mubr.bf16.gmra.mrb[0].mxu0 %v2971
        %v3010 = vpop.f32.mrb[0].mxu0
        %v3011 = vadd.f32 %v2637, %v3010
        %v3012 = vpop.f32.mrb[0].mxu0
        %v3013 = vpop.f32.mrb[0].mxu0
        %v3014 = vadd.f32 %v2637, %v3013
        %v3015 = vpop.f32.mrb[0].mxu0
        %3016 = vdwg.mxu0
        %v3017 = vsel %vm1848, %v3011, -inf
        %3018 = vmax.xlane.f32.xlu0 %v3017
        %v3019 = vpop.xlane.xlu0 %3018
        %v3020 = vsel %vm1848, %v3014, -inf
        %3021 = vmax.xlane.f32.xlu0 %v3020
        %v3022 = vpop.xlane.xlu0 %3021
        %v3023 = vsub.f32 %v3011, %v3019
        %v3024 = vsub.f32 %v3014, %v3022
        %v3025 = vmul.f32 %v3023, 1.442695
        %v3026 = vpow.pop %v3025
        %v3027 = vmul.f32 %v3024, 1.442695
        %v3028 = vpow.pop %v3027
        %v3029 = vsel %vm1848, %v3026, 0.0
        %3030 = vadd.xlane.f32.xlu0 %v3029
        %v3031 = vpop.xlane.xlu0 %3030
        %v3032 = vsel %vm1848, %v3028, 0.0
        %3033 = vadd.xlane.f32.xlu0 %v3032
        %v3034 = vpop.xlane.xlu0 %3033
        %v3035 = vrcp.pop %v3031
        %v3036 = vrcp.pop %v3034
        %v3037 = vmul.f32 %v3026, %v3035
        %v3038 = vmul.f32 %v3028, %v3036
        %v3039 = vpack.c.bf16 %v3038, %v3037
        %v3041 = vsel %vm1848, %v3039, 0
        %3043 = vmatprep.subr.bf16.mxu0 0
        %3044 = vmatpush1.bf16.msra.mxu0 %v1763
        %3045 = vmatprep.subr.bf16.mxu0 0
        %3046 = vmatpush1.bf16.msra.mxu0 0
        %3047 = vmatprep.subr.bf16.mxu0 0
        %3048 = vmatpush1.bf16.msra.mxu0 0
        %3049 = vmatprep.subr.bf16.mxu0 0
        %3050 = vmatpush1.bf16.msra.mxu0 0
        %3051 = vmatprep.subr.bf16.mxu0 0
        %3052 = vmatpush1.bf16.msra.mxu0 0
        %3053 = vmatprep.subr.bf16.mxu0 0
        %3054 = vmatpush1.bf16.msra.mxu0 0
        %3055 = vmatprep.subr.bf16.mxu0 0
        %3056 = vmatpush1.bf16.msra.mxu0 0
        %3057 = vmatprep.subr.bf16.mxu0 0
        %3058 = vmatpush1.bf16.msra.mxu0 0
        %3059 = vmatprep.subr.bf16.mxu0 0
        %3060 = vmatpush1.bf16.msra.mxu0 0
        %3061 = vmatprep.subr.bf16.mxu0 0
        %3062 = vmatpush1.bf16.msra.mxu0 0
        %3063 = vmatprep.subr.bf16.mxu0 0
        %3064 = vmatpush1.bf16.msra.mxu0 0
        %3065 = vmatprep.subr.bf16.mxu0 0
        %3066 = vmatpush1.bf16.msra.mxu0 0
        %3067 = vmatprep.subr.bf16.mxu0 0
        %3068 = vmatpush1.bf16.msra.mxu0 0
        %3069 = vmatprep.subr.bf16.mxu0 0
        %3070 = vmatpush1.bf16.msra.mxu0 0
        %3071 = vmatprep.subr.bf16.mxu0 0
        %3072 = vmatpush1.bf16.msra.mxu0 0
        %3073 = vmatprep.subr.bf16.mxu0 0
        %3074 = vmatpush1.bf16.msra.mxu0 0
        %3075 = vmatprep.mubr.bf16.mxu0 0
        %3076 = vmatmul.mubr.bf16.gmra.mrb[0].mxu0 %v3041
        %v3077 = vpop.f32.mrb[0].mxu0
        %v3078 = vadd.f32 0.0, %v3077
        %v3079 = vpop.f32.mrb[0].mxu0
        %v3080 = vpop.f32.mrb[0].mxu0
        %v3081 = vadd.f32 0.0, %v3080
        %v3082 = vpop.f32.mrb[0].mxu0
        %3083 = vdwg.mxu0
        %v3084 = vpack.c.bf16 %v3081, %v3078
        %v3086 = vsel %vm1800, %v3084, 0
        %3088 = vmatprep.subr.bf16.mxu0 %v2354
        %3089 = vmatpush1.bf16.msra.mxu0 %v2353
        %3090 = vmatprep.subr.bf16.mxu0 %v2356
        %3091 = vmatpush1.bf16.msra.mxu0 %v2355
        %3092 = vmatprep.subr.bf16.mxu0 %v2358
        %3093 = vmatpush1.bf16.msra.mxu0 %v2357
        %3094 = vmatprep.subr.bf16.mxu0 %v2360
        %3095 = vmatpush1.bf16.msra.mxu0 %v2359
        %3096 = vmatprep.subr.bf16.mxu0 0
        %3097 = vmatpush1.bf16.msra.mxu0 0
        %3098 = vmatprep.subr.bf16.mxu0 0
        %3099 = vmatpush1.bf16.msra.mxu0 0
        %3100 = vmatprep.subr.bf16.mxu0 0
        %3101 = vmatpush1.bf16.msra.mxu0 0
        %3102 = vmatprep.subr.bf16.mxu0 0
        %3103 = vmatpush1.bf16.msra.mxu0 0
        %3104 = vmatprep.subr.bf16.mxu0 0
        %3105 = vmatpush1.bf16.msra.mxu0 0
        %3106 = vmatprep.subr.bf16.mxu0 0
        %3107 = vmatpush1.bf16.msra.mxu0 0
        %3108 = vmatprep.subr.bf16.mxu0 0
        %3109 = vmatpush1.bf16.msra.mxu0 0
        %3110 = vmatprep.subr.bf16.mxu0 0
        %3111 = vmatpush1.bf16.msra.mxu0 0
        %3112 = vmatprep.subr.bf16.mxu0 0
        %3113 = vmatpush1.bf16.msra.mxu0 0
        %3114 = vmatprep.subr.bf16.mxu0 0
        %3115 = vmatpush1.bf16.msra.mxu0 0
        %3116 = vmatprep.subr.bf16.mxu0 0
        %3117 = vmatpush1.bf16.msra.mxu0 0
        %3118 = vmatprep.subr.bf16.mxu0 0
        %3119 = vmatpush1.bf16.msra.mxu0 0
        %3120 = vmatprep.mubr.bf16.mxu0 0
        %3121 = vmatmul.mubr.bf16.gmra.mrb[0].mxu0 %v3086
        %v3122 = vpop.f32.mrb[0].mxu0
        %v3123 = vadd.f32 0.0, %v3122
        %v3124 = vpop.f32.mrb[0].mxu0
        %v3125 = vadd.f32 0.0, %v3124
        %v3126 = vpop.f32.mrb[0].mxu0
        %v3127 = vadd.f32 0.0, %v3126
        %v3128 = vpop.f32.mrb[0].mxu0
        %v3129 = vadd.f32 0.0, %v3128
        %3130 = vdwg.mxu0
        %v3131 = vadd.f32 %v2962, %v3123
        %v3132 = vadd.f32 %v2964, %v3125
        %v3133 = vadd.f32 %v2966, %v3127
        %v3134 = vadd.f32 %v2968, %v3129
        %3136 = vrot.lane.b32.xlu0 %v1755, 64
        %v3137 = vpop.permute.xlu0 %3136
        %3139 = vrot.lane.b32.xlu0 %v1759, 64
        %v3140 = vpop.permute.xlu0 %3139
        %v3142 = vsel %vm1800, %v3137, 0
        %v3145 = vsel %vm1800, %v3140, 0
        %3147 = vmatprep.subr.bf16.mxu0 0
        %3148 = vmatpush1.bf16.xpose.msra.mxu0 %v3145
        %3149 = vmatprep.subr.bf16.mxu0 0
        %3150 = vmatpush1.bf16.xpose.msra.mxu0 0
        %3151 = vmatprep.subr.bf16.mxu0 0
        %3152 = vmatpush1.bf16.xpose.msra.mxu0 0
        %3153 = vmatprep.subr.bf16.mxu0 0
        %3154 = vmatpush1.bf16.xpose.msra.mxu0 0
        %3155 = vmatprep.subr.bf16.mxu0 0
        %3156 = vmatpush1.bf16.xpose.msra.mxu0 0
        %3157 = vmatprep.subr.bf16.mxu0 0
        %3158 = vmatpush1.bf16.xpose.msra.mxu0 0
        %3159 = vmatprep.subr.bf16.mxu0 0
        %3160 = vmatpush1.bf16.xpose.msra.mxu0 0
        %3161 = vmatprep.subr.bf16.mxu0 0
        %3162 = vmatpush1.bf16.xpose.msra.mxu0 0
        %3163 = vmatprep.subr.bf16.mxu0 0
        %3164 = vmatpush1.bf16.xpose.msra.mxu0 0
        %3165 = vmatprep.subr.bf16.mxu0 0
        %3166 = vmatpush1.bf16.xpose.msra.mxu0 0
        %3167 = vmatprep.subr.bf16.mxu0 0
        %3168 = vmatpush1.bf16.xpose.msra.mxu0 0
        %3169 = vmatprep.subr.bf16.mxu0 0
        %3170 = vmatpush1.bf16.xpose.msra.mxu0 0
        %3171 = vmatprep.subr.bf16.mxu0 0
        %3172 = vmatpush1.bf16.xpose.msra.mxu0 0
        %3173 = vmatprep.subr.bf16.mxu0 0
        %3174 = vmatpush1.bf16.xpose.msra.mxu0 0
        %3175 = vmatprep.subr.bf16.mxu0 0
        %3176 = vmatpush1.bf16.xpose.msra.mxu0 0
        %3177 = vmatprep.subr.bf16.mxu0 0
        %3178 = vmatpush1.bf16.xpose.msra.mxu0 0
        %3179 = vmatprep.mubr.bf16.mxu0 0
        %3180 = vmatmul.mubr.bf16.gmra.mrb[0].mxu0 %v3142
        %v3181 = vpop.f32.mrb[0].mxu0
        %v3182 = vadd.f32 %v2637, %v3181
        %v3183 = vpop.f32.mrb[0].mxu0
        %v3184 = vpop.f32.mrb[0].mxu0
        %v3185 = vadd.f32 %v2637, %v3184
        %v3186 = vpop.f32.mrb[0].mxu0
        %3187 = vdwg.mxu0
        %v3188 = vsel %vm1848, %v3182, -inf
        %3189 = vmax.xlane.f32.xlu0 %v3188
        %v3190 = vpop.xlane.xlu0 %3189
        %v3191 = vsel %vm1848, %v3185, -inf
        %3192 = vmax.xlane.f32.xlu0 %v3191
        %v3193 = vpop.xlane.xlu0 %3192
        %v3194 = vsub.f32 %v3182, %v3190
        %v3195 = vsub.f32 %v3185, %v3193
        %v3196 = vmul.f32 %v3194, 1.442695
        %v3197 = vpow.pop %v3196
        %v3198 = vmul.f32 %v3195, 1.442695
        %v3199 = vpow.pop %v3198
        %v3200 = vsel %vm1848, %v3197, 0.0
        %3201 = vadd.xlane.f32.xlu0 %v3200
        %v3202 = vpop.xlane.xlu0 %3201
        %v3203 = vsel %vm1848, %v3199, 0.0
        %3204 = vadd.xlane.f32.xlu0 %v3203
        %v3205 = vpop.xlane.xlu0 %3204
        %v3206 = vrcp.pop %v3202
        %v3207 = vrcp.pop %v3205
        %v3208 = vmul.f32 %v3197, %v3206
        %v3209 = vmul.f32 %v3199, %v3207
        %v3210 = vpack.c.bf16 %v3209, %v3208
        %3212 = vrot.lane.b32.xlu0 %v1763, 64
        %v3213 = vpop.permute.xlu0 %3212
        %v3216 = vsel %vm1848, %v3210, 0
        %3218 = vmatprep.subr.bf16.mxu0 0
        %3219 = vmatpush1.bf16.msra.mxu0 %v3213
        %3220 = vmatprep.subr.bf16.mxu0 0
        %3221 = vmatpush1.bf16.msra.mxu0 0
        %3222 = vmatprep.subr.bf16.mxu0 0
        %3223 = vmatpush1.bf16.msra.mxu0 0
        %3224 = vmatprep.subr.bf16.mxu0 0
        %3225 = vmatpush1.bf16.msra.mxu0 0
        %3226 = vmatprep.subr.bf16.mxu0 0
        %3227 = vmatpush1.bf16.msra.mxu0 0
        %3228 = vmatprep.subr.bf16.mxu0 0
        %3229 = vmatpush1.bf16.msra.mxu0 0
        %3230 = vmatprep.subr.bf16.mxu0 0
        %3231 = vmatpush1.bf16.msra.mxu0 0
        %3232 = vmatprep.subr.bf16.mxu0 0
        %3233 = vmatpush1.bf16.msra.mxu0 0
        %3234 = vmatprep.subr.bf16.mxu0 0
        %3235 = vmatpush1.bf16.msra.mxu0 0
        %3236 = vmatprep.subr.bf16.mxu0 0
        %3237 = vmatpush1.bf16.msra.mxu0 0
        %3238 = vmatprep.subr.bf16.mxu0 0
        %3239 = vmatpush1.bf16.msra.mxu0 0
        %3240 = vmatprep.subr.bf16.mxu0 0
        %3241 = vmatpush1.bf16.msra.mxu0 0
        %3242 = vmatprep.subr.bf16.mxu0 0
        %3243 = vmatpush1.bf16.msra.mxu0 0
        %3244 = vmatprep.subr.bf16.mxu0 0
        %3245 = vmatpush1.bf16.msra.mxu0 0
        %3246 = vmatprep.subr.bf16.mxu0 0
        %3247 = vmatpush1.bf16.msra.mxu0 0
        %3248 = vmatprep.subr.bf16.mxu0 0
        %3249 = vmatpush1.bf16.msra.mxu0 0
        %3250 = vmatprep.mubr.bf16.mxu0 0
        %3251 = vmatmul.mubr.bf16.gmra.mrb[0].mxu0 %v3216
        %v3252 = vpop.f32.mrb[0].mxu0
        %v3253 = vadd.f32 0.0, %v3252
        %v3254 = vpop.f32.mrb[0].mxu0
        %v3255 = vpop.f32.mrb[0].mxu0
        %v3256 = vadd.f32 0.0, %v3255
        %v3257 = vpop.f32.mrb[0].mxu0
        %3258 = vdwg.mxu0
        %v3259 = vpack.c.bf16 %v3256, %v3253
        %v3261 = vsel %vm1800, %v3259, 0
        %3263 = vmatprep.subr.bf16.mxu0 %v2569
        %3264 = vmatpush1.bf16.msra.mxu0 %v2568
        %3265 = vmatprep.subr.bf16.mxu0 %v2571
        %3266 = vmatpush1.bf16.msra.mxu0 %v2570
        %3267 = vmatprep.subr.bf16.mxu0 %v2573
        %3268 = vmatpush1.bf16.msra.mxu0 %v2572
        %3269 = vmatprep.subr.bf16.mxu0 %v2575
        %3270 = vmatpush1.bf16.msra.mxu0 %v2574
        %3271 = vmatprep.subr.bf16.mxu0 0
        %3272 = vmatpush1.bf16.msra.mxu0 0
        %3273 = vmatprep.subr.bf16.mxu0 0
        %3274 = vmatpush1.bf16.msra.mxu0 0
        %3275 = vmatprep.subr.bf16.mxu0 0
        %3276 = vmatpush1.bf16.msra.mxu0 0
        %3277 = vmatprep.subr.bf16.mxu0 0
        %3278 = vmatpush1.bf16.msra.mxu0 0
        %3279 = vmatprep.subr.bf16.mxu0 0
        %3280 = vmatpush1.bf16.msra.mxu0 0
        %3281 = vmatprep.subr.bf16.mxu0 0
        %3282 = vmatpush1.bf16.msra.mxu0 0
        %3283 = vmatprep.subr.bf16.mxu0 0
        %3284 = vmatpush1.bf16.msra.mxu0 0
        %3285 = vmatprep.subr.bf16.mxu0 0
        %3286 = vmatpush1.bf16.msra.mxu0 0
        %3287 = vmatprep.subr.bf16.mxu0 0
        %3288 = vmatpush1.bf16.msra.mxu0 0
        %3289 = vmatprep.subr.bf16.mxu0 0
        %3290 = vmatpush1.bf16.msra.mxu0 0
        %3291 = vmatprep.subr.bf16.mxu0 0
        %3292 = vmatpush1.bf16.msra.mxu0 0
        %3293 = vmatprep.subr.bf16.mxu0 0
        %3294 = vmatpush1.bf16.msra.mxu0 0
        %3295 = vmatprep.mubr.bf16.mxu0 0
        %3296 = vmatmul.mubr.bf16.gmra.mrb[0].mxu0 %v3261
        %v3297 = vpop.f32.mrb[0].mxu0
        %v3298 = vadd.f32 0.0, %v3297
        %v3299 = vpop.f32.mrb[0].mxu0
        %v3300 = vadd.f32 0.0, %v3299
        %v3301 = vpop.f32.mrb[0].mxu0
        %v3302 = vadd.f32 0.0, %v3301
        %v3303 = vpop.f32.mrb[0].mxu0
        %v3304 = vadd.f32 0.0, %v3303
        %3305 = vdwg.mxu0
        %v3306 = vadd.f32 %v3131, %v3298
        %v3307 = vadd.f32 %v3132, %v3300
        %v3308 = vadd.f32 %v3133, %v3302
        %v3309 = vadd.f32 %v3134, %v3304
        %v3310 = vld [vmem:[%s696] sm:$0x3]
        %v3312 = vlaneseq
        %v3313 = vshrl.u32 %v3312, 7
        %v3314 = vsub.s32 0, %v3313
        %v3315 = vrot.slane %v3310, %v3314
        %v3316 = vlaneseq
        %v3317 = vshrl.u32 %v3316, 7
        %v3318 = vsub.s32 1, %v3317
        %v3319 = vrot.slane %v3310, %v3318
        %v3322 = vadd.f32 %v2630, %v3315
        %v3323 = vadd.f32 %v2631, %v3319
        %v3324 = vadd.f32 %v2632, %v3315
        %v3325 = vadd.f32 %v2633, %v3319
        %v3326 = vadd.f32 %v3306, %v3315
        %v3327 = vadd.f32 %v3307, %v3319
        %v3328 = vadd.f32 %v3308, %v3315
        %v3329 = vadd.f32 %v3309, %v3319
        %v3330 = vadd.f32 %v846, %v3322
        %v3331 = vadd.f32 %v847, %v3323
        %v3332 = vadd.f32 %v848, %v3324
        %v3333 = vadd.f32 %v849, %v3325
        %v3334 = vadd.f32 %v850, %v3326
        %v3335 = vadd.f32 %v851, %v3327
        %v3336 = vadd.f32 %v852, %v3328
        %v3337 = vadd.f32 %v853, %v3329
        %v3338 = vadd.f32 %v3330, %v3331
        %3339 = vadd.xlane.f32.xlu0 %v3338
        %v3340 = vpop.xlane.xlu0 %3339
        %v3341 = vadd.f32 %v3332, %v3333
        %3342 = vadd.xlane.f32.xlu0 %v3341
        %v3343 = vpop.xlane.xlu0 %3342
        %v3344 = vadd.f32 %v3334, %v3335
        %3345 = vadd.xlane.f32.xlu0 %v3344
        %v3346 = vpop.xlane.xlu0 %3345
        %v3347 = vadd.f32 %v3336, %v3337
        %3348 = vadd.xlane.f32.xlu0 %v3347
        %v3349 = vpop.xlane.xlu0 %3348
        %v3350 = vmul.f32 %v3340, %v867
        %v3351 = vmul.f32 %v3343, %v867
        %v3352 = vmul.f32 %v3346, %v867
        %v3353 = vmul.f32 %v3349, %v867
        %v3354 = vsub.f32 %v3330, %v3350
        %v3355 = vsub.f32 %v3331, %v3350
        %v3356 = vsub.f32 %v3332, %v3351
        %v3357 = vsub.f32 %v3333, %v3351
        %v3358 = vsub.f32 %v3334, %v3352
        %v3359 = vsub.f32 %v3335, %v3352
        %v3360 = vsub.f32 %v3336, %v3353
        %v3361 = vsub.f32 %v3337, %v3353
        %v3362 = vmul.f32 %v3354, %v3354
        %v3363 = vmul.f32 %v3355, %v3355
        %v3364 = vmul.f32 %v3356, %v3356
        %v3365 = vmul.f32 %v3357, %v3357
        %v3366 = vmul.f32 %v3358, %v3358
        %v3367 = vmul.f32 %v3359, %v3359
        %v3368 = vmul.f32 %v3360, %v3360
        %v3369 = vmul.f32 %v3361, %v3361
        %v3370 = vadd.f32 %v3362, %v3363
        %3371 = vadd.xlane.f32.xlu0 %v3370
        %v3372 = vpop.xlane.xlu0 %3371
        %v3373 = vadd.f32 %v3364, %v3365
        %3374 = vadd.xlane.f32.xlu0 %v3373
        %v3375 = vpop.xlane.xlu0 %3374
        %v3376 = vadd.f32 %v3366, %v3367
        %3377 = vadd.xlane.f32.xlu0 %v3376
        %v3378 = vpop.xlane.xlu0 %3377
        %v3379 = vadd.f32 %v3368, %v3369
        %3380 = vadd.xlane.f32.xlu0 %v3379
        %v3381 = vpop.xlane.xlu0 %3380
        %v3382 = vmul.f32 %v3372, %v867
        %v3383 = vmul.f32 %v3375, %v867
        %v3384 = vmul.f32 %v3378, %v867
        %v3385 = vmul.f32 %v3381, %v867
        %v3386 = vadd.f32 %v3382, 1e-05
        %v3387 = vadd.f32 %v3383, 1e-05
        %v3388 = vadd.f32 %v3384, 1e-05
        %v3389 = vadd.f32 %v3385, 1e-05
        %v3390 = vrsqrt.pop %v3386
        %v3391 = vrsqrt.pop %v3387
        %v3392 = vrsqrt.pop %v3388
        %v3393 = vrsqrt.pop %v3389
        %v3394 = vmul.f32 %v3354, %v3390
        %v3395 = vmul.f32 %v3355, %v3390
        %v3396 = vmul.f32 %v3356, %v3391
        %v3397 = vmul.f32 %v3357, %v3391
        %v3398 = vmul.f32 %v3358, %v3392
        %v3399 = vmul.f32 %v3359, %v3392
        %v3400 = vmul.f32 %v3360, %v3393
        %v3401 = vmul.f32 %v3361, %v3393
        %v3402 = vlaneseq
        %v3403 = vshrl.u32 %v3402, 7
        %v3404 = vsub.s32 2, %v3403
        %v3405 = vrot.slane %v845, %v3404
        %v3406 = vlaneseq
        %v3407 = vshrl.u32 %v3406, 7
        %v3408 = vsub.s32 6, %v3407
        %v3409 = vrot.slane %v845, %v3408
        %v3412 = vlaneseq
        %v3413 = vshrl.u32 %v3412, 7
        %v3414 = vsub.s32 2, %v3413
        %v3415 = vrot.slane %v3405, %v3414
        %v3416 = vlaneseq
        %v3417 = vshrl.u32 %v3416, 7
        %v3418 = vsub.s32 2, %v3417
        %v3419 = vrot.slane %v3409, %v3418
        %v3420 = vmul.f32 %v3394, %v3415
        %v3421 = vmul.f32 %v3395, %v3419
        %v3422 = vmul.f32 %v3396, %v3415
        %v3423 = vmul.f32 %v3397, %v3419
        %v3424 = vmul.f32 %v3398, %v3415
        %v3425 = vmul.f32 %v3399, %v3419
        %v3426 = vmul.f32 %v3400, %v3415
        %v3427 = vmul.f32 %v3401, %v3419
        %v3428 = vlaneseq
        %v3429 = vshrl.u32 %v3428, 7
        %v3430 = vsub.s32 3, %v3429
        %v3431 = vrot.slane %v845, %v3430
        %v3432 = vlaneseq
        %v3433 = vshrl.u32 %v3432, 7
        %v3434 = vsub.s32 7, %v3433
        %v3435 = vrot.slane %v845, %v3434
        %v3438 = vlaneseq
        %v3439 = vshrl.u32 %v3438, 7
        %v3440 = vsub.s32 3, %v3439
        %v3441 = vrot.slane %v3431, %v3440
        %v3442 = vlaneseq
        %v3443 = vshrl.u32 %v3442, 7
        %v3444 = vsub.s32 3, %v3443
        %v3445 = vrot.slane %v3435, %v3444
        %v3446 = vadd.f32 %v3420, %v3441
        %v3447 = vadd.f32 %v3421, %v3445
        %v3448 = vadd.f32 %v3422, %v3441
        %v3449 = vadd.f32 %v3423, %v3445
        %v3450 = vadd.f32 %v3424, %v3441
        %v3451 = vadd.f32 %v3425, %v3445
        %v3452 = vadd.f32 %v3426, %v3441
        %v3453 = vadd.f32 %v3427, %v3445
        %v3454 = vpack.c.bf16 %v3448, %v3446
        %v3455 = vpack.c.bf16 %v3449, %v3447
        %v3456 = vpack.c.bf16 %v3452, %v3450
        %v3457 = vpack.c.bf16 %v3453, %v3451
        %v3458 = vld [vmem:[%s705] sm:$0xff]
        %v3459 = vld [vmem:[%s705 + $0x8] sm:$0xff]
        %v3460 = vld [vmem:[%s705 + $0x10] sm:$0xff]
        %v3461 = vld [vmem:[%s705 + $0x18] sm:$0xff]
        %v3462 = vld [vmem:[%s705 + $0x20] sm:$0xff]
        %v3463 = vld [vmem:[%s705 + $0x28] sm:$0xff]
        %v3464 = vld [vmem:[%s705 + $0x30] sm:$0xff]
        %v3465 = vld [vmem:[%s705 + $0x38] sm:$0xff]
        %v3466 = vld [vmem:[%s705 + $0x40] sm:$0xff]
        %v3467 = vld [vmem:[%s705 + $0x48] sm:$0xff]
        %v3468 = vld [vmem:[%s705 + $0x50] sm:$0xff]
        %v3469 = vld [vmem:[%s705 + $0x58] sm:$0xff]
        %v3470 = vld [vmem:[%s705 + $0x60] sm:$0xff]
        %v3471 = vld [vmem:[%s705 + $0x68] sm:$0xff]
        %v3472 = vld [vmem:[%s705 + $0x70] sm:$0xff]
        %v3473 = vld [vmem:[%s705 + $0x78] sm:$0xff]
        %v3474 = vld [vmem:[%s705 + $0x80] sm:$0xff]
        %v3475 = vld [vmem:[%s705 + $0x88] sm:$0xff]
        %v3476 = vld [vmem:[%s705 + $0x90] sm:$0xff]
        %v3477 = vld [vmem:[%s705 + $0x98] sm:$0xff]
        %v3478 = vld [vmem:[%s705 + $0xa0] sm:$0xff]
        %v3479 = vld [vmem:[%s705 + $0xa8] sm:$0xff]
        %v3480 = vld [vmem:[%s705 + $0xb0] sm:$0xff]
        %v3481 = vld [vmem:[%s705 + $0xb8] sm:$0xff]
        %v3482 = vld [vmem:[%s705 + $0xc0] sm:$0xff]
        %v3483 = vld [vmem:[%s705 + $0xc8] sm:$0xff]
        %v3484 = vld [vmem:[%s705 + $0xd0] sm:$0xff]
        %v3485 = vld [vmem:[%s705 + $0xd8] sm:$0xff]
        %v3486 = vld [vmem:[%s705 + $0xe0] sm:$0xff]
        %v3487 = vld [vmem:[%s705 + $0xe8] sm:$0xff]
        %v3488 = vld [vmem:[%s705 + $0xf0] sm:$0xff]
        %v3489 = vld [vmem:[%s705 + $0xf8] sm:$0xff]
        %v3490 = vld [vmem:[%s705 + $0x100] sm:$0xff]
        %v3491 = vld [vmem:[%s705 + $0x108] sm:$0xff]
        %v3492 = vld [vmem:[%s705 + $0x110] sm:$0xff]
        %v3493 = vld [vmem:[%s705 + $0x118] sm:$0xff]
        %v3494 = vld [vmem:[%s705 + $0x120] sm:$0xff]
        %v3495 = vld [vmem:[%s705 + $0x128] sm:$0xff]
        %v3496 = vld [vmem:[%s705 + $0x130] sm:$0xff]
        %v3497 = vld [vmem:[%s705 + $0x138] sm:$0xff]
        %v3498 = vld [vmem:[%s705 + $0x140] sm:$0xff]
        %v3499 = vld [vmem:[%s705 + $0x148] sm:$0xff]
        %v3500 = vld [vmem:[%s705 + $0x150] sm:$0xff]
        %v3501 = vld [vmem:[%s705 + $0x158] sm:$0xff]
        %v3502 = vld [vmem:[%s705 + $0x160] sm:$0xff]
        %v3503 = vld [vmem:[%s705 + $0x168] sm:$0xff]
        %v3504 = vld [vmem:[%s705 + $0x170] sm:$0xff]
        %v3505 = vld [vmem:[%s705 + $0x178] sm:$0xff]
        %v3506 = vld [vmem:[%s705 + $0x180] sm:$0xff]
        %v3507 = vld [vmem:[%s705 + $0x188] sm:$0xff]
        %v3508 = vld [vmem:[%s705 + $0x190] sm:$0xff]
        %v3509 = vld [vmem:[%s705 + $0x198] sm:$0xff]
        %v3510 = vld [vmem:[%s705 + $0x1a0] sm:$0xff]
        %v3511 = vld [vmem:[%s705 + $0x1a8] sm:$0xff]
        %v3512 = vld [vmem:[%s705 + $0x1b0] sm:$0xff]
        %v3513 = vld [vmem:[%s705 + $0x1b8] sm:$0xff]
        %v3514 = vld [vmem:[%s705 + $0x1c0] sm:$0xff]
        %v3515 = vld [vmem:[%s705 + $0x1c8] sm:$0xff]
        %v3516 = vld [vmem:[%s705 + $0x1d0] sm:$0xff]
        %v3517 = vld [vmem:[%s705 + $0x1d8] sm:$0xff]
        %v3518 = vld [vmem:[%s705 + $0x1e0] sm:$0xff]
        %v3519 = vld [vmem:[%s705 + $0x1e8] sm:$0xff]
        %v3520 = vld [vmem:[%s705 + $0x1f0] sm:$0xff]
        %v3521 = vld [vmem:[%s705 + $0x1f8] sm:$0xff]
        %v3522 = vld [vmem:[%s705 + $0x200] sm:$0xff]
        %v3523 = vld [vmem:[%s705 + $0x208] sm:$0xff]
        %v3524 = vld [vmem:[%s705 + $0x210] sm:$0xff]
        %v3525 = vld [vmem:[%s705 + $0x218] sm:$0xff]
        %v3526 = vld [vmem:[%s705 + $0x220] sm:$0xff]
        %v3527 = vld [vmem:[%s705 + $0x228] sm:$0xff]
        %v3528 = vld [vmem:[%s705 + $0x230] sm:$0xff]
        %v3529 = vld [vmem:[%s705 + $0x238] sm:$0xff]
        %v3530 = vld [vmem:[%s705 + $0x240] sm:$0xff]
        %v3531 = vld [vmem:[%s705 + $0x248] sm:$0xff]
        %v3532 = vld [vmem:[%s705 + $0x250] sm:$0xff]
        %v3533 = vld [vmem:[%s705 + $0x258] sm:$0xff]
        %v3534 = vld [vmem:[%s705 + $0x260] sm:$0xff]
        %v3535 = vld [vmem:[%s705 + $0x268] sm:$0xff]
        %v3536 = vld [vmem:[%s705 + $0x270] sm:$0xff]
        %v3537 = vld [vmem:[%s705 + $0x278] sm:$0xff]
        %v3538 = vld [vmem:[%s705 + $0x280] sm:$0xff]
        %v3539 = vld [vmem:[%s705 + $0x288] sm:$0xff]
        %v3540 = vld [vmem:[%s705 + $0x290] sm:$0xff]
        %v3541 = vld [vmem:[%s705 + $0x298] sm:$0xff]
        %v3542 = vld [vmem:[%s705 + $0x2a0] sm:$0xff]
        %v3543 = vld [vmem:[%s705 + $0x2a8] sm:$0xff]
        %v3544 = vld [vmem:[%s705 + $0x2b0] sm:$0xff]
        %v3545 = vld [vmem:[%s705 + $0x2b8] sm:$0xff]
        %v3546 = vld [vmem:[%s705 + $0x2c0] sm:$0xff]
        %v3547 = vld [vmem:[%s705 + $0x2c8] sm:$0xff]
        %v3548 = vld [vmem:[%s705 + $0x2d0] sm:$0xff]
        %v3549 = vld [vmem:[%s705 + $0x2d8] sm:$0xff]
        %v3550 = vld [vmem:[%s705 + $0x2e0] sm:$0xff]
        %v3551 = vld [vmem:[%s705 + $0x2e8] sm:$0xff]
        %v3552 = vld [vmem:[%s705 + $0x2f0] sm:$0xff]
        %v3553 = vld [vmem:[%s705 + $0x2f8] sm:$0xff]
        %v3554 = vld [vmem:[%s705 + $0x300] sm:$0xff]
        %v3555 = vld [vmem:[%s705 + $0x308] sm:$0xff]
        %v3556 = vld [vmem:[%s705 + $0x310] sm:$0xff]
        %v3557 = vld [vmem:[%s705 + $0x318] sm:$0xff]
        %v3558 = vld [vmem:[%s705 + $0x320] sm:$0xff]
        %v3559 = vld [vmem:[%s705 + $0x328] sm:$0xff]
        %v3560 = vld [vmem:[%s705 + $0x330] sm:$0xff]
        %v3561 = vld [vmem:[%s705 + $0x338] sm:$0xff]
        %v3562 = vld [vmem:[%s705 + $0x340] sm:$0xff]
        %v3563 = vld [vmem:[%s705 + $0x348] sm:$0xff]
        %v3564 = vld [vmem:[%s705 + $0x350] sm:$0xff]
        %v3565 = vld [vmem:[%s705 + $0x358] sm:$0xff]
        %v3566 = vld [vmem:[%s705 + $0x360] sm:$0xff]
        %v3567 = vld [vmem:[%s705 + $0x368] sm:$0xff]
        %v3568 = vld [vmem:[%s705 + $0x370] sm:$0xff]
        %v3569 = vld [vmem:[%s705 + $0x378] sm:$0xff]
        %v3570 = vld [vmem:[%s705 + $0x380] sm:$0xff]
        %v3571 = vld [vmem:[%s705 + $0x388] sm:$0xff]
        %v3572 = vld [vmem:[%s705 + $0x390] sm:$0xff]
        %v3573 = vld [vmem:[%s705 + $0x398] sm:$0xff]
        %v3574 = vld [vmem:[%s705 + $0x3a0] sm:$0xff]
        %v3575 = vld [vmem:[%s705 + $0x3a8] sm:$0xff]
        %v3576 = vld [vmem:[%s705 + $0x3b0] sm:$0xff]
        %v3577 = vld [vmem:[%s705 + $0x3b8] sm:$0xff]
        %v3578 = vld [vmem:[%s705 + $0x3c0] sm:$0xff]
        %v3579 = vld [vmem:[%s705 + $0x3c8] sm:$0xff]
        %v3580 = vld [vmem:[%s705 + $0x3d0] sm:$0xff]
        %v3581 = vld [vmem:[%s705 + $0x3d8] sm:$0xff]
        %v3582 = vld [vmem:[%s705 + $0x3e0] sm:$0xff]
        %v3583 = vld [vmem:[%s705 + $0x3e8] sm:$0xff]
        %v3584 = vld [vmem:[%s705 + $0x3f0] sm:$0xff]
        %v3585 = vld [vmem:[%s705 + $0x3f8] sm:$0xff]
        %v3586 = vld [vmem:[%s714] sm:$0xff]
        %v3588 = vlaneseq
        %v3589 = vshrl.u32 %v3588, 7
        %v3590 = vsub.s32 0, %v3589
        %v3591 = vrot.slane %v3586, %v3590
        %v3592 = vlaneseq
        %v3593 = vshrl.u32 %v3592, 7
        %v3594 = vsub.s32 1, %v3593
        %v3595 = vrot.slane %v3586, %v3594
        %v3596 = vlaneseq
        %v3597 = vshrl.u32 %v3596, 7
        %v3598 = vsub.s32 2, %v3597
        %v3599 = vrot.slane %v3586, %v3598
        %v3600 = vlaneseq
        %v3601 = vshrl.u32 %v3600, 7
        %v3602 = vsub.s32 3, %v3601
        %v3603 = vrot.slane %v3586, %v3602
        %v3604 = vlaneseq
        %v3605 = vshrl.u32 %v3604, 7
        %v3606 = vsub.s32 4, %v3605
        %v3607 = vrot.slane %v3586, %v3606
        %v3608 = vlaneseq
        %v3609 = vshrl.u32 %v3608, 7
        %v3610 = vsub.s32 5, %v3609
        %v3611 = vrot.slane %v3586, %v3610
        %v3612 = vlaneseq
        %v3613 = vshrl.u32 %v3612, 7
        %v3614 = vsub.s32 6, %v3613
        %v3615 = vrot.slane %v3586, %v3614
        %v3616 = vlaneseq
        %v3617 = vshrl.u32 %v3616, 7
        %v3618 = vsub.s32 7, %v3617
        %v3619 = vrot.slane %v3586, %v3618
        %v3756 = vunpack.c.l.b16 %v3458
        %v3757 = vunpack.c.h.b16 %v3458
        %v3758 = vunpack.c.l.b16 %v3459
        %v3759 = vunpack.c.h.b16 %v3459
        %v3760 = vunpack.c.l.b16 %v3460
        %v3761 = vunpack.c.h.b16 %v3460
        %v3762 = vunpack.c.l.b16 %v3461
        %v3763 = vunpack.c.h.b16 %v3461
        %v3764 = vunpack.c.l.b16 %v3462
        %v3765 = vunpack.c.h.b16 %v3462
        %v3766 = vunpack.c.l.b16 %v3463
        %v3767 = vunpack.c.h.b16 %v3463
        %v3768 = vunpack.c.l.b16 %v3464
        %v3769 = vunpack.c.h.b16 %v3464
        %v3770 = vunpack.c.l.b16 %v3465
        %v3771 = vunpack.c.h.b16 %v3465
        %v3772 = vunpack.c.l.b16 %v3466
        %v3773 = vunpack.c.h.b16 %v3466
        %v3774 = vunpack.c.l.b16 %v3467
        %v3775 = vunpack.c.h.b16 %v3467
        %v3776 = vunpack.c.l.b16 %v3468
        %v3777 = vunpack.c.h.b16 %v3468
        %v3778 = vunpack.c.l.b16 %v3469
        %v3779 = vunpack.c.h.b16 %v3469
        %v3780 = vunpack.c.l.b16 %v3470
        %v3781 = vunpack.c.h.b16 %v3470
        %v3782 = vunpack.c.l.b16 %v3471
        %v3783 = vunpack.c.h.b16 %v3471
        %v3784 = vunpack.c.l.b16 %v3472
        %v3785 = vunpack.c.h.b16 %v3472
        %v3786 = vunpack.c.l.b16 %v3473
        %v3787 = vunpack.c.h.b16 %v3473
        %v3788 = vunpack.c.l.b16 %v3474
        %v3789 = vunpack.c.h.b16 %v3474
        %v3790 = vunpack.c.l.b16 %v3475
        %v3791 = vunpack.c.h.b16 %v3475
        %v3792 = vunpack.c.l.b16 %v3476
        %v3793 = vunpack.c.h.b16 %v3476
        %v3794 = vunpack.c.l.b16 %v3477
        %v3795 = vunpack.c.h.b16 %v3477
        %v3796 = vunpack.c.l.b16 %v3478
        %v3797 = vunpack.c.h.b16 %v3478
        %v3798 = vunpack.c.l.b16 %v3479
        %v3799 = vunpack.c.h.b16 %v3479
        %v3800 = vunpack.c.l.b16 %v3480
        %v3801 = vunpack.c.h.b16 %v3480
        %v3802 = vunpack.c.l.b16 %v3481
        %v3803 = vunpack.c.h.b16 %v3481
        %v3804 = vunpack.c.l.b16 %v3482
        %v3805 = vunpack.c.h.b16 %v3482
        %v3806 = vunpack.c.l.b16 %v3483
        %v3807 = vunpack.c.h.b16 %v3483
        %v3808 = vunpack.c.l.b16 %v3484
        %v3809 = vunpack.c.h.b16 %v3484
        %v3810 = vunpack.c.l.b16 %v3485
        %v3811 = vunpack.c.h.b16 %v3485
        %v3812 = vunpack.c.l.b16 %v3486
        %v3813 = vunpack.c.h.b16 %v3486
        %v3814 = vunpack.c.l.b16 %v3487
        %v3815 = vunpack.c.h.b16 %v3487
        %v3816 = vunpack.c.l.b16 %v3488
        %v3817 = vunpack.c.h.b16 %v3488
        %v3818 = vunpack.c.l.b16 %v3489
        %v3819 = vunpack.c.h.b16 %v3489
        %v3820 = vunpack.c.l.b16 %v3490
        %v3821 = vunpack.c.h.b16 %v3490
        %v3822 = vunpack.c.l.b16 %v3491
        %v3823 = vunpack.c.h.b16 %v3491
        %v3824 = vunpack.c.l.b16 %v3492
        %v3825 = vunpack.c.h.b16 %v3492
        %v3826 = vunpack.c.l.b16 %v3493
        %v3827 = vunpack.c.h.b16 %v3493
        %v3828 = vunpack.c.l.b16 %v3494
        %v3829 = vunpack.c.h.b16 %v3494
        %v3830 = vunpack.c.l.b16 %v3495
        %v3831 = vunpack.c.h.b16 %v3495
        %v3832 = vunpack.c.l.b16 %v3496
        %v3833 = vunpack.c.h.b16 %v3496
        %v3834 = vunpack.c.l.b16 %v3497
        %v3835 = vunpack.c.h.b16 %v3497
        %v3836 = vunpack.c.l.b16 %v3498
        %v3837 = vunpack.c.h.b16 %v3498
        %v3838 = vunpack.c.l.b16 %v3499
        %v3839 = vunpack.c.h.b16 %v3499
        %v3840 = vunpack.c.l.b16 %v3500
        %v3841 = vunpack.c.h.b16 %v3500
        %v3842 = vunpack.c.l.b16 %v3501
        %v3843 = vunpack.c.h.b16 %v3501
        %v3844 = vunpack.c.l.b16 %v3502
        %v3845 = vunpack.c.h.b16 %v3502
        %v3846 = vunpack.c.l.b16 %v3503
        %v3847 = vunpack.c.h.b16 %v3503
        %v3848 = vunpack.c.l.b16 %v3504
        %v3849 = vunpack.c.h.b16 %v3504
        %v3850 = vunpack.c.l.b16 %v3505
        %v3851 = vunpack.c.h.b16 %v3505
        %v3852 = vunpack.c.l.b16 %v3506
        %v3853 = vunpack.c.h.b16 %v3506
        %v3854 = vunpack.c.l.b16 %v3507
        %v3855 = vunpack.c.h.b16 %v3507
        %v3856 = vunpack.c.l.b16 %v3508
        %v3857 = vunpack.c.h.b16 %v3508
        %v3858 = vunpack.c.l.b16 %v3509
        %v3859 = vunpack.c.h.b16 %v3509
        %v3860 = vunpack.c.l.b16 %v3510
        %v3861 = vunpack.c.h.b16 %v3510
        %v3862 = vunpack.c.l.b16 %v3511
        %v3863 = vunpack.c.h.b16 %v3511
        %v3864 = vunpack.c.l.b16 %v3512
        %v3865 = vunpack.c.h.b16 %v3512
        %v3866 = vunpack.c.l.b16 %v3513
        %v3867 = vunpack.c.h.b16 %v3513
        %v3868 = vunpack.c.l.b16 %v3514
        %v3869 = vunpack.c.h.b16 %v3514
        %v3870 = vunpack.c.l.b16 %v3515
        %v3871 = vunpack.c.h.b16 %v3515
        %v3872 = vunpack.c.l.b16 %v3516
        %v3873 = vunpack.c.h.b16 %v3516
        %v3874 = vunpack.c.l.b16 %v3517
        %v3875 = vunpack.c.h.b16 %v3517
        %v3876 = vunpack.c.l.b16 %v3518
        %v3877 = vunpack.c.h.b16 %v3518
        %v3878 = vunpack.c.l.b16 %v3519
        %v3879 = vunpack.c.h.b16 %v3519
        %v3880 = vunpack.c.l.b16 %v3520
        %v3881 = vunpack.c.h.b16 %v3520
        %v3882 = vunpack.c.l.b16 %v3521
        %v3883 = vunpack.c.h.b16 %v3521
        %v3884 = vunpack.c.l.b16 %v3522
        %v3885 = vunpack.c.h.b16 %v3522
        %v3886 = vunpack.c.l.b16 %v3523
        %v3887 = vunpack.c.h.b16 %v3523
        %v3888 = vunpack.c.l.b16 %v3524
        %v3889 = vunpack.c.h.b16 %v3524
        %v3890 = vunpack.c.l.b16 %v3525
        %v3891 = vunpack.c.h.b16 %v3525
        %v3892 = vunpack.c.l.b16 %v3526
        %v3893 = vunpack.c.h.b16 %v3526
        %v3894 = vunpack.c.l.b16 %v3527
        %v3895 = vunpack.c.h.b16 %v3527
        %v3896 = vunpack.c.l.b16 %v3528
        %v3897 = vunpack.c.h.b16 %v3528
        %v3898 = vunpack.c.l.b16 %v3529
        %v3899 = vunpack.c.h.b16 %v3529
        %v3900 = vunpack.c.l.b16 %v3530
        %v3901 = vunpack.c.h.b16 %v3530
        %v3902 = vunpack.c.l.b16 %v3531
        %v3903 = vunpack.c.h.b16 %v3531
        %v3904 = vunpack.c.l.b16 %v3532
        %v3905 = vunpack.c.h.b16 %v3532
        %v3906 = vunpack.c.l.b16 %v3533
        %v3907 = vunpack.c.h.b16 %v3533
        %v3908 = vunpack.c.l.b16 %v3534
        %v3909 = vunpack.c.h.b16 %v3534
        %v3910 = vunpack.c.l.b16 %v3535
        %v3911 = vunpack.c.h.b16 %v3535
        %v3912 = vunpack.c.l.b16 %v3536
        %v3913 = vunpack.c.h.b16 %v3536
        %v3914 = vunpack.c.l.b16 %v3537
        %v3915 = vunpack.c.h.b16 %v3537
        %v3916 = vunpack.c.l.b16 %v3538
        %v3917 = vunpack.c.h.b16 %v3538
        %v3918 = vunpack.c.l.b16 %v3539
        %v3919 = vunpack.c.h.b16 %v3539
        %v3920 = vunpack.c.l.b16 %v3540
        %v3921 = vunpack.c.h.b16 %v3540
        %v3922 = vunpack.c.l.b16 %v3541
        %v3923 = vunpack.c.h.b16 %v3541
        %v3924 = vunpack.c.l.b16 %v3542
        %v3925 = vunpack.c.h.b16 %v3542
        %v3926 = vunpack.c.l.b16 %v3543
        %v3927 = vunpack.c.h.b16 %v3543
        %v3928 = vunpack.c.l.b16 %v3544
        %v3929 = vunpack.c.h.b16 %v3544
        %v3930 = vunpack.c.l.b16 %v3545
        %v3931 = vunpack.c.h.b16 %v3545
        %v3932 = vunpack.c.l.b16 %v3546
        %v3933 = vunpack.c.h.b16 %v3546
        %v3934 = vunpack.c.l.b16 %v3547
        %v3935 = vunpack.c.h.b16 %v3547
        %v3936 = vunpack.c.l.b16 %v3548
        %v3937 = vunpack.c.h.b16 %v3548
        %v3938 = vunpack.c.l.b16 %v3549
        %v3939 = vunpack.c.h.b16 %v3549
        %v3940 = vunpack.c.l.b16 %v3550
        %v3941 = vunpack.c.h.b16 %v3550
        %v3942 = vunpack.c.l.b16 %v3551
        %v3943 = vunpack.c.h.b16 %v3551
        %v3944 = vunpack.c.l.b16 %v3552
        %v3945 = vunpack.c.h.b16 %v3552
        %v3946 = vunpack.c.l.b16 %v3553
        %v3947 = vunpack.c.h.b16 %v3553
        %v3948 = vunpack.c.l.b16 %v3554
        %v3949 = vunpack.c.h.b16 %v3554
        %v3950 = vunpack.c.l.b16 %v3555
        %v3951 = vunpack.c.h.b16 %v3555
        %v3952 = vunpack.c.l.b16 %v3556
        %v3953 = vunpack.c.h.b16 %v3556
        %v3954 = vunpack.c.l.b16 %v3557
        %v3955 = vunpack.c.h.b16 %v3557
        %v3956 = vunpack.c.l.b16 %v3558
        %v3957 = vunpack.c.h.b16 %v3558
        %v3958 = vunpack.c.l.b16 %v3559
        %v3959 = vunpack.c.h.b16 %v3559
        %v3960 = vunpack.c.l.b16 %v3560
        %v3961 = vunpack.c.h.b16 %v3560
        %v3962 = vunpack.c.l.b16 %v3561
        %v3963 = vunpack.c.h.b16 %v3561
        %v3964 = vunpack.c.l.b16 %v3562
        %v3965 = vunpack.c.h.b16 %v3562
        %v3966 = vunpack.c.l.b16 %v3563
        %v3967 = vunpack.c.h.b16 %v3563
        %v3968 = vunpack.c.l.b16 %v3564
        %v3969 = vunpack.c.h.b16 %v3564
        %v3970 = vunpack.c.l.b16 %v3565
        %v3971 = vunpack.c.h.b16 %v3565
        %v3972 = vunpack.c.l.b16 %v3566
        %v3973 = vunpack.c.h.b16 %v3566
        %v3974 = vunpack.c.l.b16 %v3567
        %v3975 = vunpack.c.h.b16 %v3567
        %v3976 = vunpack.c.l.b16 %v3568
        %v3977 = vunpack.c.h.b16 %v3568
        %v3978 = vunpack.c.l.b16 %v3569
        %v3979 = vunpack.c.h.b16 %v3569
        %v3980 = vunpack.c.l.b16 %v3570
        %v3981 = vunpack.c.h.b16 %v3570
        %v3982 = vunpack.c.l.b16 %v3571
        %v3983 = vunpack.c.h.b16 %v3571
        %v3984 = vunpack.c.l.b16 %v3572
        %v3985 = vunpack.c.h.b16 %v3572
        %v3986 = vunpack.c.l.b16 %v3573
        %v3987 = vunpack.c.h.b16 %v3573
        %v3988 = vunpack.c.l.b16 %v3574
        %v3989 = vunpack.c.h.b16 %v3574
        %v3990 = vunpack.c.l.b16 %v3575
        %v3991 = vunpack.c.h.b16 %v3575
        %v3992 = vunpack.c.l.b16 %v3576
        %v3993 = vunpack.c.h.b16 %v3576
        %v3994 = vunpack.c.l.b16 %v3577
        %v3995 = vunpack.c.h.b16 %v3577
        %v3996 = vunpack.c.l.b16 %v3578
        %v3997 = vunpack.c.h.b16 %v3578
        %v3998 = vunpack.c.l.b16 %v3579
        %v3999 = vunpack.c.h.b16 %v3579
        %v4000 = vunpack.c.l.b16 %v3580
        %v4001 = vunpack.c.h.b16 %v3580
        %v4002 = vunpack.c.l.b16 %v3581
        %v4003 = vunpack.c.h.b16 %v3581
        %v4004 = vunpack.c.l.b16 %v3582
        %v4005 = vunpack.c.h.b16 %v3582
        %v4006 = vunpack.c.l.b16 %v3583
        %v4007 = vunpack.c.h.b16 %v3583
        %v4008 = vunpack.c.l.b16 %v3584
        %v4009 = vunpack.c.h.b16 %v3584
        %v4010 = vunpack.c.l.b16 %v3585
        %v4011 = vunpack.c.h.b16 %v3585
        %v4012 = vpack.c.b16 %v3764, %v3756
        %v4013 = vpack.c.b16 %v3765, %v3757
        %v4014 = vpack.c.b16 %v3766, %v3758
        %v4015 = vpack.c.b16 %v3767, %v3759
        %v4016 = vpack.c.b16 %v3768, %v3760
        %v4017 = vpack.c.b16 %v3769, %v3761
        %v4018 = vpack.c.b16 %v3770, %v3762
        %v4019 = vpack.c.b16 %v3771, %v3763
        %v4020 = vpack.c.b16 %v3780, %v3772
        %v4021 = vpack.c.b16 %v3781, %v3773
        %v4022 = vpack.c.b16 %v3782, %v3774
        %v4023 = vpack.c.b16 %v3783, %v3775
        %v4024 = vpack.c.b16 %v3784, %v3776
        %v4025 = vpack.c.b16 %v3785, %v3777
        %v4026 = vpack.c.b16 %v3786, %v3778
        %v4027 = vpack.c.b16 %v3787, %v3779
        %v4028 = vpack.c.b16 %v3796, %v3788
        %v4029 = vpack.c.b16 %v3797, %v3789
        %v4030 = vpack.c.b16 %v3798, %v3790
        %v4031 = vpack.c.b16 %v3799, %v3791
        %v4032 = vpack.c.b16 %v3800, %v3792
        %v4033 = vpack.c.b16 %v3801, %v3793
        %v4034 = vpack.c.b16 %v3802, %v3794
        %v4035 = vpack.c.b16 %v3803, %v3795
        %v4036 = vpack.c.b16 %v3812, %v3804
        %v4037 = vpack.c.b16 %v3813, %v3805
        %v4038 = vpack.c.b16 %v3814, %v3806
        %v4039 = vpack.c.b16 %v3815, %v3807
        %v4040 = vpack.c.b16 %v3816, %v3808
        %v4041 = vpack.c.b16 %v3817, %v3809
        %v4042 = vpack.c.b16 %v3818, %v3810
        %v4043 = vpack.c.b16 %v3819, %v3811
        %v4044 = vpack.c.b16 %v3828, %v3820
        %v4045 = vpack.c.b16 %v3829, %v3821
        %v4046 = vpack.c.b16 %v3830, %v3822
        %v4047 = vpack.c.b16 %v3831, %v3823
        %v4048 = vpack.c.b16 %v3832, %v3824
        %v4049 = vpack.c.b16 %v3833, %v3825
        %v4050 = vpack.c.b16 %v3834, %v3826
        %v4051 = vpack.c.b16 %v3835, %v3827
        %v4052 = vpack.c.b16 %v3844, %v3836
        %v4053 = vpack.c.b16 %v3845, %v3837
        %v4054 = vpack.c.b16 %v3846, %v3838
        %v4055 = vpack.c.b16 %v3847, %v3839
        %v4056 = vpack.c.b16 %v3848, %v3840
        %v4057 = vpack.c.b16 %v3849, %v3841
        %v4058 = vpack.c.b16 %v3850, %v3842
        %v4059 = vpack.c.b16 %v3851, %v3843
        %v4060 = vpack.c.b16 %v3860, %v3852
        %v4061 = vpack.c.b16 %v3861, %v3853
        %v4062 = vpack.c.b16 %v3862, %v3854
        %v4063 = vpack.c.b16 %v3863, %v3855
        %v4064 = vpack.c.b16 %v3864, %v3856
        %v4065 = vpack.c.b16 %v3865, %v3857
        %v4066 = vpack.c.b16 %v3866, %v3858
        %v4067 = vpack.c.b16 %v3867, %v3859
        %v4068 = vpack.c.b16 %v3876, %v3868
        %v4069 = vpack.c.b16 %v3877, %v3869
        %v4070 = vpack.c.b16 %v3878, %v3870
        %v4071 = vpack.c.b16 %v3879, %v3871
        %v4072 = vpack.c.b16 %v3880, %v3872
        %v4073 = vpack.c.b16 %v3881, %v3873
        %v4074 = vpack.c.b16 %v3882, %v3874
        %v4075 = vpack.c.b16 %v3883, %v3875
        %v4076 = vpack.c.b16 %v3892, %v3884
        %v4077 = vpack.c.b16 %v3893, %v3885
        %v4078 = vpack.c.b16 %v3894, %v3886
        %v4079 = vpack.c.b16 %v3895, %v3887
        %v4080 = vpack.c.b16 %v3896, %v3888
        %v4081 = vpack.c.b16 %v3897, %v3889
        %v4082 = vpack.c.b16 %v3898, %v3890
        %v4083 = vpack.c.b16 %v3899, %v3891
        %v4084 = vpack.c.b16 %v3908, %v3900
        %v4085 = vpack.c.b16 %v3909, %v3901
        %v4086 = vpack.c.b16 %v3910, %v3902
        %v4087 = vpack.c.b16 %v3911, %v3903
        %v4088 = vpack.c.b16 %v3912, %v3904
        %v4089 = vpack.c.b16 %v3913, %v3905
        %v4090 = vpack.c.b16 %v3914, %v3906
        %v4091 = vpack.c.b16 %v3915, %v3907
        %v4092 = vpack.c.b16 %v3924, %v3916
        %v4093 = vpack.c.b16 %v3925, %v3917
        %v4094 = vpack.c.b16 %v3926, %v3918
        %v4095 = vpack.c.b16 %v3927, %v3919
        %v4096 = vpack.c.b16 %v3928, %v3920
        %v4097 = vpack.c.b16 %v3929, %v3921
        %v4098 = vpack.c.b16 %v3930, %v3922
        %v4099 = vpack.c.b16 %v3931, %v3923
        %v4100 = vpack.c.b16 %v3940, %v3932
        %v4101 = vpack.c.b16 %v3941, %v3933
        %v4102 = vpack.c.b16 %v3942, %v3934
        %v4103 = vpack.c.b16 %v3943, %v3935
        %v4104 = vpack.c.b16 %v3944, %v3936
        %v4105 = vpack.c.b16 %v3945, %v3937
        %v4106 = vpack.c.b16 %v3946, %v3938
        %v4107 = vpack.c.b16 %v3947, %v3939
        %v4108 = vpack.c.b16 %v3956, %v3948
        %v4109 = vpack.c.b16 %v3957, %v3949
        %v4110 = vpack.c.b16 %v3958, %v3950
        %v4111 = vpack.c.b16 %v3959, %v3951
        %v4112 = vpack.c.b16 %v3960, %v3952
        %v4113 = vpack.c.b16 %v3961, %v3953
        %v4114 = vpack.c.b16 %v3962, %v3954
        %v4115 = vpack.c.b16 %v3963, %v3955
        %v4116 = vpack.c.b16 %v3972, %v3964
        %v4117 = vpack.c.b16 %v3973, %v3965
        %v4118 = vpack.c.b16 %v3974, %v3966
        %v4119 = vpack.c.b16 %v3975, %v3967
        %v4120 = vpack.c.b16 %v3976, %v3968
        %v4121 = vpack.c.b16 %v3977, %v3969
        %v4122 = vpack.c.b16 %v3978, %v3970
        %v4123 = vpack.c.b16 %v3979, %v3971
        %v4124 = vpack.c.b16 %v3988, %v3980
        %v4125 = vpack.c.b16 %v3989, %v3981
        %v4126 = vpack.c.b16 %v3990, %v3982
        %v4127 = vpack.c.b16 %v3991, %v3983
        %v4128 = vpack.c.b16 %v3992, %v3984
        %v4129 = vpack.c.b16 %v3993, %v3985
        %v4130 = vpack.c.b16 %v3994, %v3986
        %v4131 = vpack.c.b16 %v3995, %v3987
        %v4132 = vpack.c.b16 %v4004, %v3996
        %v4133 = vpack.c.b16 %v4005, %v3997
        %v4134 = vpack.c.b16 %v4006, %v3998
        %v4135 = vpack.c.b16 %v4007, %v3999
        %v4136 = vpack.c.b16 %v4008, %v4000
        %v4137 = vpack.c.b16 %v4009, %v4001
        %v4138 = vpack.c.b16 %v4010, %v4002
        %v4139 = vpack.c.b16 %v4011, %v4003
        %4268 = vmatprep.subr.bf16.mxu0 %v4013
        %4269 = vmatpush1.bf16.msra.mxu0 %v4012
        %4270 = vmatprep.subr.bf16.mxu0 %v4021
        %4271 = vmatpush1.bf16.msra.mxu0 %v4020
        %4272 = vmatprep.subr.bf16.mxu0 %v4029
        %4273 = vmatpush1.bf16.msra.mxu0 %v4028
        %4274 = vmatprep.subr.bf16.mxu0 %v4037
        %4275 = vmatpush1.bf16.msra.mxu0 %v4036
        %4276 = vmatprep.subr.bf16.mxu0 %v4045
        %4277 = vmatpush1.bf16.msra.mxu0 %v4044
        %4278 = vmatprep.subr.bf16.mxu0 %v4053
        %4279 = vmatpush1.bf16.msra.mxu0 %v4052
        %4280 = vmatprep.subr.bf16.mxu0 %v4061
        %4281 = vmatpush1.bf16.msra.mxu0 %v4060
        %4282 = vmatprep.subr.bf16.mxu0 %v4069
        %4283 = vmatpush1.bf16.msra.mxu0 %v4068
        %4284 = vmatprep.subr.bf16.mxu0 %v4077
        %4285 = vmatpush1.bf16.msra.mxu0 %v4076
        %4286 = vmatprep.subr.bf16.mxu0 %v4085
        %4287 = vmatpush1.bf16.msra.mxu0 %v4084
        %4288 = vmatprep.subr.bf16.mxu0 %v4093
        %4289 = vmatpush1.bf16.msra.mxu0 %v4092
        %4290 = vmatprep.subr.bf16.mxu0 %v4101
        %4291 = vmatpush1.bf16.msra.mxu0 %v4100
        %4292 = vmatprep.subr.bf16.mxu0 %v4109
        %4293 = vmatpush1.bf16.msra.mxu0 %v4108
        %4294 = vmatprep.subr.bf16.mxu0 %v4117
        %4295 = vmatpush1.bf16.msra.mxu0 %v4116
        %4296 = vmatprep.subr.bf16.mxu0 %v4125
        %4297 = vmatpush1.bf16.msra.mxu0 %v4124
        %4298 = vmatprep.subr.bf16.mxu0 %v4133
        %4299 = vmatpush1.bf16.msra.mxu0 %v4132
        %4300 = vmatprep.mubr.bf16.mxu0 %v3455
        %4301 = vmatmul.mubr.bf16.gmra.mrb[0].mxu0 %v3454
        %v4302 = vpop.f32.mrb[0].mxu0
        %v4303 = vadd.f32 %v3591, %v4302
        %v4304 = vpop.f32.mrb[0].mxu0
        %v4305 = vadd.f32 %v3595, %v4304
        %v4306 = vpop.f32.mrb[0].mxu0
        %v4307 = vadd.f32 %v3591, %v4306
        %v4308 = vpop.f32.mrb[0].mxu0
        %v4309 = vadd.f32 %v3595, %v4308
        %4310 = vmatprep.mubr.bf16.mxu0 %v3457
        %4311 = vmatmul.mubr.bf16.gmra.mrb[0].mxu0 %v3456
        %v4312 = vpop.f32.mrb[0].mxu0
        %v4313 = vadd.f32 %v3591, %v4312
        %v4314 = vpop.f32.mrb[0].mxu0
        %v4315 = vadd.f32 %v3595, %v4314
        %v4316 = vpop.f32.mrb[0].mxu0
        %v4317 = vadd.f32 %v3591, %v4316
        %v4318 = vpop.f32.mrb[0].mxu0
        %v4319 = vadd.f32 %v3595, %v4318
        %4320 = vdwg.mxu0
        %4321 = vmatprep.subr.bf16.mxu0 %v4015
        %4322 = vmatpush1.bf16.msra.mxu0 %v4014
        %4323 = vmatprep.subr.bf16.mxu0 %v4023
        %4324 = vmatpush1.bf16.msra.mxu0 %v4022
        %4325 = vmatprep.subr.bf16.mxu0 %v4031
        %4326 = vmatpush1.bf16.msra.mxu0 %v4030
        %4327 = vmatprep.subr.bf16.mxu0 %v4039
        %4328 = vmatpush1.bf16.msra.mxu0 %v4038
        %4329 = vmatprep.subr.bf16.mxu0 %v4047
        %4330 = vmatpush1.bf16.msra.mxu0 %v4046
        %4331 = vmatprep.subr.bf16.mxu0 %v4055
        %4332 = vmatpush1.bf16.msra.mxu0 %v4054
        %4333 = vmatprep.subr.bf16.mxu0 %v4063
        %4334 = vmatpush1.bf16.msra.mxu0 %v4062
        %4335 = vmatprep.subr.bf16.mxu0 %v4071
        %4336 = vmatpush1.bf16.msra.mxu0 %v4070
        %4337 = vmatprep.subr.bf16.mxu0 %v4079
        %4338 = vmatpush1.bf16.msra.mxu0 %v4078
        %4339 = vmatprep.subr.bf16.mxu0 %v4087
        %4340 = vmatpush1.bf16.msra.mxu0 %v4086
        %4341 = vmatprep.subr.bf16.mxu0 %v4095
        %4342 = vmatpush1.bf16.msra.mxu0 %v4094
        %4343 = vmatprep.subr.bf16.mxu0 %v4103
        %4344 = vmatpush1.bf16.msra.mxu0 %v4102
        %4345 = vmatprep.subr.bf16.mxu0 %v4111
        %4346 = vmatpush1.bf16.msra.mxu0 %v4110
        %4347 = vmatprep.subr.bf16.mxu0 %v4119
        %4348 = vmatpush1.bf16.msra.mxu0 %v4118
        %4349 = vmatprep.subr.bf16.mxu0 %v4127
        %4350 = vmatpush1.bf16.msra.mxu0 %v4126
        %4351 = vmatprep.subr.bf16.mxu0 %v4135
        %4352 = vmatpush1.bf16.msra.mxu0 %v4134
        %4353 = vmatprep.mubr.bf16.mxu0 %v3455
        %4354 = vmatmul.mubr.bf16.gmra.mrb[0].mxu0 %v3454
        %v4355 = vpop.f32.mrb[0].mxu0
        %v4356 = vadd.f32 %v3599, %v4355
        %v4357 = vpop.f32.mrb[0].mxu0
        %v4358 = vadd.f32 %v3603, %v4357
        %v4359 = vpop.f32.mrb[0].mxu0
        %v4360 = vadd.f32 %v3599, %v4359
        %v4361 = vpop.f32.mrb[0].mxu0
        %v4362 = vadd.f32 %v3603, %v4361
        %4363 = vmatprep.mubr.bf16.mxu0 %v3457
        %4364 = vmatmul.mubr.bf16.gmra.mrb[0].mxu0 %v3456
        %v4365 = vpop.f32.mrb[0].mxu0
        %v4366 = vadd.f32 %v3599, %v4365
        %v4367 = vpop.f32.mrb[0].mxu0
        %v4368 = vadd.f32 %v3603, %v4367
        %v4369 = vpop.f32.mrb[0].mxu0
        %v4370 = vadd.f32 %v3599, %v4369
        %v4371 = vpop.f32.mrb[0].mxu0
        %v4372 = vadd.f32 %v3603, %v4371
        %4373 = vdwg.mxu0
        %4374 = vmatprep.subr.bf16.mxu0 %v4017
        %4375 = vmatpush1.bf16.msra.mxu0 %v4016
        %4376 = vmatprep.subr.bf16.mxu0 %v4025
        %4377 = vmatpush1.bf16.msra.mxu0 %v4024
        %4378 = vmatprep.subr.bf16.mxu0 %v4033
        %4379 = vmatpush1.bf16.msra.mxu0 %v4032
        %4380 = vmatprep.subr.bf16.mxu0 %v4041
        %4381 = vmatpush1.bf16.msra.mxu0 %v4040
        %4382 = vmatprep.subr.bf16.mxu0 %v4049
        %4383 = vmatpush1.bf16.msra.mxu0 %v4048
        %4384 = vmatprep.subr.bf16.mxu0 %v4057
        %4385 = vmatpush1.bf16.msra.mxu0 %v4056
        %4386 = vmatprep.subr.bf16.mxu0 %v4065
        %4387 = vmatpush1.bf16.msra.mxu0 %v4064
        %4388 = vmatprep.subr.bf16.mxu0 %v4073
        %4389 = vmatpush1.bf16.msra.mxu0 %v4072
        %4390 = vmatprep.subr.bf16.mxu0 %v4081
        %4391 = vmatpush1.bf16.msra.mxu0 %v4080
        %4392 = vmatprep.subr.bf16.mxu0 %v4089
        %4393 = vmatpush1.bf16.msra.mxu0 %v4088
        %4394 = vmatprep.subr.bf16.mxu0 %v4097
        %4395 = vmatpush1.bf16.msra.mxu0 %v4096
        %4396 = vmatprep.subr.bf16.mxu0 %v4105
        %4397 = vmatpush1.bf16.msra.mxu0 %v4104
        %4398 = vmatprep.subr.bf16.mxu0 %v4113
        %4399 = vmatpush1.bf16.msra.mxu0 %v4112
        %4400 = vmatprep.subr.bf16.mxu0 %v4121
        %4401 = vmatpush1.bf16.msra.mxu0 %v4120
        %4402 = vmatprep.subr.bf16.mxu0 %v4129
        %4403 = vmatpush1.bf16.msra.mxu0 %v4128
        %4404 = vmatprep.subr.bf16.mxu0 %v4137
        %4405 = vmatpush1.bf16.msra.mxu0 %v4136
        %4406 = vmatprep.mubr.bf16.mxu0 %v3455
        %4407 = vmatmul.mubr.bf16.gmra.mrb[0].mxu0 %v3454
        %v4408 = vpop.f32.mrb[0].mxu0
        %v4409 = vadd.f32 %v3607, %v4408
        %v4410 = vpop.f32.mrb[0].mxu0
        %v4411 = vadd.f32 %v3611, %v4410
        %v4412 = vpop.f32.mrb[0].mxu0
        %v4413 = vadd.f32 %v3607, %v4412
        %v4414 = vpop.f32.mrb[0].mxu0
        %v4415 = vadd.f32 %v3611, %v4414
        %4416 = vmatprep.mubr.bf16.mxu0 %v3457
        %4417 = vmatmul.mubr.bf16.gmra.mrb[0].mxu0 %v3456
        %v4418 = vpop.f32.mrb[0].mxu0
        %v4419 = vadd.f32 %v3607, %v4418
        %v4420 = vpop.f32.mrb[0].mxu0
        %v4421 = vadd.f32 %v3611, %v4420
        %v4422 = vpop.f32.mrb[0].mxu0
        %v4423 = vadd.f32 %v3607, %v4422
        %v4424 = vpop.f32.mrb[0].mxu0
        %v4425 = vadd.f32 %v3611, %v4424
        %4426 = vdwg.mxu0
        %4427 = vmatprep.subr.bf16.mxu0 %v4019
        %4428 = vmatpush1.bf16.msra.mxu0 %v4018
        %4429 = vmatprep.subr.bf16.mxu0 %v4027
        %4430 = vmatpush1.bf16.msra.mxu0 %v4026
        %4431 = vmatprep.subr.bf16.mxu0 %v4035
        %4432 = vmatpush1.bf16.msra.mxu0 %v4034
        %4433 = vmatprep.subr.bf16.mxu0 %v4043
        %4434 = vmatpush1.bf16.msra.mxu0 %v4042
        %4435 = vmatprep.subr.bf16.mxu0 %v4051
        %4436 = vmatpush1.bf16.msra.mxu0 %v4050
        %4437 = vmatprep.subr.bf16.mxu0 %v4059
        %4438 = vmatpush1.bf16.msra.mxu0 %v4058
        %4439 = vmatprep.subr.bf16.mxu0 %v4067
        %4440 = vmatpush1.bf16.msra.mxu0 %v4066
        %4441 = vmatprep.subr.bf16.mxu0 %v4075
        %4442 = vmatpush1.bf16.msra.mxu0 %v4074
        %4443 = vmatprep.subr.bf16.mxu0 %v4083
        %4444 = vmatpush1.bf16.msra.mxu0 %v4082
        %4445 = vmatprep.subr.bf16.mxu0 %v4091
        %4446 = vmatpush1.bf16.msra.mxu0 %v4090
        %4447 = vmatprep.subr.bf16.mxu0 %v4099
        %4448 = vmatpush1.bf16.msra.mxu0 %v4098
        %4449 = vmatprep.subr.bf16.mxu0 %v4107
        %4450 = vmatpush1.bf16.msra.mxu0 %v4106
        %4451 = vmatprep.subr.bf16.mxu0 %v4115
        %4452 = vmatpush1.bf16.msra.mxu0 %v4114
        %4453 = vmatprep.subr.bf16.mxu0 %v4123
        %4454 = vmatpush1.bf16.msra.mxu0 %v4122
        %4455 = vmatprep.subr.bf16.mxu0 %v4131
        %4456 = vmatpush1.bf16.msra.mxu0 %v4130
        %4457 = vmatprep.subr.bf16.mxu0 %v4139
        %4458 = vmatpush1.bf16.msra.mxu0 %v4138
        %4459 = vmatprep.mubr.bf16.mxu0 %v3455
        %4460 = vmatmul.mubr.bf16.gmra.mrb[0].mxu0 %v3454
        %v4461 = vpop.f32.mrb[0].mxu0
        %v4462 = vadd.f32 %v3615, %v4461
        %v4463 = vpop.f32.mrb[0].mxu0
        %v4464 = vadd.f32 %v3619, %v4463
        %v4465 = vpop.f32.mrb[0].mxu0
        %v4466 = vadd.f32 %v3615, %v4465
        %v4467 = vpop.f32.mrb[0].mxu0
        %v4468 = vadd.f32 %v3619, %v4467
        %4469 = vmatprep.mubr.bf16.mxu0 %v3457
        %4470 = vmatmul.mubr.bf16.gmra.mrb[0].mxu0 %v3456
        %v4471 = vpop.f32.mrb[0].mxu0
        %v4472 = vadd.f32 %v3615, %v4471
        %v4473 = vpop.f32.mrb[0].mxu0
        %v4474 = vadd.f32 %v3619, %v4473
        %v4475 = vpop.f32.mrb[0].mxu0
        %v4476 = vadd.f32 %v3615, %v4475
        %v4477 = vpop.f32.mrb[0].mxu0
        %v4478 = vadd.f32 %v3619, %v4477
        %4479 = vdwg.mxu0
        %v4480 = vmul.f32 %v4303, %v4303
        %v4481 = vmul.f32 %v4305, %v4305
        %v4482 = vmul.f32 %v4356, %v4356
        %v4483 = vmul.f32 %v4358, %v4358
        %v4484 = vmul.f32 %v4409, %v4409
        %v4485 = vmul.f32 %v4411, %v4411
        %v4486 = vmul.f32 %v4462, %v4462
        %v4487 = vmul.f32 %v4464, %v4464
        %v4488 = vmul.f32 %v4307, %v4307
        %v4489 = vmul.f32 %v4309, %v4309
        %v4490 = vmul.f32 %v4360, %v4360
        %v4491 = vmul.f32 %v4362, %v4362
        %v4492 = vmul.f32 %v4413, %v4413
        %v4493 = vmul.f32 %v4415, %v4415
        %v4494 = vmul.f32 %v4466, %v4466
        %v4495 = vmul.f32 %v4468, %v4468
        %v4496 = vmul.f32 %v4313, %v4313
        %v4497 = vmul.f32 %v4315, %v4315
        %v4498 = vmul.f32 %v4366, %v4366
        %v4499 = vmul.f32 %v4368, %v4368
        %v4500 = vmul.f32 %v4419, %v4419
        %v4501 = vmul.f32 %v4421, %v4421
        %v4502 = vmul.f32 %v4472, %v4472
        %v4503 = vmul.f32 %v4474, %v4474
        %v4504 = vmul.f32 %v4317, %v4317
        %v4505 = vmul.f32 %v4319, %v4319
        %v4506 = vmul.f32 %v4370, %v4370
        %v4507 = vmul.f32 %v4372, %v4372
        %v4508 = vmul.f32 %v4423, %v4423
        %v4509 = vmul.f32 %v4425, %v4425
        %v4510 = vmul.f32 %v4476, %v4476
        %v4511 = vmul.f32 %v4478, %v4478
        %v4512 = vmul.f32 %v4303, %v4480
        %v4513 = vmul.f32 %v4305, %v4481
        %v4514 = vmul.f32 %v4356, %v4482
        %v4515 = vmul.f32 %v4358, %v4483
        %v4516 = vmul.f32 %v4409, %v4484
        %v4517 = vmul.f32 %v4411, %v4485
        %v4518 = vmul.f32 %v4462, %v4486
        %v4519 = vmul.f32 %v4464, %v4487
        %v4520 = vmul.f32 %v4307, %v4488
        %v4521 = vmul.f32 %v4309, %v4489
        %v4522 = vmul.f32 %v4360, %v4490
        %v4523 = vmul.f32 %v4362, %v4491
        %v4524 = vmul.f32 %v4413, %v4492
        %v4525 = vmul.f32 %v4415, %v4493
        %v4526 = vmul.f32 %v4466, %v4494
        %v4527 = vmul.f32 %v4468, %v4495
        %v4528 = vmul.f32 %v4313, %v4496
        %v4529 = vmul.f32 %v4315, %v4497
        %v4530 = vmul.f32 %v4366, %v4498
        %v4531 = vmul.f32 %v4368, %v4499
        %v4532 = vmul.f32 %v4419, %v4500
        %v4533 = vmul.f32 %v4421, %v4501
        %v4534 = vmul.f32 %v4472, %v4502
        %v4535 = vmul.f32 %v4474, %v4503
        %v4536 = vmul.f32 %v4317, %v4504
        %v4537 = vmul.f32 %v4319, %v4505
        %v4538 = vmul.f32 %v4370, %v4506
        %v4539 = vmul.f32 %v4372, %v4507
        %v4540 = vmul.f32 %v4423, %v4508
        %v4541 = vmul.f32 %v4425, %v4509
        %v4542 = vmul.f32 %v4476, %v4510
        %v4543 = vmul.f32 %v4478, %v4511
        %v4544 = vmul.f32 %v4512, 0.044715
        %v4545 = vmul.f32 %v4513, 0.044715
        %v4546 = vmul.f32 %v4514, 0.044715
        %v4547 = vmul.f32 %v4515, 0.044715
        %v4548 = vmul.f32 %v4516, 0.044715
        %v4549 = vmul.f32 %v4517, 0.044715
        %v4550 = vmul.f32 %v4518, 0.044715
        %v4551 = vmul.f32 %v4519, 0.044715
        %v4552 = vmul.f32 %v4520, 0.044715
        %v4553 = vmul.f32 %v4521, 0.044715
        %v4554 = vmul.f32 %v4522, 0.044715
        %v4555 = vmul.f32 %v4523, 0.044715
        %v4556 = vmul.f32 %v4524, 0.044715
        %v4557 = vmul.f32 %v4525, 0.044715
        %v4558 = vmul.f32 %v4526, 0.044715
        %v4559 = vmul.f32 %v4527, 0.044715
        %v4560 = vmul.f32 %v4528, 0.044715
        %v4561 = vmul.f32 %v4529, 0.044715
        %v4562 = vmul.f32 %v4530, 0.044715
        %v4563 = vmul.f32 %v4531, 0.044715
        %v4564 = vmul.f32 %v4532, 0.044715
        %v4565 = vmul.f32 %v4533, 0.044715
        %v4566 = vmul.f32 %v4534, 0.044715
        %v4567 = vmul.f32 %v4535, 0.044715
        %v4568 = vmul.f32 %v4536, 0.044715
        %v4569 = vmul.f32 %v4537, 0.044715
        %v4570 = vmul.f32 %v4538, 0.044715
        %v4571 = vmul.f32 %v4539, 0.044715
        %v4572 = vmul.f32 %v4540, 0.044715
        %v4573 = vmul.f32 %v4541, 0.044715
        %v4574 = vmul.f32 %v4542, 0.044715
        %v4575 = vmul.f32 %v4543, 0.044715
        %v4576 = vadd.f32 %v4303, %v4544
        %v4577 = vadd.f32 %v4305, %v4545
        %v4578 = vadd.f32 %v4356, %v4546
        %v4579 = vadd.f32 %v4358, %v4547
        %v4580 = vadd.f32 %v4409, %v4548
        %v4581 = vadd.f32 %v4411, %v4549
        %v4582 = vadd.f32 %v4462, %v4550
        %v4583 = vadd.f32 %v4464, %v4551
        %v4584 = vadd.f32 %v4307, %v4552
        %v4585 = vadd.f32 %v4309, %v4553
        %v4586 = vadd.f32 %v4360, %v4554
        %v4587 = vadd.f32 %v4362, %v4555
        %v4588 = vadd.f32 %v4413, %v4556
        %v4589 = vadd.f32 %v4415, %v4557
        %v4590 = vadd.f32 %v4466, %v4558
        %v4591 = vadd.f32 %v4468, %v4559
        %v4592 = vadd.f32 %v4313, %v4560
        %v4593 = vadd.f32 %v4315, %v4561
        %v4594 = vadd.f32 %v4366, %v4562
        %v4595 = vadd.f32 %v4368, %v4563
        %v4596 = vadd.f32 %v4419, %v4564
        %v4597 = vadd.f32 %v4421, %v4565
        %v4598 = vadd.f32 %v4472, %v4566
        %v4599 = vadd.f32 %v4474, %v4567
        %v4600 = vadd.f32 %v4317, %v4568
        %v4601 = vadd.f32 %v4319, %v4569
        %v4602 = vadd.f32 %v4370, %v4570
        %v4603 = vadd.f32 %v4372, %v4571
        %v4604 = vadd.f32 %v4423, %v4572
        %v4605 = vadd.f32 %v4425, %v4573
        %v4606 = vadd.f32 %v4476, %v4574
        %v4607 = vadd.f32 %v4478, %v4575
        %v4608 = vmul.f32 %v4576, 0.7978846
        %v4609 = vmul.f32 %v4577, 0.7978846
        %v4610 = vmul.f32 %v4578, 0.7978846
        %v4611 = vmul.f32 %v4579, 0.7978846
        %v4612 = vmul.f32 %v4580, 0.7978846
        %v4613 = vmul.f32 %v4581, 0.7978846
        %v4614 = vmul.f32 %v4582, 0.7978846
        %v4615 = vmul.f32 %v4583, 0.7978846
        %v4616 = vmul.f32 %v4584, 0.7978846
        %v4617 = vmul.f32 %v4585, 0.7978846
        %v4618 = vmul.f32 %v4586, 0.7978846
        %v4619 = vmul.f32 %v4587, 0.7978846
        %v4620 = vmul.f32 %v4588, 0.7978846
        %v4621 = vmul.f32 %v4589, 0.7978846
        %v4622 = vmul.f32 %v4590, 0.7978846
        %v4623 = vmul.f32 %v4591, 0.7978846
        %v4624 = vmul.f32 %v4592, 0.7978846
        %v4625 = vmul.f32 %v4593, 0.7978846
        %v4626 = vmul.f32 %v4594, 0.7978846
        %v4627 = vmul.f32 %v4595, 0.7978846
        %v4628 = vmul.f32 %v4596, 0.7978846
        %v4629 = vmul.f32 %v4597, 0.7978846
        %v4630 = vmul.f32 %v4598, 0.7978846
        %v4631 = vmul.f32 %v4599, 0.7978846
        %v4632 = vmul.f32 %v4600, 0.7978846
        %v4633 = vmul.f32 %v4601, 0.7978846
        %v4634 = vmul.f32 %v4602, 0.7978846
        %v4635 = vmul.f32 %v4603, 0.7978846
        %v4636 = vmul.f32 %v4604, 0.7978846
        %v4637 = vmul.f32 %v4605, 0.7978846
        %v4638 = vmul.f32 %v4606, 0.7978846
        %v4639 = vmul.f32 %v4607, 0.7978846
        %v4640 = vtanh.pop %v4608
        %v4641 = vtanh.pop %v4609
        %v4642 = vtanh.pop %v4610
        %v4643 = vtanh.pop %v4611
        %v4644 = vtanh.pop %v4612
        %v4645 = vtanh.pop %v4613
        %v4646 = vtanh.pop %v4614
        %v4647 = vtanh.pop %v4615
        %v4648 = vtanh.pop %v4616
        %v4649 = vtanh.pop %v4617
        %v4650 = vtanh.pop %v4618
        %v4651 = vtanh.pop %v4619
        %v4652 = vtanh.pop %v4620
        %v4653 = vtanh.pop %v4621
        %v4654 = vtanh.pop %v4622
        %v4655 = vtanh.pop %v4623
        %v4656 = vtanh.pop %v4624
        %v4657 = vtanh.pop %v4625
        %v4658 = vtanh.pop %v4626
        %v4659 = vtanh.pop %v4627
        %v4660 = vtanh.pop %v4628
        %v4661 = vtanh.pop %v4629
        %v4662 = vtanh.pop %v4630
        %v4663 = vtanh.pop %v4631
        %v4664 = vtanh.pop %v4632
        %v4665 = vtanh.pop %v4633
        %v4666 = vtanh.pop %v4634
        %v4667 = vtanh.pop %v4635
        %v4668 = vtanh.pop %v4636
        %v4669 = vtanh.pop %v4637
        %v4670 = vtanh.pop %v4638
        %v4671 = vtanh.pop %v4639
        %v4672 = vadd.f32 %v4640, 1.0
        %v4673 = vadd.f32 %v4641, 1.0
        %v4674 = vadd.f32 %v4642, 1.0
        %v4675 = vadd.f32 %v4643, 1.0
        %v4676 = vadd.f32 %v4644, 1.0
        %v4677 = vadd.f32 %v4645, 1.0
        %v4678 = vadd.f32 %v4646, 1.0
        %v4679 = vadd.f32 %v4647, 1.0
        %v4680 = vadd.f32 %v4648, 1.0
        %v4681 = vadd.f32 %v4649, 1.0
        %v4682 = vadd.f32 %v4650, 1.0
        %v4683 = vadd.f32 %v4651, 1.0
        %v4684 = vadd.f32 %v4652, 1.0
        %v4685 = vadd.f32 %v4653, 1.0
        %v4686 = vadd.f32 %v4654, 1.0
        %v4687 = vadd.f32 %v4655, 1.0
        %v4688 = vadd.f32 %v4656, 1.0
        %v4689 = vadd.f32 %v4657, 1.0
        %v4690 = vadd.f32 %v4658, 1.0
        %v4691 = vadd.f32 %v4659, 1.0
        %v4692 = vadd.f32 %v4660, 1.0
        %v4693 = vadd.f32 %v4661, 1.0
        %v4694 = vadd.f32 %v4662, 1.0
        %v4695 = vadd.f32 %v4663, 1.0
        %v4696 = vadd.f32 %v4664, 1.0
        %v4697 = vadd.f32 %v4665, 1.0
        %v4698 = vadd.f32 %v4666, 1.0
        %v4699 = vadd.f32 %v4667, 1.0
        %v4700 = vadd.f32 %v4668, 1.0
        %v4701 = vadd.f32 %v4669, 1.0
        %v4702 = vadd.f32 %v4670, 1.0
        %v4703 = vadd.f32 %v4671, 1.0
        %v4704 = vmul.f32 %v4672, 0.5
        %v4705 = vmul.f32 %v4673, 0.5
        %v4706 = vmul.f32 %v4674, 0.5
        %v4707 = vmul.f32 %v4675, 0.5
        %v4708 = vmul.f32 %v4676, 0.5
        %v4709 = vmul.f32 %v4677, 0.5
        %v4710 = vmul.f32 %v4678, 0.5
        %v4711 = vmul.f32 %v4679, 0.5
        %v4712 = vmul.f32 %v4680, 0.5
        %v4713 = vmul.f32 %v4681, 0.5
        %v4714 = vmul.f32 %v4682, 0.5
        %v4715 = vmul.f32 %v4683, 0.5
        %v4716 = vmul.f32 %v4684, 0.5
        %v4717 = vmul.f32 %v4685, 0.5
        %v4718 = vmul.f32 %v4686, 0.5
        %v4719 = vmul.f32 %v4687, 0.5
        %v4720 = vmul.f32 %v4688, 0.5
        %v4721 = vmul.f32 %v4689, 0.5
        %v4722 = vmul.f32 %v4690, 0.5
        %v4723 = vmul.f32 %v4691, 0.5
        %v4724 = vmul.f32 %v4692, 0.5
        %v4725 = vmul.f32 %v4693, 0.5
        %v4726 = vmul.f32 %v4694, 0.5
        %v4727 = vmul.f32 %v4695, 0.5
        %v4728 = vmul.f32 %v4696, 0.5
        %v4729 = vmul.f32 %v4697, 0.5
        %v4730 = vmul.f32 %v4698, 0.5
        %v4731 = vmul.f32 %v4699, 0.5
        %v4732 = vmul.f32 %v4700, 0.5
        %v4733 = vmul.f32 %v4701, 0.5
        %v4734 = vmul.f32 %v4702, 0.5
        %v4735 = vmul.f32 %v4703, 0.5
        %v4736 = vmul.f32 %v4303, %v4704
        %v4737 = vmul.f32 %v4305, %v4705
        %v4738 = vmul.f32 %v4356, %v4706
        %v4739 = vmul.f32 %v4358, %v4707
        %v4740 = vmul.f32 %v4409, %v4708
        %v4741 = vmul.f32 %v4411, %v4709
        %v4742 = vmul.f32 %v4462, %v4710
        %v4743 = vmul.f32 %v4464, %v4711
        %v4744 = vmul.f32 %v4307, %v4712
        %v4745 = vmul.f32 %v4309, %v4713
        %v4746 = vmul.f32 %v4360, %v4714
        %v4747 = vmul.f32 %v4362, %v4715
        %v4748 = vmul.f32 %v4413, %v4716
        %v4749 = vmul.f32 %v4415, %v4717
        %v4750 = vmul.f32 %v4466, %v4718
        %v4751 = vmul.f32 %v4468, %v4719
        %v4752 = vmul.f32 %v4313, %v4720
        %v4753 = vmul.f32 %v4315, %v4721
        %v4754 = vmul.f32 %v4366, %v4722
        %v4755 = vmul.f32 %v4368, %v4723
        %v4756 = vmul.f32 %v4419, %v4724
        %v4757 = vmul.f32 %v4421, %v4725
        %v4758 = vmul.f32 %v4472, %v4726
        %v4759 = vmul.f32 %v4474, %v4727
        %v4760 = vmul.f32 %v4317, %v4728
        %v4761 = vmul.f32 %v4319, %v4729
        %v4762 = vmul.f32 %v4370, %v4730
        %v4763 = vmul.f32 %v4372, %v4731
        %v4764 = vmul.f32 %v4423, %v4732
        %v4765 = vmul.f32 %v4425, %v4733
        %v4766 = vmul.f32 %v4476, %v4734
        %v4767 = vmul.f32 %v4478, %v4735
        %v4768 = vpack.c.bf16 %v4744, %v4736
        %v4769 = vpack.c.bf16 %v4745, %v4737
        %v4770 = vpack.c.bf16 %v4746, %v4738
        %v4771 = vpack.c.bf16 %v4747, %v4739
        %v4772 = vpack.c.bf16 %v4748, %v4740
        %v4773 = vpack.c.bf16 %v4749, %v4741
        %v4774 = vpack.c.bf16 %v4750, %v4742
        %v4775 = vpack.c.bf16 %v4751, %v4743
        %v4776 = vpack.c.bf16 %v4760, %v4752
        %v4777 = vpack.c.bf16 %v4761, %v4753
        %v4778 = vpack.c.bf16 %v4762, %v4754
        %v4779 = vpack.c.bf16 %v4763, %v4755
        %v4780 = vpack.c.bf16 %v4764, %v4756
        %v4781 = vpack.c.bf16 %v4765, %v4757
        %v4782 = vpack.c.bf16 %v4766, %v4758
        %v4783 = vpack.c.bf16 %v4767, %v4759
        %v4784 = vld [vmem:[%s723] sm:$0xff]
        %v4785 = vld [vmem:[%s723 + $0x8] sm:$0xff]
        %v4786 = vld [vmem:[%s723 + $0x10] sm:$0xff]
        %v4787 = vld [vmem:[%s723 + $0x18] sm:$0xff]
        %v4788 = vld [vmem:[%s723 + $0x20] sm:$0xff]
        %v4789 = vld [vmem:[%s723 + $0x28] sm:$0xff]
        %v4790 = vld [vmem:[%s723 + $0x30] sm:$0xff]
        %v4791 = vld [vmem:[%s723 + $0x38] sm:$0xff]
        %v4792 = vld [vmem:[%s723 + $0x40] sm:$0xff]
        %v4793 = vld [vmem:[%s723 + $0x48] sm:$0xff]
        %v4794 = vld [vmem:[%s723 + $0x50] sm:$0xff]
        %v4795 = vld [vmem:[%s723 + $0x58] sm:$0xff]
        %v4796 = vld [vmem:[%s723 + $0x60] sm:$0xff]
        %v4797 = vld [vmem:[%s723 + $0x68] sm:$0xff]
        %v4798 = vld [vmem:[%s723 + $0x70] sm:$0xff]
        %v4799 = vld [vmem:[%s723 + $0x78] sm:$0xff]
        %v4800 = vld [vmem:[%s723 + $0x80] sm:$0xff]
        %v4801 = vld [vmem:[%s723 + $0x88] sm:$0xff]
        %v4802 = vld [vmem:[%s723 + $0x90] sm:$0xff]
        %v4803 = vld [vmem:[%s723 + $0x98] sm:$0xff]
        %v4804 = vld [vmem:[%s723 + $0xa0] sm:$0xff]
        %v4805 = vld [vmem:[%s723 + $0xa8] sm:$0xff]
        %v4806 = vld [vmem:[%s723 + $0xb0] sm:$0xff]
        %v4807 = vld [vmem:[%s723 + $0xb8] sm:$0xff]
        %v4808 = vld [vmem:[%s723 + $0xc0] sm:$0xff]
        %v4809 = vld [vmem:[%s723 + $0xc8] sm:$0xff]
        %v4810 = vld [vmem:[%s723 + $0xd0] sm:$0xff]
        %v4811 = vld [vmem:[%s723 + $0xd8] sm:$0xff]
        %v4812 = vld [vmem:[%s723 + $0xe0] sm:$0xff]
        %v4813 = vld [vmem:[%s723 + $0xe8] sm:$0xff]
        %v4814 = vld [vmem:[%s723 + $0xf0] sm:$0xff]
        %v4815 = vld [vmem:[%s723 + $0xf8] sm:$0xff]
        %v4816 = vld [vmem:[%s723 + $0x100] sm:$0xff]
        %v4817 = vld [vmem:[%s723 + $0x108] sm:$0xff]
        %v4818 = vld [vmem:[%s723 + $0x110] sm:$0xff]
        %v4819 = vld [vmem:[%s723 + $0x118] sm:$0xff]
        %v4820 = vld [vmem:[%s723 + $0x120] sm:$0xff]
        %v4821 = vld [vmem:[%s723 + $0x128] sm:$0xff]
        %v4822 = vld [vmem:[%s723 + $0x130] sm:$0xff]
        %v4823 = vld [vmem:[%s723 + $0x138] sm:$0xff]
        %v4824 = vld [vmem:[%s723 + $0x140] sm:$0xff]
        %v4825 = vld [vmem:[%s723 + $0x148] sm:$0xff]
        %v4826 = vld [vmem:[%s723 + $0x150] sm:$0xff]
        %v4827 = vld [vmem:[%s723 + $0x158] sm:$0xff]
        %v4828 = vld [vmem:[%s723 + $0x160] sm:$0xff]
        %v4829 = vld [vmem:[%s723 + $0x168] sm:$0xff]
        %v4830 = vld [vmem:[%s723 + $0x170] sm:$0xff]
        %v4831 = vld [vmem:[%s723 + $0x178] sm:$0xff]
        %v4832 = vld [vmem:[%s723 + $0x180] sm:$0xff]
        %v4833 = vld [vmem:[%s723 + $0x188] sm:$0xff]
        %v4834 = vld [vmem:[%s723 + $0x190] sm:$0xff]
        %v4835 = vld [vmem:[%s723 + $0x198] sm:$0xff]
        %v4836 = vld [vmem:[%s723 + $0x1a0] sm:$0xff]
        %v4837 = vld [vmem:[%s723 + $0x1a8] sm:$0xff]
        %v4838 = vld [vmem:[%s723 + $0x1b0] sm:$0xff]
        %v4839 = vld [vmem:[%s723 + $0x1b8] sm:$0xff]
        %v4840 = vld [vmem:[%s723 + $0x1c0] sm:$0xff]
        %v4841 = vld [vmem:[%s723 + $0x1c8] sm:$0xff]
        %v4842 = vld [vmem:[%s723 + $0x1d0] sm:$0xff]
        %v4843 = vld [vmem:[%s723 + $0x1d8] sm:$0xff]
        %v4844 = vld [vmem:[%s723 + $0x1e0] sm:$0xff]
        %v4845 = vld [vmem:[%s723 + $0x1e8] sm:$0xff]
        %v4846 = vld [vmem:[%s723 + $0x1f0] sm:$0xff]
        %v4847 = vld [vmem:[%s723 + $0x1f8] sm:$0xff]
        %v4848 = vld [vmem:[%s723 + $0x200] sm:$0xff]
        %v4849 = vld [vmem:[%s723 + $0x208] sm:$0xff]
        %v4850 = vld [vmem:[%s723 + $0x210] sm:$0xff]
        %v4851 = vld [vmem:[%s723 + $0x218] sm:$0xff]
        %v4852 = vld [vmem:[%s723 + $0x220] sm:$0xff]
        %v4853 = vld [vmem:[%s723 + $0x228] sm:$0xff]
        %v4854 = vld [vmem:[%s723 + $0x230] sm:$0xff]
        %v4855 = vld [vmem:[%s723 + $0x238] sm:$0xff]
        %v4856 = vld [vmem:[%s723 + $0x240] sm:$0xff]
        %v4857 = vld [vmem:[%s723 + $0x248] sm:$0xff]
        %v4858 = vld [vmem:[%s723 + $0x250] sm:$0xff]
        %v4859 = vld [vmem:[%s723 + $0x258] sm:$0xff]
        %v4860 = vld [vmem:[%s723 + $0x260] sm:$0xff]
        %v4861 = vld [vmem:[%s723 + $0x268] sm:$0xff]
        %v4862 = vld [vmem:[%s723 + $0x270] sm:$0xff]
        %v4863 = vld [vmem:[%s723 + $0x278] sm:$0xff]
        %v4864 = vld [vmem:[%s723 + $0x280] sm:$0xff]
        %v4865 = vld [vmem:[%s723 + $0x288] sm:$0xff]
        %v4866 = vld [vmem:[%s723 + $0x290] sm:$0xff]
        %v4867 = vld [vmem:[%s723 + $0x298] sm:$0xff]
        %v4868 = vld [vmem:[%s723 + $0x2a0] sm:$0xff]
        %v4869 = vld [vmem:[%s723 + $0x2a8] sm:$0xff]
        %v4870 = vld [vmem:[%s723 + $0x2b0] sm:$0xff]
        %v4871 = vld [vmem:[%s723 + $0x2b8] sm:$0xff]
        %v4872 = vld [vmem:[%s723 + $0x2c0] sm:$0xff]
        %v4873 = vld [vmem:[%s723 + $0x2c8] sm:$0xff]
        %v4874 = vld [vmem:[%s723 + $0x2d0] sm:$0xff]
        %v4875 = vld [vmem:[%s723 + $0x2d8] sm:$0xff]
        %v4876 = vld [vmem:[%s723 + $0x2e0] sm:$0xff]
        %v4877 = vld [vmem:[%s723 + $0x2e8] sm:$0xff]
        %v4878 = vld [vmem:[%s723 + $0x2f0] sm:$0xff]
        %v4879 = vld [vmem:[%s723 + $0x2f8] sm:$0xff]
        %v4880 = vld [vmem:[%s723 + $0x300] sm:$0xff]
        %v4881 = vld [vmem:[%s723 + $0x308] sm:$0xff]
        %v4882 = vld [vmem:[%s723 + $0x310] sm:$0xff]
        %v4883 = vld [vmem:[%s723 + $0x318] sm:$0xff]
        %v4884 = vld [vmem:[%s723 + $0x320] sm:$0xff]
        %v4885 = vld [vmem:[%s723 + $0x328] sm:$0xff]
        %v4886 = vld [vmem:[%s723 + $0x330] sm:$0xff]
        %v4887 = vld [vmem:[%s723 + $0x338] sm:$0xff]
        %v4888 = vld [vmem:[%s723 + $0x340] sm:$0xff]
        %v4889 = vld [vmem:[%s723 + $0x348] sm:$0xff]
        %v4890 = vld [vmem:[%s723 + $0x350] sm:$0xff]
        %v4891 = vld [vmem:[%s723 + $0x358] sm:$0xff]
        %v4892 = vld [vmem:[%s723 + $0x360] sm:$0xff]
        %v4893 = vld [vmem:[%s723 + $0x368] sm:$0xff]
        %v4894 = vld [vmem:[%s723 + $0x370] sm:$0xff]
        %v4895 = vld [vmem:[%s723 + $0x378] sm:$0xff]
        %v4896 = vld [vmem:[%s723 + $0x380] sm:$0xff]
        %v4897 = vld [vmem:[%s723 + $0x388] sm:$0xff]
        %v4898 = vld [vmem:[%s723 + $0x390] sm:$0xff]
        %v4899 = vld [vmem:[%s723 + $0x398] sm:$0xff]
        %v4900 = vld [vmem:[%s723 + $0x3a0] sm:$0xff]
        %v4901 = vld [vmem:[%s723 + $0x3a8] sm:$0xff]
        %v4902 = vld [vmem:[%s723 + $0x3b0] sm:$0xff]
        %v4903 = vld [vmem:[%s723 + $0x3b8] sm:$0xff]
        %v4904 = vld [vmem:[%s723 + $0x3c0] sm:$0xff]
        %v4905 = vld [vmem:[%s723 + $0x3c8] sm:$0xff]
        %v4906 = vld [vmem:[%s723 + $0x3d0] sm:$0xff]
        %v4907 = vld [vmem:[%s723 + $0x3d8] sm:$0xff]
        %v4908 = vld [vmem:[%s723 + $0x3e0] sm:$0xff]
        %v4909 = vld [vmem:[%s723 + $0x3e8] sm:$0xff]
        %v4910 = vld [vmem:[%s723 + $0x3f0] sm:$0xff]
        %v4911 = vld [vmem:[%s723 + $0x3f8] sm:$0xff]
        %v4912 = vld [vmem:[%s732] sm:$0x3]
        %v4914 = vlaneseq
        %v4915 = vshrl.u32 %v4914, 7
        %v4916 = vsub.s32 0, %v4915
        %v4917 = vrot.slane %v4912, %v4916
        %v4918 = vlaneseq
        %v4919 = vshrl.u32 %v4918, 7
        %v4920 = vsub.s32 1, %v4919
        %v4921 = vrot.slane %v4912, %v4920
        %v5052 = vunpack.c.l.b16 %v4784
        %v5053 = vunpack.c.h.b16 %v4784
        %v5054 = vunpack.c.l.b16 %v4785
        %v5055 = vunpack.c.h.b16 %v4785
        %v5056 = vunpack.c.l.b16 %v4786
        %v5057 = vunpack.c.h.b16 %v4786
        %v5058 = vunpack.c.l.b16 %v4787
        %v5059 = vunpack.c.h.b16 %v4787
        %v5060 = vunpack.c.l.b16 %v4788
        %v5061 = vunpack.c.h.b16 %v4788
        %v5062 = vunpack.c.l.b16 %v4789
        %v5063 = vunpack.c.h.b16 %v4789
        %v5064 = vunpack.c.l.b16 %v4790
        %v5065 = vunpack.c.h.b16 %v4790
        %v5066 = vunpack.c.l.b16 %v4791
        %v5067 = vunpack.c.h.b16 %v4791
        %v5068 = vunpack.c.l.b16 %v4792
        %v5069 = vunpack.c.h.b16 %v4792
        %v5070 = vunpack.c.l.b16 %v4793
        %v5071 = vunpack.c.h.b16 %v4793
        %v5072 = vunpack.c.l.b16 %v4794
        %v5073 = vunpack.c.h.b16 %v4794
        %v5074 = vunpack.c.l.b16 %v4795
        %v5075 = vunpack.c.h.b16 %v4795
        %v5076 = vunpack.c.l.b16 %v4796
        %v5077 = vunpack.c.h.b16 %v4796
        %v5078 = vunpack.c.l.b16 %v4797
        %v5079 = vunpack.c.h.b16 %v4797
        %v5080 = vunpack.c.l.b16 %v4798
        %v5081 = vunpack.c.h.b16 %v4798
        %v5082 = vunpack.c.l.b16 %v4799
        %v5083 = vunpack.c.h.b16 %v4799
        %v5084 = vunpack.c.l.b16 %v4800
        %v5085 = vunpack.c.h.b16 %v4800
        %v5086 = vunpack.c.l.b16 %v4801
        %v5087 = vunpack.c.h.b16 %v4801
        %v5088 = vunpack.c.l.b16 %v4802
        %v5089 = vunpack.c.h.b16 %v4802
        %v5090 = vunpack.c.l.b16 %v4803
        %v5091 = vunpack.c.h.b16 %v4803
        %v5092 = vunpack.c.l.b16 %v4804
        %v5093 = vunpack.c.h.b16 %v4804
        %v5094 = vunpack.c.l.b16 %v4805
        %v5095 = vunpack.c.h.b16 %v4805
        %v5096 = vunpack.c.l.b16 %v4806
        %v5097 = vunpack.c.h.b16 %v4806
        %v5098 = vunpack.c.l.b16 %v4807
        %v5099 = vunpack.c.h.b16 %v4807
        %v5100 = vunpack.c.l.b16 %v4808
        %v5101 = vunpack.c.h.b16 %v4808
        %v5102 = vunpack.c.l.b16 %v4809
        %v5103 = vunpack.c.h.b16 %v4809
        %v5104 = vunpack.c.l.b16 %v4810
        %v5105 = vunpack.c.h.b16 %v4810
        %v5106 = vunpack.c.l.b16 %v4811
        %v5107 = vunpack.c.h.b16 %v4811
        %v5108 = vunpack.c.l.b16 %v4812
        %v5109 = vunpack.c.h.b16 %v4812
        %v5110 = vunpack.c.l.b16 %v4813
        %v5111 = vunpack.c.h.b16 %v4813
        %v5112 = vunpack.c.l.b16 %v4814
        %v5113 = vunpack.c.h.b16 %v4814
        %v5114 = vunpack.c.l.b16 %v4815
        %v5115 = vunpack.c.h.b16 %v4815
        %v5116 = vunpack.c.l.b16 %v4816
        %v5117 = vunpack.c.h.b16 %v4816
        %v5118 = vunpack.c.l.b16 %v4817
        %v5119 = vunpack.c.h.b16 %v4817
        %v5120 = vunpack.c.l.b16 %v4818
        %v5121 = vunpack.c.h.b16 %v4818
        %v5122 = vunpack.c.l.b16 %v4819
        %v5123 = vunpack.c.h.b16 %v4819
        %v5124 = vunpack.c.l.b16 %v4820
        %v5125 = vunpack.c.h.b16 %v4820
        %v5126 = vunpack.c.l.b16 %v4821
        %v5127 = vunpack.c.h.b16 %v4821
        %v5128 = vunpack.c.l.b16 %v4822
        %v5129 = vunpack.c.h.b16 %v4822
        %v5130 = vunpack.c.l.b16 %v4823
        %v5131 = vunpack.c.h.b16 %v4823
        %v5132 = vunpack.c.l.b16 %v4824
        %v5133 = vunpack.c.h.b16 %v4824
        %v5134 = vunpack.c.l.b16 %v4825
        %v5135 = vunpack.c.h.b16 %v4825
        %v5136 = vunpack.c.l.b16 %v4826
        %v5137 = vunpack.c.h.b16 %v4826
        %v5138 = vunpack.c.l.b16 %v4827
        %v5139 = vunpack.c.h.b16 %v4827
        %v5140 = vunpack.c.l.b16 %v4828
        %v5141 = vunpack.c.h.b16 %v4828
        %v5142 = vunpack.c.l.b16 %v4829
        %v5143 = vunpack.c.h.b16 %v4829
        %v5144 = vunpack.c.l.b16 %v4830
        %v5145 = vunpack.c.h.b16 %v4830
        %v5146 = vunpack.c.l.b16 %v4831
        %v5147 = vunpack.c.h.b16 %v4831
        %v5148 = vunpack.c.l.b16 %v4832
        %v5149 = vunpack.c.h.b16 %v4832
        %v5150 = vunpack.c.l.b16 %v4833
        %v5151 = vunpack.c.h.b16 %v4833
        %v5152 = vunpack.c.l.b16 %v4834
        %v5153 = vunpack.c.h.b16 %v4834
        %v5154 = vunpack.c.l.b16 %v4835
        %v5155 = vunpack.c.h.b16 %v4835
        %v5156 = vunpack.c.l.b16 %v4836
        %v5157 = vunpack.c.h.b16 %v4836
        %v5158 = vunpack.c.l.b16 %v4837
        %v5159 = vunpack.c.h.b16 %v4837
        %v5160 = vunpack.c.l.b16 %v4838
        %v5161 = vunpack.c.h.b16 %v4838
        %v5162 = vunpack.c.l.b16 %v4839
        %v5163 = vunpack.c.h.b16 %v4839
        %v5164 = vunpack.c.l.b16 %v4840
        %v5165 = vunpack.c.h.b16 %v4840
        %v5166 = vunpack.c.l.b16 %v4841
        %v5167 = vunpack.c.h.b16 %v4841
        %v5168 = vunpack.c.l.b16 %v4842
        %v5169 = vunpack.c.h.b16 %v4842
        %v5170 = vunpack.c.l.b16 %v4843
        %v5171 = vunpack.c.h.b16 %v4843
        %v5172 = vunpack.c.l.b16 %v4844
        %v5173 = vunpack.c.h.b16 %v4844
        %v5174 = vunpack.c.l.b16 %v4845
        %v5175 = vunpack.c.h.b16 %v4845
        %v5176 = vunpack.c.l.b16 %v4846
        %v5177 = vunpack.c.h.b16 %v4846
        %v5178 = vunpack.c.l.b16 %v4847
        %v5179 = vunpack.c.h.b16 %v4847
        %v5180 = vunpack.c.l.b16 %v4848
        %v5181 = vunpack.c.h.b16 %v4848
        %v5182 = vunpack.c.l.b16 %v4849
        %v5183 = vunpack.c.h.b16 %v4849
        %v5184 = vunpack.c.l.b16 %v4850
        %v5185 = vunpack.c.h.b16 %v4850
        %v5186 = vunpack.c.l.b16 %v4851
        %v5187 = vunpack.c.h.b16 %v4851
        %v5188 = vunpack.c.l.b16 %v4852
        %v5189 = vunpack.c.h.b16 %v4852
        %v5190 = vunpack.c.l.b16 %v4853
        %v5191 = vunpack.c.h.b16 %v4853
        %v5192 = vunpack.c.l.b16 %v4854
        %v5193 = vunpack.c.h.b16 %v4854
        %v5194 = vunpack.c.l.b16 %v4855
        %v5195 = vunpack.c.h.b16 %v4855
        %v5196 = vunpack.c.l.b16 %v4856
        %v5197 = vunpack.c.h.b16 %v4856
        %v5198 = vunpack.c.l.b16 %v4857
        %v5199 = vunpack.c.h.b16 %v4857
        %v5200 = vunpack.c.l.b16 %v4858
        %v5201 = vunpack.c.h.b16 %v4858
        %v5202 = vunpack.c.l.b16 %v4859
        %v5203 = vunpack.c.h.b16 %v4859
        %v5204 = vunpack.c.l.b16 %v4860
        %v5205 = vunpack.c.h.b16 %v4860
        %v5206 = vunpack.c.l.b16 %v4861
        %v5207 = vunpack.c.h.b16 %v4861
        %v5208 = vunpack.c.l.b16 %v4862
        %v5209 = vunpack.c.h.b16 %v4862
        %v5210 = vunpack.c.l.b16 %v4863
        %v5211 = vunpack.c.h.b16 %v4863
        %v5212 = vunpack.c.l.b16 %v4864
        %v5213 = vunpack.c.h.b16 %v4864
        %v5214 = vunpack.c.l.b16 %v4865
        %v5215 = vunpack.c.h.b16 %v4865
        %v5216 = vunpack.c.l.b16 %v4866
        %v5217 = vunpack.c.h.b16 %v4866
        %v5218 = vunpack.c.l.b16 %v4867
        %v5219 = vunpack.c.h.b16 %v4867
        %v5220 = vunpack.c.l.b16 %v4868
        %v5221 = vunpack.c.h.b16 %v4868
        %v5222 = vunpack.c.l.b16 %v4869
        %v5223 = vunpack.c.h.b16 %v4869
        %v5224 = vunpack.c.l.b16 %v4870
        %v5225 = vunpack.c.h.b16 %v4870
        %v5226 = vunpack.c.l.b16 %v4871
        %v5227 = vunpack.c.h.b16 %v4871
        %v5228 = vunpack.c.l.b16 %v4872
        %v5229 = vunpack.c.h.b16 %v4872
        %v5230 = vunpack.c.l.b16 %v4873
        %v5231 = vunpack.c.h.b16 %v4873
        %v5232 = vunpack.c.l.b16 %v4874
        %v5233 = vunpack.c.h.b16 %v4874
        %v5234 = vunpack.c.l.b16 %v4875
        %v5235 = vunpack.c.h.b16 %v4875
        %v5236 = vunpack.c.l.b16 %v4876
        %v5237 = vunpack.c.h.b16 %v4876
        %v5238 = vunpack.c.l.b16 %v4877
        %v5239 = vunpack.c.h.b16 %v4877
        %v5240 = vunpack.c.l.b16 %v4878
        %v5241 = vunpack.c.h.b16 %v4878
        %v5242 = vunpack.c.l.b16 %v4879
        %v5243 = vunpack.c.h.b16 %v4879
        %v5244 = vunpack.c.l.b16 %v4880
        %v5245 = vunpack.c.h.b16 %v4880
        %v5246 = vunpack.c.l.b16 %v4881
        %v5247 = vunpack.c.h.b16 %v4881
        %v5248 = vunpack.c.l.b16 %v4882
        %v5249 = vunpack.c.h.b16 %v4882
        %v5250 = vunpack.c.l.b16 %v4883
        %v5251 = vunpack.c.h.b16 %v4883
        %v5252 = vunpack.c.l.b16 %v4884
        %v5253 = vunpack.c.h.b16 %v4884
        %v5254 = vunpack.c.l.b16 %v4885
        %v5255 = vunpack.c.h.b16 %v4885
        %v5256 = vunpack.c.l.b16 %v4886
        %v5257 = vunpack.c.h.b16 %v4886
        %v5258 = vunpack.c.l.b16 %v4887
        %v5259 = vunpack.c.h.b16 %v4887
        %v5260 = vunpack.c.l.b16 %v4888
        %v5261 = vunpack.c.h.b16 %v4888
        %v5262 = vunpack.c.l.b16 %v4889
        %v5263 = vunpack.c.h.b16 %v4889
        %v5264 = vunpack.c.l.b16 %v4890
        %v5265 = vunpack.c.h.b16 %v4890
        %v5266 = vunpack.c.l.b16 %v4891
        %v5267 = vunpack.c.h.b16 %v4891
        %v5268 = vunpack.c.l.b16 %v4892
        %v5269 = vunpack.c.h.b16 %v4892
        %v5270 = vunpack.c.l.b16 %v4893
        %v5271 = vunpack.c.h.b16 %v4893
        %v5272 = vunpack.c.l.b16 %v4894
        %v5273 = vunpack.c.h.b16 %v4894
        %v5274 = vunpack.c.l.b16 %v4895
        %v5275 = vunpack.c.h.b16 %v4895
        %v5276 = vunpack.c.l.b16 %v4896
        %v5277 = vunpack.c.h.b16 %v4896
        %v5278 = vunpack.c.l.b16 %v4897
        %v5279 = vunpack.c.h.b16 %v4897
        %v5280 = vunpack.c.l.b16 %v4898
        %v5281 = vunpack.c.h.b16 %v4898
        %v5282 = vunpack.c.l.b16 %v4899
        %v5283 = vunpack.c.h.b16 %v4899
        %v5284 = vunpack.c.l.b16 %v4900
        %v5285 = vunpack.c.h.b16 %v4900
        %v5286 = vunpack.c.l.b16 %v4901
        %v5287 = vunpack.c.h.b16 %v4901
        %v5288 = vunpack.c.l.b16 %v4902
        %v5289 = vunpack.c.h.b16 %v4902
        %v5290 = vunpack.c.l.b16 %v4903
        %v5291 = vunpack.c.h.b16 %v4903
        %v5292 = vunpack.c.l.b16 %v4904
        %v5293 = vunpack.c.h.b16 %v4904
        %v5294 = vunpack.c.l.b16 %v4905
        %v5295 = vunpack.c.h.b16 %v4905
        %v5296 = vunpack.c.l.b16 %v4906
        %v5297 = vunpack.c.h.b16 %v4906
        %v5298 = vunpack.c.l.b16 %v4907
        %v5299 = vunpack.c.h.b16 %v4907
        %v5300 = vunpack.c.l.b16 %v4908
        %v5301 = vunpack.c.h.b16 %v4908
        %v5302 = vunpack.c.l.b16 %v4909
        %v5303 = vunpack.c.h.b16 %v4909
        %v5304 = vunpack.c.l.b16 %v4910
        %v5305 = vunpack.c.h.b16 %v4910
        %v5306 = vunpack.c.l.b16 %v4911
        %v5307 = vunpack.c.h.b16 %v4911
        %v5308 = vpack.c.b16 %v5054, %v5052
        %v5309 = vpack.c.b16 %v5055, %v5053
        %v5310 = vpack.c.b16 %v5058, %v5056
        %v5311 = vpack.c.b16 %v5059, %v5057
        %v5312 = vpack.c.b16 %v5062, %v5060
        %v5313 = vpack.c.b16 %v5063, %v5061
        %v5314 = vpack.c.b16 %v5066, %v5064
        %v5315 = vpack.c.b16 %v5067, %v5065
        %v5316 = vpack.c.b16 %v5070, %v5068
        %v5317 = vpack.c.b16 %v5071, %v5069
        %v5318 = vpack.c.b16 %v5074, %v5072
        %v5319 = vpack.c.b16 %v5075, %v5073
        %v5320 = vpack.c.b16 %v5078, %v5076
        %v5321 = vpack.c.b16 %v5079, %v5077
        %v5322 = vpack.c.b16 %v5082, %v5080
        %v5323 = vpack.c.b16 %v5083, %v5081
        %v5324 = vpack.c.b16 %v5086, %v5084
        %v5325 = vpack.c.b16 %v5087, %v5085
        %v5326 = vpack.c.b16 %v5090, %v5088
        %v5327 = vpack.c.b16 %v5091, %v5089
        %v5328 = vpack.c.b16 %v5094, %v5092
        %v5329 = vpack.c.b16 %v5095, %v5093
        %v5330 = vpack.c.b16 %v5098, %v5096
        %v5331 = vpack.c.b16 %v5099, %v5097
        %v5332 = vpack.c.b16 %v5102, %v5100
        %v5333 = vpack.c.b16 %v5103, %v5101
        %v5334 = vpack.c.b16 %v5106, %v5104
        %v5335 = vpack.c.b16 %v5107, %v5105
        %v5336 = vpack.c.b16 %v5110, %v5108
        %v5337 = vpack.c.b16 %v5111, %v5109
        %v5338 = vpack.c.b16 %v5114, %v5112
        %v5339 = vpack.c.b16 %v5115, %v5113
        %v5340 = vpack.c.b16 %v5118, %v5116
        %v5341 = vpack.c.b16 %v5119, %v5117
        %v5342 = vpack.c.b16 %v5122, %v5120
        %v5343 = vpack.c.b16 %v5123, %v5121
        %v5344 = vpack.c.b16 %v5126, %v5124
        %v5345 = vpack.c.b16 %v5127, %v5125
        %v5346 = vpack.c.b16 %v5130, %v5128
        %v5347 = vpack.c.b16 %v5131, %v5129
        %v5348 = vpack.c.b16 %v5134, %v5132
        %v5349 = vpack.c.b16 %v5135, %v5133
        %v5350 = vpack.c.b16 %v5138, %v5136
        %v5351 = vpack.c.b16 %v5139, %v5137
        %v5352 = vpack.c.b16 %v5142, %v5140
        %v5353 = vpack.c.b16 %v5143, %v5141
        %v5354 = vpack.c.b16 %v5146, %v5144
        %v5355 = vpack.c.b16 %v5147, %v5145
        %v5356 = vpack.c.b16 %v5150, %v5148
        %v5357 = vpack.c.b16 %v5151, %v5149
        %v5358 = vpack.c.b16 %v5154, %v5152
        %v5359 = vpack.c.b16 %v5155, %v5153
        %v5360 = vpack.c.b16 %v5158, %v5156
        %v5361 = vpack.c.b16 %v5159, %v5157
        %v5362 = vpack.c.b16 %v5162, %v5160
        %v5363 = vpack.c.b16 %v5163, %v5161
        %v5364 = vpack.c.b16 %v5166, %v5164
        %v5365 = vpack.c.b16 %v5167, %v5165
        %v5366 = vpack.c.b16 %v5170, %v5168
        %v5367 = vpack.c.b16 %v5171, %v5169
        %v5368 = vpack.c.b16 %v5174, %v5172
        %v5369 = vpack.c.b16 %v5175, %v5173
        %v5370 = vpack.c.b16 %v5178, %v5176
        %v5371 = vpack.c.b16 %v5179, %v5177
        %v5372 = vpack.c.b16 %v5182, %v5180
        %v5373 = vpack.c.b16 %v5183, %v5181
        %v5374 = vpack.c.b16 %v5186, %v5184
        %v5375 = vpack.c.b16 %v5187, %v5185
        %v5376 = vpack.c.b16 %v5190, %v5188
        %v5377 = vpack.c.b16 %v5191, %v5189
        %v5378 = vpack.c.b16 %v5194, %v5192
        %v5379 = vpack.c.b16 %v5195, %v5193
        %v5380 = vpack.c.b16 %v5198, %v5196
        %v5381 = vpack.c.b16 %v5199, %v5197
        %v5382 = vpack.c.b16 %v5202, %v5200
        %v5383 = vpack.c.b16 %v5203, %v5201
        %v5384 = vpack.c.b16 %v5206, %v5204
        %v5385 = vpack.c.b16 %v5207, %v5205
        %v5386 = vpack.c.b16 %v5210, %v5208
        %v5387 = vpack.c.b16 %v5211, %v5209
        %v5388 = vpack.c.b16 %v5214, %v5212
        %v5389 = vpack.c.b16 %v5215, %v5213
        %v5390 = vpack.c.b16 %v5218, %v5216
        %v5391 = vpack.c.b16 %v5219, %v5217
        %v5392 = vpack.c.b16 %v5222, %v5220
        %v5393 = vpack.c.b16 %v5223, %v5221
        %v5394 = vpack.c.b16 %v5226, %v5224
        %v5395 = vpack.c.b16 %v5227, %v5225
        %v5396 = vpack.c.b16 %v5230, %v5228
        %v5397 = vpack.c.b16 %v5231, %v5229
        %v5398 = vpack.c.b16 %v5234, %v5232
        %v5399 = vpack.c.b16 %v5235, %v5233
        %v5400 = vpack.c.b16 %v5238, %v5236
        %v5401 = vpack.c.b16 %v5239, %v5237
        %v5402 = vpack.c.b16 %v5242, %v5240
        %v5403 = vpack.c.b16 %v5243, %v5241
        %v5404 = vpack.c.b16 %v5246, %v5244
        %v5405 = vpack.c.b16 %v5247, %v5245
        %v5406 = vpack.c.b16 %v5250, %v5248
        %v5407 = vpack.c.b16 %v5251, %v5249
        %v5408 = vpack.c.b16 %v5254, %v5252
        %v5409 = vpack.c.b16 %v5255, %v5253
        %v5410 = vpack.c.b16 %v5258, %v5256
        %v5411 = vpack.c.b16 %v5259, %v5257
        %v5412 = vpack.c.b16 %v5262, %v5260
        %v5413 = vpack.c.b16 %v5263, %v5261
        %v5414 = vpack.c.b16 %v5266, %v5264
        %v5415 = vpack.c.b16 %v5267, %v5265
        %v5416 = vpack.c.b16 %v5270, %v5268
        %v5417 = vpack.c.b16 %v5271, %v5269
        %v5418 = vpack.c.b16 %v5274, %v5272
        %v5419 = vpack.c.b16 %v5275, %v5273
        %v5420 = vpack.c.b16 %v5278, %v5276
        %v5421 = vpack.c.b16 %v5279, %v5277
        %v5422 = vpack.c.b16 %v5282, %v5280
        %v5423 = vpack.c.b16 %v5283, %v5281
        %v5424 = vpack.c.b16 %v5286, %v5284
        %v5425 = vpack.c.b16 %v5287, %v5285
        %v5426 = vpack.c.b16 %v5290, %v5288
        %v5427 = vpack.c.b16 %v5291, %v5289
        %v5428 = vpack.c.b16 %v5294, %v5292
        %v5429 = vpack.c.b16 %v5295, %v5293
        %v5430 = vpack.c.b16 %v5298, %v5296
        %v5431 = vpack.c.b16 %v5299, %v5297
        %v5432 = vpack.c.b16 %v5302, %v5300
        %v5433 = vpack.c.b16 %v5303, %v5301
        %v5434 = vpack.c.b16 %v5306, %v5304
        %v5435 = vpack.c.b16 %v5307, %v5305
        %5564 = vmatprep.subr.bf16.mxu0 %v5309
        %5565 = vmatpush1.bf16.msra.mxu0 %v5308
        %5566 = vmatprep.subr.bf16.mxu0 %v5311
        %5567 = vmatpush1.bf16.msra.mxu0 %v5310
        %5568 = vmatprep.subr.bf16.mxu0 %v5313
        %5569 = vmatpush1.bf16.msra.mxu0 %v5312
        %5570 = vmatprep.subr.bf16.mxu0 %v5315
        %5571 = vmatpush1.bf16.msra.mxu0 %v5314
        %5572 = vmatprep.subr.bf16.mxu0 %v5317
        %5573 = vmatpush1.bf16.msra.mxu0 %v5316
        %5574 = vmatprep.subr.bf16.mxu0 %v5319
        %5575 = vmatpush1.bf16.msra.mxu0 %v5318
        %5576 = vmatprep.subr.bf16.mxu0 %v5321
        %5577 = vmatpush1.bf16.msra.mxu0 %v5320
        %5578 = vmatprep.subr.bf16.mxu0 %v5323
        %5579 = vmatpush1.bf16.msra.mxu0 %v5322
        %5580 = vmatprep.subr.bf16.mxu0 %v5325
        %5581 = vmatpush1.bf16.msra.mxu0 %v5324
        %5582 = vmatprep.subr.bf16.mxu0 %v5327
        %5583 = vmatpush1.bf16.msra.mxu0 %v5326
        %5584 = vmatprep.subr.bf16.mxu0 %v5329
        %5585 = vmatpush1.bf16.msra.mxu0 %v5328
        %5586 = vmatprep.subr.bf16.mxu0 %v5331
        %5587 = vmatpush1.bf16.msra.mxu0 %v5330
        %5588 = vmatprep.subr.bf16.mxu0 %v5333
        %5589 = vmatpush1.bf16.msra.mxu0 %v5332
        %5590 = vmatprep.subr.bf16.mxu0 %v5335
        %5591 = vmatpush1.bf16.msra.mxu0 %v5334
        %5592 = vmatprep.subr.bf16.mxu0 %v5337
        %5593 = vmatpush1.bf16.msra.mxu0 %v5336
        %5594 = vmatprep.subr.bf16.mxu0 %v5339
        %5595 = vmatpush1.bf16.msra.mxu0 %v5338
        %5596 = vmatprep.mubr.bf16.mxu0 %v4769
        %5597 = vmatmul.mubr.bf16.gmra.mrb[0].mxu0 %v4768
        %v5598 = vpop.f32.mrb[0].mxu0
        %v5599 = vadd.f32 %v4917, %v5598
        %v5600 = vpop.f32.mrb[0].mxu0
        %v5601 = vadd.f32 %v4921, %v5600
        %v5602 = vpop.f32.mrb[0].mxu0
        %v5603 = vadd.f32 %v4917, %v5602
        %v5604 = vpop.f32.mrb[0].mxu0
        %v5605 = vadd.f32 %v4921, %v5604
        %5606 = vmatprep.mubr.bf16.mxu0 %v4777
        %5607 = vmatmul.mubr.bf16.gmra.mrb[0].mxu0 %v4776
        %v5608 = vpop.f32.mrb[0].mxu0
        %v5609 = vadd.f32 %v4917, %v5608
        %v5610 = vpop.f32.mrb[0].mxu0
        %v5611 = vadd.f32 %v4921, %v5610
        %v5612 = vpop.f32.mrb[0].mxu0
        %v5613 = vadd.f32 %v4917, %v5612
        %v5614 = vpop.f32.mrb[0].mxu0
        %v5615 = vadd.f32 %v4921, %v5614
        %5616 = vdwg.mxu0
        %5617 = vmatprep.subr.bf16.mxu0 %v5341
        %5618 = vmatpush1.bf16.msra.mxu0 %v5340
        %5619 = vmatprep.subr.bf16.mxu0 %v5343
        %5620 = vmatpush1.bf16.msra.mxu0 %v5342
        %5621 = vmatprep.subr.bf16.mxu0 %v5345
        %5622 = vmatpush1.bf16.msra.mxu0 %v5344
        %5623 = vmatprep.subr.bf16.mxu0 %v5347
        %5624 = vmatpush1.bf16.msra.mxu0 %v5346
        %5625 = vmatprep.subr.bf16.mxu0 %v5349
        %5626 = vmatpush1.bf16.msra.mxu0 %v5348
        %5627 = vmatprep.subr.bf16.mxu0 %v5351
        %5628 = vmatpush1.bf16.msra.mxu0 %v5350
        %5629 = vmatprep.subr.bf16.mxu0 %v5353
        %5630 = vmatpush1.bf16.msra.mxu0 %v5352
        %5631 = vmatprep.subr.bf16.mxu0 %v5355
        %5632 = vmatpush1.bf16.msra.mxu0 %v5354
        %5633 = vmatprep.subr.bf16.mxu0 %v5357
        %5634 = vmatpush1.bf16.msra.mxu0 %v5356
        %5635 = vmatprep.subr.bf16.mxu0 %v5359
        %5636 = vmatpush1.bf16.msra.mxu0 %v5358
        %5637 = vmatprep.subr.bf16.mxu0 %v5361
        %5638 = vmatpush1.bf16.msra.mxu0 %v5360
        %5639 = vmatprep.subr.bf16.mxu0 %v5363
        %5640 = vmatpush1.bf16.msra.mxu0 %v5362
        %5641 = vmatprep.subr.bf16.mxu0 %v5365
        %5642 = vmatpush1.bf16.msra.mxu0 %v5364
        %5643 = vmatprep.subr.bf16.mxu0 %v5367
        %5644 = vmatpush1.bf16.msra.mxu0 %v5366
        %5645 = vmatprep.subr.bf16.mxu0 %v5369
        %5646 = vmatpush1.bf16.msra.mxu0 %v5368
        %5647 = vmatprep.subr.bf16.mxu0 %v5371
        %5648 = vmatpush1.bf16.msra.mxu0 %v5370
        %5649 = vmatprep.mubr.bf16.mxu0 %v4771
        %5650 = vmatmul.mubr.bf16.gmra.mrb[0].mxu0 %v4770
        %v5651 = vpop.f32.mrb[0].mxu0
        %v5652 = vadd.f32 %v5599, %v5651
        %v5653 = vpop.f32.mrb[0].mxu0
        %v5654 = vadd.f32 %v5601, %v5653
        %v5655 = vpop.f32.mrb[0].mxu0
        %v5656 = vadd.f32 %v5603, %v5655
        %v5657 = vpop.f32.mrb[0].mxu0
        %v5658 = vadd.f32 %v5605, %v5657
        %5659 = vmatprep.mubr.bf16.mxu0 %v4779
        %5660 = vmatmul.mubr.bf16.gmra.mrb[0].mxu0 %v4778
        %v5661 = vpop.f32.mrb[0].mxu0
        %v5662 = vadd.f32 %v5609, %v5661
        %v5663 = vpop.f32.mrb[0].mxu0
        %v5664 = vadd.f32 %v5611, %v5663
        %v5665 = vpop.f32.mrb[0].mxu0
        %v5666 = vadd.f32 %v5613, %v5665
        %v5667 = vpop.f32.mrb[0].mxu0
        %v5668 = vadd.f32 %v5615, %v5667
        %5669 = vdwg.mxu0
        %5670 = vmatprep.subr.bf16.mxu0 %v5373
        %5671 = vmatpush1.bf16.msra.mxu0 %v5372
        %5672 = vmatprep.subr.bf16.mxu0 %v5375
        %5673 = vmatpush1.bf16.msra.mxu0 %v5374
        %5674 = vmatprep.subr.bf16.mxu0 %v5377
        %5675 = vmatpush1.bf16.msra.mxu0 %v5376
        %5676 = vmatprep.subr.bf16.mxu0 %v5379
        %5677 = vmatpush1.bf16.msra.mxu0 %v5378
        %5678 = vmatprep.subr.bf16.mxu0 %v5381
        %5679 = vmatpush1.bf16.msra.mxu0 %v5380
        %5680 = vmatprep.subr.bf16.mxu0 %v5383
        %5681 = vmatpush1.bf16.msra.mxu0 %v5382
        %5682 = vmatprep.subr.bf16.mxu0 %v5385
        %5683 = vmatpush1.bf16.msra.mxu0 %v5384
        %5684 = vmatprep.subr.bf16.mxu0 %v5387
        %5685 = vmatpush1.bf16.msra.mxu0 %v5386
        %5686 = vmatprep.subr.bf16.mxu0 %v5389
        %5687 = vmatpush1.bf16.msra.mxu0 %v5388
        %5688 = vmatprep.subr.bf16.mxu0 %v5391
        %5689 = vmatpush1.bf16.msra.mxu0 %v5390
        %5690 = vmatprep.subr.bf16.mxu0 %v5393
        %5691 = vmatpush1.bf16.msra.mxu0 %v5392
        %5692 = vmatprep.subr.bf16.mxu0 %v5395
        %5693 = vmatpush1.bf16.msra.mxu0 %v5394
        %5694 = vmatprep.subr.bf16.mxu0 %v5397
        %5695 = vmatpush1.bf16.msra.mxu0 %v5396
        %5696 = vmatprep.subr.bf16.mxu0 %v5399
        %5697 = vmatpush1.bf16.msra.mxu0 %v5398
        %5698 = vmatprep.subr.bf16.mxu0 %v5401
        %5699 = vmatpush1.bf16.msra.mxu0 %v5400
        %5700 = vmatprep.subr.bf16.mxu0 %v5403
        %5701 = vmatpush1.bf16.msra.mxu0 %v5402
        %5702 = vmatprep.mubr.bf16.mxu0 %v4773
        %5703 = vmatmul.mubr.bf16.gmra.mrb[0].mxu0 %v4772
        %v5704 = vpop.f32.mrb[0].mxu0
        %v5705 = vadd.f32 %v5652, %v5704
        %v5706 = vpop.f32.mrb[0].mxu0
        %v5707 = vadd.f32 %v5654, %v5706
        %v5708 = vpop.f32.mrb[0].mxu0
        %v5709 = vadd.f32 %v5656, %v5708
        %v5710 = vpop.f32.mrb[0].mxu0
        %v5711 = vadd.f32 %v5658, %v5710
        %5712 = vmatprep.mubr.bf16.mxu0 %v4781
        %5713 = vmatmul.mubr.bf16.gmra.mrb[0].mxu0 %v4780
        %v5714 = vpop.f32.mrb[0].mxu0
        %v5715 = vadd.f32 %v5662, %v5714
        %v5716 = vpop.f32.mrb[0].mxu0
        %v5717 = vadd.f32 %v5664, %v5716
        %v5718 = vpop.f32.mrb[0].mxu0
        %v5719 = vadd.f32 %v5666, %v5718
        %v5720 = vpop.f32.mrb[0].mxu0
        %v5721 = vadd.f32 %v5668, %v5720
        %5722 = vdwg.mxu0
        %5723 = vmatprep.subr.bf16.mxu0 %v5405
        %5724 = vmatpush1.bf16.msra.mxu0 %v5404
        %5725 = vmatprep.subr.bf16.mxu0 %v5407
        %5726 = vmatpush1.bf16.msra.mxu0 %v5406
        %5727 = vmatprep.subr.bf16.mxu0 %v5409
        %5728 = vmatpush1.bf16.msra.mxu0 %v5408
        %5729 = vmatprep.subr.bf16.mxu0 %v5411
        %5730 = vmatpush1.bf16.msra.mxu0 %v5410
        %5731 = vmatprep.subr.bf16.mxu0 %v5413
        %5732 = vmatpush1.bf16.msra.mxu0 %v5412
        %5733 = vmatprep.subr.bf16.mxu0 %v5415
        %5734 = vmatpush1.bf16.msra.mxu0 %v5414
        %5735 = vmatprep.subr.bf16.mxu0 %v5417
        %5736 = vmatpush1.bf16.msra.mxu0 %v5416
        %5737 = vmatprep.subr.bf16.mxu0 %v5419
        %5738 = vmatpush1.bf16.msra.mxu0 %v5418
        %5739 = vmatprep.subr.bf16.mxu0 %v5421
        %5740 = vmatpush1.bf16.msra.mxu0 %v5420
        %5741 = vmatprep.subr.bf16.mxu0 %v5423
        %5742 = vmatpush1.bf16.msra.mxu0 %v5422
        %5743 = vmatprep.subr.bf16.mxu0 %v5425
        %5744 = vmatpush1.bf16.msra.mxu0 %v5424
        %5745 = vmatprep.subr.bf16.mxu0 %v5427
        %5746 = vmatpush1.bf16.msra.mxu0 %v5426
        %5747 = vmatprep.subr.bf16.mxu0 %v5429
        %5748 = vmatpush1.bf16.msra.mxu0 %v5428
        %5749 = vmatprep.subr.bf16.mxu0 %v5431
        %5750 = vmatpush1.bf16.msra.mxu0 %v5430
        %5751 = vmatprep.subr.bf16.mxu0 %v5433
        %5752 = vmatpush1.bf16.msra.mxu0 %v5432
        %5753 = vmatprep.subr.bf16.mxu0 %v5435
        %5754 = vmatpush1.bf16.msra.mxu0 %v5434
        %5755 = vmatprep.mubr.bf16.mxu0 %v4775
        %5756 = vmatmul.mubr.bf16.gmra.mrb[0].mxu0 %v4774
        %v5757 = vpop.f32.mrb[0].mxu0
        %v5758 = vadd.f32 %v5705, %v5757
        %v5759 = vpop.f32.mrb[0].mxu0
        %v5760 = vadd.f32 %v5707, %v5759
        %v5761 = vpop.f32.mrb[0].mxu0
        %v5762 = vadd.f32 %v5709, %v5761
        %v5763 = vpop.f32.mrb[0].mxu0
        %v5764 = vadd.f32 %v5711, %v5763
        %5765 = vmatprep.mubr.bf16.mxu0 %v4783
        %5766 = vmatmul.mubr.bf16.gmra.mrb[0].mxu0 %v4782
        %v5767 = vpop.f32.mrb[0].mxu0
        %v5768 = vadd.f32 %v5715, %v5767
        %v5769 = vpop.f32.mrb[0].mxu0
        %v5770 = vadd.f32 %v5717, %v5769
        %v5771 = vpop.f32.mrb[0].mxu0
        %v5772 = vadd.f32 %v5719, %v5771
        %v5773 = vpop.f32.mrb[0].mxu0
        %v5774 = vadd.f32 %v5721, %v5773
        %5775 = vdwg.mxu0
        %v5776 = vadd.f32 %v3330, %v5758
        %v5777 = vadd.f32 %v3331, %v5760
        %v5778 = vadd.f32 %v3332, %v5762
        %v5779 = vadd.f32 %v3333, %v5764
        %v5780 = vadd.f32 %v3334, %v5768
        %v5781 = vadd.f32 %v3335, %v5770
        %v5782 = vadd.f32 %v3336, %v5772
        %v5783 = vadd.f32 %v3337, %v5774
        %5784 = vst [vmem:[#allocation2] sm:$0xff] %v5776
        %5785 = vst [vmem:[#allocation2 + $0x8] sm:$0xff] %v5777
        %5786 = vst [vmem:[#allocation2 + $0x10] sm:$0xff] %v5778
        %5787 = vst [vmem:[#allocation2 + $0x18] sm:$0xff] %v5779
        %5788 = vst [vmem:[#allocation2 + $0x20] sm:$0xff] %v5780
        %5789 = vst [vmem:[#allocation2 + $0x28] sm:$0xff] %v5781
        %5790 = vst [vmem:[#allocation2 + $0x30] sm:$0xff] %v5782
        %5791 = vst [vmem:[#allocation2 + $0x38] sm:$0xff] %v5783
        %p5792 = scmp.eq.s32.totalorder %s29, 3
        // Predicated region
        $region137: #{tpu_custom_call.1} parent=75 // pred_check
          %p5793 = pneg %p5792
        $region138: #{tpu_custom_call.1} parent=75 // pred_check_branch
          %5795 = sbr.rel (%p5793) target = $region140
        $region139: #{tpu_custom_call.1} parent=75 // pred_region
          %v5798 = vrot.slane %v5780, 7
          %v5799 = vrot.slane %v5781, 7
          %vm5802 = vcmask 1040384
          %v5803 = vsel %vm5802, %v5776, %v5798
          %v5804 = vsel %vm5802, %v5777, %v5799
          %v5805 = vld [vmem:[#allocation17] sm:$0xf]
          %vm5806 = vcmask 1041408
          %v5807 = vsel %vm5806, %v5803, 0.0
          %v5808 = vsel %vm5806, %v5804, 0.0
          %v5809 = vadd.f32 %v5807, %v5808
          %5810 = vadd.xlane.f32.xlu0 %v5809
          %v5811 = vpop.xlane.xlu0 %5810
          %v5812 = vmul.f32 %v5811, %v867
          %v5813 = vsub.f32 %v5803, %v5812
          %v5814 = vsub.f32 %v5804, %v5812
          %v5815 = vmul.f32 %v5813, %v5813
          %v5816 = vmul.f32 %v5814, %v5814
          %v5817 = vsel %vm5806, %v5815, 0.0
          %v5818 = vsel %vm5806, %v5816, 0.0
          %v5819 = vadd.f32 %v5817, %v5818
          %5820 = vadd.xlane.f32.xlu0 %v5819
          %v5821 = vpop.xlane.xlu0 %5820
          %v5822 = vmul.f32 %v5821, %v867
          %v5823 = vadd.f32 %v5822, 1e-05
          %v5824 = vrsqrt.pop %v5823
          %v5825 = vmul.f32 %v5813, %v5824
          %v5826 = vmul.f32 %v5814, %v5824
          %v5828 = vlaneseq
          %v5829 = vshrl.u32 %v5828, 7
          %v5830 = vsub.s32 0, %v5829
          %v5831 = vrot.slane %v5805, %v5830
          %v5832 = vlaneseq
          %v5833 = vshrl.u32 %v5832, 7
          %v5834 = vsub.s32 2, %v5833
          %v5835 = vrot.slane %v5805, %v5834
          %v5838 = vlaneseq
          %v5839 = vshrl.u32 %v5838, 7
          %v5840 = vsub.s32 0, %v5839
          %v5841 = vrot.slane %v5831, %v5840
          %v5842 = vlaneseq
          %v5843 = vshrl.u32 %v5842, 7
          %v5844 = vsub.s32 0, %v5843
          %v5845 = vrot.slane %v5835, %v5844
          %v5846 = vmul.f32 %v5825, %v5841
          %v5847 = vmul.f32 %v5826, %v5845
          %v5848 = vlaneseq
          %v5849 = vshrl.u32 %v5848, 7
          %v5850 = vsub.s32 1, %v5849
          %v5851 = vrot.slane %v5805, %v5850
          %v5852 = vlaneseq
          %v5853 = vshrl.u32 %v5852, 7
          %v5854 = vsub.s32 3, %v5853
          %v5855 = vrot.slane %v5805, %v5854
          %v5858 = vlaneseq
          %v5859 = vshrl.u32 %v5858, 7
          %v5860 = vsub.s32 1, %v5859
          %v5861 = vrot.slane %v5851, %v5860
          %v5862 = vlaneseq
          %v5863 = vshrl.u32 %v5862, 7
          %v5864 = vsub.s32 1, %v5863
          %v5865 = vrot.slane %v5855, %v5864
          %v5866 = vadd.f32 %v5846, %v5861
          %v5867 = vadd.f32 %v5847, %v5865
          %v5868 = vpack.c.bf16 %v5866, %v5866
          %v5869 = vpack.c.bf16 %v5867, %v5867
          %v5870 = vld [vmem:[#allocation18] sm:$0xf]
          %v5871 = vld [vmem:[#allocation18 + $0x4] sm:$0xf]
          %v5872 = vld [vmem:[#allocation18 + $0x8] sm:$0xf]
          %v5873 = vld [vmem:[#allocation18 + $0xc] sm:$0xf]
          %v5874 = vld [vmem:[#allocation18 + $0x10] sm:$0xf]
          %v5875 = vld [vmem:[#allocation18 + $0x14] sm:$0xf]
          %v5876 = vld [vmem:[#allocation18 + $0x18] sm:$0xf]
          %v5877 = vld [vmem:[#allocation18 + $0x1c] sm:$0xf]
          %v5878 = vld [vmem:[#allocation18 + $0x20] sm:$0xf]
          %v5879 = vld [vmem:[#allocation18 + $0x24] sm:$0xf]
          %v5880 = vld [vmem:[#allocation18 + $0x28] sm:$0xf]
          %v5881 = vld [vmem:[#allocation18 + $0x2c] sm:$0xf]
          %v5882 = vld [vmem:[#allocation18 + $0x30] sm:$0xf]
          %v5883 = vld [vmem:[#allocation18 + $0x34] sm:$0xf]
          %v5884 = vld [vmem:[#allocation18 + $0x38] sm:$0xf]
          %v5885 = vld [vmem:[#allocation18 + $0x3c] sm:$0xf]
          %v5886 = vld [vmem:[#allocation18 + $0x40] sm:$0xf]
          %v5887 = vld [vmem:[#allocation18 + $0x44] sm:$0xf]
          %v5888 = vld [vmem:[#allocation18 + $0x48] sm:$0xf]
          %v5889 = vld [vmem:[#allocation18 + $0x4c] sm:$0xf]
          %v5890 = vld [vmem:[#allocation18 + $0x50] sm:$0xf]
          %v5891 = vld [vmem:[#allocation18 + $0x54] sm:$0xf]
          %v5892 = vld [vmem:[#allocation18 + $0x58] sm:$0xf]
          %v5893 = vld [vmem:[#allocation18 + $0x5c] sm:$0xf]
          %v5894 = vld [vmem:[#allocation18 + $0x60] sm:$0xf]
          %v5895 = vld [vmem:[#allocation18 + $0x64] sm:$0xf]
          %v5896 = vld [vmem:[#allocation18 + $0x68] sm:$0xf]
          %v5897 = vld [vmem:[#allocation18 + $0x6c] sm:$0xf]
          %v5898 = vld [vmem:[#allocation18 + $0x70] sm:$0xf]
          %v5899 = vld [vmem:[#allocation18 + $0x74] sm:$0xf]
          %v5900 = vld [vmem:[#allocation18 + $0x78] sm:$0xf]
          %v5901 = vld [vmem:[#allocation18 + $0x7c] sm:$0xf]
          %v5902 = vld [vmem:[#allocation20] sm:$0x1]
          %v5904 = vlaneseq
          %v5905 = vshrl.u32 %v5904, 7
          %v5906 = vsub.s32 0, %v5905
          %v5907 = vrot.slane %v5902, %v5906
          %v5941 = vunpack.c.l.b16 %v5870
          %v5942 = vunpack.c.l.b16 %v5871
          %v5943 = vunpack.c.l.b16 %v5872
          %v5944 = vunpack.c.l.b16 %v5873
          %v5945 = vunpack.c.l.b16 %v5874
          %v5946 = vunpack.c.l.b16 %v5875
          %v5947 = vunpack.c.l.b16 %v5876
          %v5948 = vunpack.c.l.b16 %v5877
          %v5949 = vunpack.c.l.b16 %v5878
          %v5950 = vunpack.c.l.b16 %v5879
          %v5951 = vunpack.c.l.b16 %v5880
          %v5952 = vunpack.c.l.b16 %v5881
          %v5953 = vunpack.c.l.b16 %v5882
          %v5954 = vunpack.c.l.b16 %v5883
          %v5955 = vunpack.c.l.b16 %v5884
          %v5956 = vunpack.c.l.b16 %v5885
          %v5957 = vunpack.c.l.b16 %v5886
          %v5958 = vunpack.c.l.b16 %v5887
          %v5959 = vunpack.c.l.b16 %v5888
          %v5960 = vunpack.c.l.b16 %v5889
          %v5961 = vunpack.c.l.b16 %v5890
          %v5962 = vunpack.c.l.b16 %v5891
          %v5963 = vunpack.c.l.b16 %v5892
          %v5964 = vunpack.c.l.b16 %v5893
          %v5965 = vunpack.c.l.b16 %v5894
          %v5966 = vunpack.c.l.b16 %v5895
          %v5967 = vunpack.c.l.b16 %v5896
          %v5968 = vunpack.c.l.b16 %v5897
          %v5969 = vunpack.c.l.b16 %v5898
          %v5970 = vunpack.c.l.b16 %v5899
          %v5971 = vunpack.c.l.b16 %v5900
          %v5972 = vunpack.c.l.b16 %v5901
          %v5973 = vpack.c.b16 %v5942, %v5941
          %v5974 = vpack.c.b16 %v5944, %v5943
          %v5975 = vpack.c.b16 %v5946, %v5945
          %v5976 = vpack.c.b16 %v5948, %v5947
          %v5977 = vpack.c.b16 %v5950, %v5949
          %v5978 = vpack.c.b16 %v5952, %v5951
          %v5979 = vpack.c.b16 %v5954, %v5953
          %v5980 = vpack.c.b16 %v5956, %v5955
          %v5981 = vpack.c.b16 %v5958, %v5957
          %v5982 = vpack.c.b16 %v5960, %v5959
          %v5983 = vpack.c.b16 %v5962, %v5961
          %v5984 = vpack.c.b16 %v5964, %v5963
          %v5985 = vpack.c.b16 %v5966, %v5965
          %v5986 = vpack.c.b16 %v5968, %v5967
          %v5987 = vpack.c.b16 %v5970, %v5969
          %v5988 = vpack.c.b16 %v5972, %v5971
          %6005 = vmatprep.subr.bf16.mxu0 0
          %6006 = vmatpush1.bf16.msra.mxu0 %v5973
          %6007 = vmatprep.subr.bf16.mxu0 0
          %6008 = vmatpush1.bf16.msra.mxu0 %v5974
          %6009 = vmatprep.subr.bf16.mxu0 0
          %6010 = vmatpush1.bf16.msra.mxu0 %v5975
          %6011 = vmatprep.subr.bf16.mxu0 0
          %6012 = vmatpush1.bf16.msra.mxu0 %v5976
          %6013 = vmatprep.subr.bf16.mxu0 0
          %6014 = vmatpush1.bf16.msra.mxu0 %v5977
          %6015 = vmatprep.subr.bf16.mxu0 0
          %6016 = vmatpush1.bf16.msra.mxu0 %v5978
          %6017 = vmatprep.subr.bf16.mxu0 0
          %6018 = vmatpush1.bf16.msra.mxu0 %v5979
          %6019 = vmatprep.subr.bf16.mxu0 0
          %6020 = vmatpush1.bf16.msra.mxu0 %v5980
          %6021 = vmatprep.subr.bf16.mxu0 0
          %6022 = vmatpush1.bf16.msra.mxu0 %v5981
          %6023 = vmatprep.subr.bf16.mxu0 0
          %6024 = vmatpush1.bf16.msra.mxu0 %v5982
          %6025 = vmatprep.subr.bf16.mxu0 0
          %6026 = vmatpush1.bf16.msra.mxu0 %v5983
          %6027 = vmatprep.subr.bf16.mxu0 0
          %6028 = vmatpush1.bf16.msra.mxu0 %v5984
          %6029 = vmatprep.subr.bf16.mxu0 0
          %6030 = vmatpush1.bf16.msra.mxu0 %v5985
          %6031 = vmatprep.subr.bf16.mxu0 0
          %6032 = vmatpush1.bf16.msra.mxu0 %v5986
          %6033 = vmatprep.subr.bf16.mxu0 0
          %6034 = vmatpush1.bf16.msra.mxu0 %v5987
          %6035 = vmatprep.subr.bf16.mxu0 0
          %6036 = vmatpush1.bf16.msra.mxu0 %v5988
          %6037 = vmatprep.mubr.bf16.mxu0 %v5869
          %6038 = vmatmul.mubr.bf16.gmra.mrb[0].mxu0 %v5868
          %v6039 = vpop.f32.mrb[0].mxu0
          %v6040 = vadd.f32 %v5907, %v6039
          %v6041 = vpop.f32.mrb[0].mxu0
          %v6042 = vpop.f32.mrb[0].mxu0
          %v6043 = vpop.f32.mrb[0].mxu0
          %6044 = vdwg.mxu0
          %6045 = vst [vmem:[#allocation21] sm:$0x3] %v6040
        $region140: #{tpu_custom_call.1} parent=75 // pred_fallthru
          _
        // Predicated region
        $region141: #{tpu_custom_call.1} parent=75 // pred_check
          %p6046 = pneg %p381
        $region142: #{tpu_custom_call.1} parent=75 // pred_check_branch
          %6048 = sbr.rel (%p6046) target = $region144
        $region143: #{tpu_custom_call.1} parent=75 // pred_region
          %s6050 = ssub.s32 32, 32
          %6051 = vsyncadd [#allocation5], %s6050
          %s6053 = sshll.u32 [#allocation21], 4
          %s6054 = int_to_ptr.vmem [resolvable:$true] %s6053
          %6056 = dma.vmem_to_hbm [thread:$0]  %s6054, 32, %s14, [#allocation5]
        $region144: #{tpu_custom_call.1} parent=75 // pred_fallthru
          _
        // Predicated region
        $region145: #{tpu_custom_call.1} parent=75 // pred_check
          %p6057 = pneg %p381
        $region146: #{tpu_custom_call.1} parent=75 // pred_check_branch
          %6059 = sbr.rel (%p6057) target = $region148
        $region147: #{tpu_custom_call.1} parent=75 // pred_region
          %6060 = dma.done [#allocation5], 32
        $region148: #{tpu_custom_call.1} parent=75 // pred_fallthru
          _
      $region76: #{tpu_custom_call.1} parent=5 // pred_fallthru
        _
      %p6061 = scmp.le.s32.totalorder 2, %s24
      // Predicated region
      $region149: #{tpu_custom_call.1} parent=5 // pred_check
        %p6062 = pneg %p6061
      $region150: #{tpu_custom_call.1} parent=5 // pred_check_branch
        %6064 = sbr.rel (%p6062) target = $region152
      $region151: #{tpu_custom_call.1} parent=5 // pred_region
        %s6065 = ssub.s32 %s24, 2
      $region152: #{tpu_custom_call.1} parent=5 // pred_fallthru
        _
    $region6: #{tpu_custom_call.1} parent=1 // loop_footer
      %s28 = sadd.s32 1, %s24
    $region7: #{tpu_custom_call.1} parent=1 // loop_footer_branch
      %23 = sbr.rel target = $region3
    $region8: #{tpu_custom_call.1} parent=1 // loop_exit
      _
    %6066 = vsyncpa [#allocation4], 1
    %s6067 = scalar_lea.sflag [#allocation4], 1
    %6068 = vsyncpa %s6067, 1
    %6069 = vsyncpa [#allocation7], 1
    %6070 = vsyncpa [#allocation19], 1
    %6071 = vsyncpa [#allocation5], 1
    %s6072 = scalar_lea.sflag [#allocation5], 1
    %6073 = vsyncpa %s6072, 1

</llo_original>
